<compile_context>
chip_gen: v7x
topology: tpu7x:2x2x1
jax: 0.10.0
libtpu: 0.0.40
codegen_flags: <defaults>
</compile_context>

<pallas_src>
import jax
import jax.numpy as jnp
import numpy as np
from jax.experimental import pallas as pl
from jax.experimental.pallas import tpu as pltpu


def afm_kernel(mcat_ref, vg_ref, wg_ref, q_ref, par_ref, y_ref, reg_ref):
    """One batch tile.

    mcat_ref : (2*NF-1, F) bf16 VMEM  rows [0:NF] = M, rows [NF:] = mask @ M[:-1]
    vg_ref   : (D, F, tb)  bf16 VMEM  gathered V embeddings, batch-minor (lanes = batch)
    wg_ref   : (F, tb)     bf16 VMEM  gathered first-order embeddings
    q_ref    : (D,)        f32  SMEM
    par_ref  : (3,)        f32  SMEM  [w0, alpha, beta]
    y_ref    : (1, tb)     f32  VMEM out
    reg_ref  : (1, tb)     f32  VMEM out (per-batch regularization partials)
    """
    nc = mcat_ref.shape[0]
    nf = (nc + 1) // 2
    d_dim = vg_ref.shape[0]
    tb = vg_ref.shape[2]

    w0 = par_ref[0]
    alpha = par_ref[1]
    beta = par_ref[2]

    mcat = mcat_ref[...]                                        # (2NF-1, F) bf16

    def body(d, carry):
        pair_acc, regv_acc = carry
        # (2NF-1, F) @ (F, tb) -> (2NF-1, tb): one tiny bf16 MXU matmul per d-slice.
        v = jnp.dot(mcat, vg_ref[d], preferred_element_type=jnp.float32)
        v0s = v[1:nf, :]                                        # (NF-1, tb)  V0[:, 1:]
        vs = v[0:nf - 1, :]                                     # (NF-1, tb)  V0[:, :-1]
        mv = v[nf:, :]                                          # (NF-1, tb)  mask @ Vs
        ps = jnp.sum(v0s * mv, axis=0, keepdims=True)           # (1, tb)
        a2 = jnp.sum(v0s * v0s, axis=0, keepdims=True)          # (1, tb)
        b2 = jnp.sum(vs * vs, axis=0, keepdims=True)            # (1, tb)
        pair_acc = pair_acc + q_ref[d] * ps                     # q applied as SMEM scalar
        regv_acc = regv_acc + a2 * b2                           # factorized sum(Vp^2)
        return pair_acc, regv_acc

    zero = jnp.zeros((1, tb), jnp.float32)
    pair, regv = jax.lax.fori_loop(0, d_dim, body, (zero, zero), unroll=True)

    # First order + its regularizer (f32 VPU math: v5e-safe).
    wg = wg_ref[...].astype(jnp.float32)                        # (F, tb)
    order1 = jnp.sum(wg, axis=0, keepdims=True)                 # (1, tb)
    regw = jnp.sum(wg * wg, axis=0, keepdims=True)              # (1, tb)

    y_ref[...] = w0 + order1 + pair
    reg_ref[...] = alpha * regw + beta * regv


def afm_forward(x, M, w_table, V_table, q, w0, mask, alpha, beta, *, tb=512):
    """Plain-JAX glue (embedding gather, layout) around the Pallas kernel."""
    B, F = x.shape
    NF = M.shape[0]
    D = V_table.shape[-1]
    NC = 2 * NF - 1

    # Note: on v7x (2 TensorCores) prefer a tb such that nb is even and >= 4 per core.
    nb = pl.cdiv(B, tb)
    Bp = nb * tb

    # Pad the (tiny) index tensor, not the gathered embeddings: padded rows gather embedding
    # row 0 (finite values); their y lanes are sliced off and their reg partials excluded
    # below, so there is no extra HBM pass over the dominant tensor.
    x_pad = jnp.pad(x, ((0, Bp - B), (0, 0)))
    xt = x_pad.T                                                # (F, Bp)

    # Gather directly into (almost) the kernel layout, in bf16 (halves HBM traffic).
    Vt16 = V_table.astype(jnp.bfloat16)                         # (N_EMB, D)
    wt16 = w_table.astype(jnp.bfloat16)                         # (N_EMB,)
    vgk = jnp.transpose(Vt16[xt], (2, 0, 1))                    # (D, F, Bp): one transpose
    wgk = wt16[xt]                                              # (F, Bp): already kernel layout

    # Fold the pair mask into the field-mixing matrix (host side, once).
    M16 = M.astype(jnp.bfloat16).astype(jnp.float32)
    mcat = jnp.concatenate(
        [M16, mask.astype(jnp.float32) @ M16[:NF - 1]], axis=0
    ).astype(jnp.bfloat16)                                      # (2NF-1, F)

    qf = q.astype(jnp.float32)                                  # (D,)  -> SMEM
    params = jnp.concatenate([jnp.reshape(w0, (1,)).astype(jnp.float32),
                              jnp.array([alpha, beta], jnp.float32)])

    flops = (2 * NC * F + 10 * (NF - 1)) * D * Bp
    bytes_accessed = vgk.size * 2 + wgk.size * 2 + mcat.size * 2 + 2 * Bp * 4

    y_pad, regb = pl.pallas_call(
        afm_kernel,
        out_shape=(jax.ShapeDtypeStruct((1, Bp), jnp.float32),
                   jax.ShapeDtypeStruct((1, Bp), jnp.float32)),
        grid=(nb,),
        in_specs=[
            pl.BlockSpec((NC, F), lambda i: (0, 0)),            # Mcat (resident constant)
            pl.BlockSpec((D, F, tb), lambda i: (0, 0, i)),      # V embeddings tile
            pl.BlockSpec((F, tb), lambda i: (0, i)),            # w embeddings tile
            pl.BlockSpec(memory_space=pltpu.MemorySpace.SMEM),  # q
            pl.BlockSpec(memory_space=pltpu.MemorySpace.SMEM),  # [w0, alpha, beta]
        ],
        out_specs=(
            pl.BlockSpec((1, tb), lambda i: (0, i)),            # y (lane-dense)
            pl.BlockSpec((1, tb), lambda i: (0, i)),            # per-batch reg partials
        ),
        compiler_params=pltpu.CompilerParams(
            dimension_semantics=("parallel",)),
        cost_estimate=pl.CostEstimate(flops=flops, transcendentals=0,
                                      bytes_accessed=bytes_accessed),
    )(mcat, vgk, wgk, qf, params)

    return y_pad[0, :B], jnp.sum(regb[0, :B])


def afm_reference(wg, Vg, M, q, w0, mask, alpha, beta):
    """Pure-JAX reference mirroring the PyTorch forward (for validation)."""
    V0 = jnp.einsum('nf,bfd->bnd', M, Vg)
    V0s = V0[:, 1:]
    Vs = V0[:, :-1]
    Vp = V0s[:, :, None, :] * Vs[:, None, :, :]                 # (B, NF-1, NF-1, D)
    W = Vp @ q                                                  # (B, NF-1, NF-1)
    y = w0[0] + jnp.sum(wg, axis=1) + jnp.sum(W * mask[None], axis=(1, 2))
    reg = alpha * jnp.sum(wg ** 2) + beta * jnp.sum(Vp ** 2)
    return y, reg


if __name__ == "__main__":
    # Small deterministic setup. B=270 with tb=256 exercises an even 2-tile grid plus the
    # ragged last tile (14 valid rows, 242 padded-index rows excluded in the wrapper).
    B, F, NF, D, N_EMB = 270, 8, 4, 32, 50
    alpha, beta, drop = 0.01, 0.001, 0.1   # drop unused at inference (nn.Dropout -> identity)

    key = jax.random.PRNGKey(0)
    k_x, k_M, k_w0, k_w, k_V, k_q = jax.random.split(key, 6)

    x = jax.random.randint(k_x, (B, F), 0, N_EMB, dtype=jnp.int32)
    M = jax.random.normal(k_M, (NF, F), dtype=jnp.float32)
    w0 = 0.01 * jax.random.normal(k_w0, (1,), dtype=jnp.float32)
    w_table = 0.01 * jax.random.normal(k_w, (N_EMB,), dtype=jnp.float32)
    V_table = 0.01 * jax.random.normal(k_V, (N_EMB, D), dtype=jnp.float32)
    q = 0.01 * jax.random.normal(k_q, (D,), dtype=jnp.float32)

    # TODO(synk): create_mask semantics assumed -> lower-triangular pair mask.
    mask = jnp.tril(jnp.ones((NF - 1, NF - 1), dtype=jnp.float32))

    y, reg = afm_forward(x, M, w_table, V_table, q, w0, mask, alpha, beta, tb=256)
    y = jax.block_until_ready(y)
    reg = jax.block_until_ready(reg)

    # Reference in f32 on the same bf16-rounded inputs the kernel consumes, isolating
    # kernel-structural error from the intentional bf16 quantization.
    wg_r = w_table[x].astype(jnp.bfloat16).astype(jnp.float32)
    Vg_r = V_table[x].astype(jnp.bfloat16).astype(jnp.float32)
    M_r = M.astype(jnp.bfloat16).astype(jnp.float32)
    y_ref, reg_ref = afm_reference(wg_r, Vg_r, M_r, q, w0, mask, alpha, beta)

    np.testing.assert_allclose(np.asarray(y), np.asarray(y_ref), rtol=2e-3, atol=5e-5)
    np.testing.assert_allclose(np.asarray(reg), np.asarray(reg_ref), rtol=2e-3, atol=1e-6)

    print("KERNEL_OK")
</pallas_src>

<mosaic_0001>
module attributes {stable_mosaic.version = 11 : i64} {
  func.func @afm_kernel(%arg0: i32, %arg1: memref<7x8xbf16, #tpu.memory_space<vmem>>, %arg2: memref<32x8x256xbf16, #tpu.memory_space<vmem>>, %arg3: memref<8x256xbf16, #tpu.memory_space<vmem>>, %arg4: memref<32xf32, #tpu.memory_space<smem>>, %arg5: memref<3xf32, #tpu.memory_space<smem>>, %arg6: memref<1x256xf32, #tpu.memory_space<vmem>>, %arg7: memref<1x256xf32, #tpu.memory_space<vmem>>) attributes {dimension_semantics = [#tpu.dimension_semantics<parallel>], iteration_bounds = array<i64: 2>, scalar_prefetch = 0 : i64, scratch_operands = 0 : i64, tpu.core_type = #tpu.core_type<tc>, window_params = [{pipeline_mode = #tpu.pipeline_mode<synchronous>, transform_indices = @transform_0, window_bounds = array<i64: 7, 8>}, {transform_indices = @transform_1, window_bounds = array<i64: 32, 8, 256>}, {transform_indices = @transform_2, window_bounds = array<i64: 8, 256>}, {transform_indices = @transform_3, window_bounds = array<i64: 32>}, {transform_indices = @transform_4, window_bounds = array<i64: 3>}, {transform_indices = @transform_5, window_bounds = array<i64: 1, 256>}, {transform_indices = @transform_6, window_bounds = array<i64: 1, 256>}]} {
    %c0 = arith.constant 0 : index
    %0 = memref.load %arg5[%c0] : memref<3xf32, #tpu.memory_space<smem>>
    %c1 = arith.constant 1 : index
    %1 = memref.load %arg5[%c1] : memref<3xf32, #tpu.memory_space<smem>>
    %c2 = arith.constant 2 : index
    %2 = memref.load %arg5[%c2] : memref<3xf32, #tpu.memory_space<smem>>
    %c0_0 = arith.constant 0 : index
    %c0_1 = arith.constant 0 : index
    %3 = vector.load %arg1[%c0_0, %c0_1] : memref<7x8xbf16, #tpu.memory_space<vmem>>, vector<7x8xbf16>
    %cst = arith.constant 0.000000e+00 : f32
    %4 = vector.broadcast %cst : f32 to vector<1x256xf32>
    %c0_i32 = arith.constant 0 : i32
    %5 = arith.index_cast %c0_i32 : i32 to index
    %c0_2 = arith.constant 0 : index
    %c0_3 = arith.constant 0 : index
    %6 = vector.load %arg2[%5, %c0_2, %c0_3] : memref<32x8x256xbf16, #tpu.memory_space<vmem>>, vector<1x8x256xbf16>
    %7 = vector.shape_cast %6 : vector<1x8x256xbf16> to vector<8x256xbf16>
    %cst_4 = arith.constant dense<0.000000e+00> : vector<7x256xf32>
    %8 = tpu.matmul %3, %7, %cst_4 {dimension_numbers = #tpu.dot_dimension_numbers<[1], [0], [0], [1], [0, 0, 1, 1], [], []>} : vector<7x8xbf16>, vector<8x256xbf16>, vector<7x256xf32> -> vector<7x256xf32>
    %9 = vector.extract_strided_slice %8 {offsets = [1, 0], sizes = [3, 256], strides = [1, 1]} : vector<7x256xf32> to vector<3x256xf32>
    %10 = vector.extract_strided_slice %8 {offsets = [0, 0], sizes = [3, 256], strides = [1, 1]} : vector<7x256xf32> to vector<3x256xf32>
    %11 = vector.extract_strided_slice %8 {offsets = [4, 0], sizes = [3, 256], strides = [1, 1]} : vector<7x256xf32> to vector<3x256xf32>
    %12 = arith.mulf %9, %11 : vector<3x256xf32>
    %cst_5 = arith.constant dense<0.000000e+00> : vector<256xf32>
    %13 = vector.multi_reduction <add>, %12, %cst_5 [0] : vector<3x256xf32> to vector<256xf32>
    %14 = vector.shape_cast %13 : vector<256xf32> to vector<1x256xf32>
    %15 = arith.mulf %9, %9 : vector<3x256xf32>
    %cst_6 = arith.constant dense<0.000000e+00> : vector<256xf32>
    %16 = vector.multi_reduction <add>, %15, %cst_6 [0] : vector<3x256xf32> to vector<256xf32>
    %17 = vector.shape_cast %16 : vector<256xf32> to vector<1x256xf32>
    %18 = arith.mulf %10, %10 : vector<3x256xf32>
    %cst_7 = arith.constant dense<0.000000e+00> : vector<256xf32>
    %19 = vector.multi_reduction <add>, %18, %cst_7 [0] : vector<3x256xf32> to vector<256xf32>
    %20 = vector.shape_cast %19 : vector<256xf32> to vector<1x256xf32>
    %21 = arith.index_cast %c0_i32 : i32 to index
    %22 = memref.load %arg4[%21] : memref<32xf32, #tpu.memory_space<smem>>
    %23 = vector.broadcast %22 : f32 to vector<1x256xf32>
    %24 = arith.mulf %23, %14 : vector<1x256xf32>
    %25 = arith.addf %4, %24 : vector<1x256xf32>
    %26 = arith.mulf %17, %20 : vector<1x256xf32>
    %27 = arith.addf %4, %26 : vector<1x256xf32>
    %c1_i32 = arith.constant 1 : i32
    %28 = arith.index_cast %c1_i32 : i32 to index
    %c0_8 = arith.constant 0 : index
    %c0_9 = arith.constant 0 : index
    %29 = vector.load %arg2[%28, %c0_8, %c0_9] : memref<32x8x256xbf16, #tpu.memory_space<vmem>>, vector<1x8x256xbf16>
    %30 = vector.shape_cast %29 : vector<1x8x256xbf16> to vector<8x256xbf16>
    %cst_10 = arith.constant dense<0.000000e+00> : vector<7x256xf32>
    %31 = tpu.matmul %3, %30, %cst_10 {dimension_numbers = #tpu.dot_dimension_numbers<[1], [0], [0], [1], [0, 0, 1, 1], [], []>} : vector<7x8xbf16>, vector<8x256xbf16>, vector<7x256xf32> -> vector<7x256xf32>
    %32 = vector.extract_strided_slice %31 {offsets = [1, 0], sizes = [3, 256], strides = [1, 1]} : vector<7x256xf32> to vector<3x256xf32>
    %33 = vector.extract_strided_slice %31 {offsets = [0, 0], sizes = [3, 256], strides = [1, 1]} : vector<7x256xf32> to vector<3x256xf32>
    %34 = vector.extract_strided_slice %31 {offsets = [4, 0], sizes = [3, 256], strides = [1, 1]} : vector<7x256xf32> to vector<3x256xf32>
    %35 = arith.mulf %32, %34 : vector<3x256xf32>
    %cst_11 = arith.constant dense<0.000000e+00> : vector<256xf32>
    %36 = vector.multi_reduction <add>, %35, %cst_11 [0] : vector<3x256xf32> to vector<256xf32>
    %37 = vector.shape_cast %36 : vector<256xf32> to vector<1x256xf32>
    %38 = arith.mulf %32, %32 : vector<3x256xf32>
    %cst_12 = arith.constant dense<0.000000e+00> : vector<256xf32>
    %39 = vector.multi_reduction <add>, %38, %cst_12 [0] : vector<3x256xf32> to vector<256xf32>
    %40 = vector.shape_cast %39 : vector<256xf32> to vector<1x256xf32>
    %41 = arith.mulf %33, %33 : vector<3x256xf32>
    %cst_13 = arith.constant dense<0.000000e+00> : vector<256xf32>
    %42 = vector.multi_reduction <add>, %41, %cst_13 [0] : vector<3x256xf32> to vector<256xf32>
    %43 = vector.shape_cast %42 : vector<256xf32> to vector<1x256xf32>
    %44 = arith.index_cast %c1_i32 : i32 to index
    %45 = memref.load %arg4[%44] : memref<32xf32, #tpu.memory_space<smem>>
    %46 = vector.broadcast %45 : f32 to vector<1x256xf32>
    %47 = arith.mulf %46, %37 : vector<1x256xf32>
    %48 = arith.addf %25, %47 : vector<1x256xf32>
    %49 = arith.mulf %40, %43 : vector<1x256xf32>
    %50 = arith.addf %27, %49 : vector<1x256xf32>
    %c2_i32 = arith.constant 2 : i32
    %51 = arith.index_cast %c2_i32 : i32 to index
    %c0_14 = arith.constant 0 : index
    %c0_15 = arith.constant 0 : index
    %52 = vector.load %arg2[%51, %c0_14, %c0_15] : memref<32x8x256xbf16, #tpu.memory_space<vmem>>, vector<1x8x256xbf16>
    %53 = vector.shape_cast %52 : vector<1x8x256xbf16> to vector<8x256xbf16>
    %cst_16 = arith.constant dense<0.000000e+00> : vector<7x256xf32>
    %54 = tpu.matmul %3, %53, %cst_16 {dimension_numbers = #tpu.dot_dimension_numbers<[1], [0], [0], [1], [0, 0, 1, 1], [], []>} : vector<7x8xbf16>, vector<8x256xbf16>, vector<7x256xf32> -> vector<7x256xf32>
    %55 = vector.extract_strided_slice %54 {offsets = [1, 0], sizes = [3, 256], strides = [1, 1]} : vector<7x256xf32> to vector<3x256xf32>
    %56 = vector.extract_strided_slice %54 {offsets = [0, 0], sizes = [3, 256], strides = [1, 1]} : vector<7x256xf32> to vector<3x256xf32>
    %57 = vector.extract_strided_slice %54 {offsets = [4, 0], sizes = [3, 256], strides = [1, 1]} : vector<7x256xf32> to vector<3x256xf32>
    %58 = arith.mulf %55, %57 : vector<3x256xf32>
    %cst_17 = arith.constant dense<0.000000e+00> : vector<256xf32>
    %59 = vector.multi_reduction <add>, %58, %cst_17 [0] : vector<3x256xf32> to vector<256xf32>
    %60 = vector.shape_cast %59 : vector<256xf32> to vector<1x256xf32>
    %61 = arith.mulf %55, %55 : vector<3x256xf32>
    %cst_18 = arith.constant dense<0.000000e+00> : vector<256xf32>
    %62 = vector.multi_reduction <add>, %61, %cst_18 [0] : vector<3x256xf32> to vector<256xf32>
    %63 = vector.shape_cast %62 : vector<256xf32> to vector<1x256xf32>
    %64 = arith.mulf %56, %56 : vector<3x256xf32>
    %cst_19 = arith.constant dense<0.000000e+00> : vector<256xf32>
    %65 = vector.multi_reduction <add>, %64, %cst_19 [0] : vector<3x256xf32> to vector<256xf32>
    %66 = vector.shape_cast %65 : vector<256xf32> to vector<1x256xf32>
    %67 = arith.index_cast %c2_i32 : i32 to index
    %68 = memref.load %arg4[%67] : memref<32xf32, #tpu.memory_space<smem>>
    %69 = vector.broadcast %68 : f32 to vector<1x256xf32>
    %70 = arith.mulf %69, %60 : vector<1x256xf32>
    %71 = arith.addf %48, %70 : vector<1x256xf32>
    %72 = arith.mulf %63, %66 : vector<1x256xf32>
    %73 = arith.addf %50, %72 : vector<1x256xf32>
    %c3_i32 = arith.constant 3 : i32
    %74 = arith.index_cast %c3_i32 : i32 to index
    %c0_20 = arith.constant 0 : index
    %c0_21 = arith.constant 0 : index
    %75 = vector.load %arg2[%74, %c0_20, %c0_21] : memref<32x8x256xbf16, #tpu.memory_space<vmem>>, vector<1x8x256xbf16>
    %76 = vector.shape_cast %75 : vector<1x8x256xbf16> to vector<8x256xbf16>
    %cst_22 = arith.constant dense<0.000000e+00> : vector<7x256xf32>
    %77 = tpu.matmul %3, %76, %cst_22 {dimension_numbers = #tpu.dot_dimension_numbers<[1], [0], [0], [1], [0, 0, 1, 1], [], []>} : vector<7x8xbf16>, vector<8x256xbf16>, vector<7x256xf32> -> vector<7x256xf32>
    %78 = vector.extract_strided_slice %77 {offsets = [1, 0], sizes = [3, 256], strides = [1, 1]} : vector<7x256xf32> to vector<3x256xf32>
    %79 = vector.extract_strided_slice %77 {offsets = [0, 0], sizes = [3, 256], strides = [1, 1]} : vector<7x256xf32> to vector<3x256xf32>
    %80 = vector.extract_strided_slice %77 {offsets = [4, 0], sizes = [3, 256], strides = [1, 1]} : vector<7x256xf32> to vector<3x256xf32>
    %81 = arith.mulf %78, %80 : vector<3x256xf32>
    %cst_23 = arith.constant dense<0.000000e+00> : vector<256xf32>
    %82 = vector.multi_reduction <add>, %81, %cst_23 [0] : vector<3x256xf32> to vector<256xf32>
    %83 = vector.shape_cast %82 : vector<256xf32> to vector<1x256xf32>
    %84 = arith.mulf %78, %78 : vector<3x256xf32>
    %cst_24 = arith.constant dense<0.000000e+00> : vector<256xf32>
    %85 = vector.multi_reduction <add>, %84, %cst_24 [0] : vector<3x256xf32> to vector<256xf32>
    %86 = vector.shape_cast %85 : vector<256xf32> to vector<1x256xf32>
    %87 = arith.mulf %79, %79 : vector<3x256xf32>
    %cst_25 = arith.constant dense<0.000000e+00> : vector<256xf32>
    %88 = vector.multi_reduction <add>, %87, %cst_25 [0] : vector<3x256xf32> to vector<256xf32>
    %89 = vector.shape_cast %88 : vector<256xf32> to vector<1x256xf32>
    %90 = arith.index_cast %c3_i32 : i32 to index
    %91 = memref.load %arg4[%90] : memref<32xf32, #tpu.memory_space<smem>>
    %92 = vector.broadcast %91 : f32 to vector<1x256xf32>
    %93 = arith.mulf %92, %83 : vector<1x256xf32>
    %94 = arith.addf %71, %93 : vector<1x256xf32>
    %95 = arith.mulf %86, %89 : vector<1x256xf32>
    %96 = arith.addf %73, %95 : vector<1x256xf32>
    %c4_i32 = arith.constant 4 : i32
    %97 = arith.index_cast %c4_i32 : i32 to index
    %c0_26 = arith.constant 0 : index
    %c0_27 = arith.constant 0 : index
    %98 = vector.load %arg2[%97, %c0_26, %c0_27] : memref<32x8x256xbf16, #tpu.memory_space<vmem>>, vector<1x8x256xbf16>
    %99 = vector.shape_cast %98 : vector<1x8x256xbf16> to vector<8x256xbf16>
    %cst_28 = arith.constant dense<0.000000e+00> : vector<7x256xf32>
    %100 = tpu.matmul %3, %99, %cst_28 {dimension_numbers = #tpu.dot_dimension_numbers<[1], [0], [0], [1], [0, 0, 1, 1], [], []>} : vector<7x8xbf16>, vector<8x256xbf16>, vector<7x256xf32> -> vector<7x256xf32>
    %101 = vector.extract_strided_slice %100 {offsets = [1, 0], sizes = [3, 256], strides = [1, 1]} : vector<7x256xf32> to vector<3x256xf32>
    %102 = vector.extract_strided_slice %100 {offsets = [0, 0], sizes = [3, 256], strides = [1, 1]} : vector<7x256xf32> to vector<3x256xf32>
    %103 = vector.extract_strided_slice %100 {offsets = [4, 0], sizes = [3, 256], strides = [1, 1]} : vector<7x256xf32> to vector<3x256xf32>
    %104 = arith.mulf %101, %103 : vector<3x256xf32>
    %cst_29 = arith.constant dense<0.000000e+00> : vector<256xf32>
    %105 = vector.multi_reduction <add>, %104, %cst_29 [0] : vector<3x256xf32> to vector<256xf32>
    %106 = vector.shape_cast %105 : vector<256xf32> to vector<1x256xf32>
    %107 = arith.mulf %101, %101 : vector<3x256xf32>
    %cst_30 = arith.constant dense<0.000000e+00> : vector<256xf32>
    %108 = vector.multi_reduction <add>, %107, %cst_30 [0] : vector<3x256xf32> to vector<256xf32>
    %109 = vector.shape_cast %108 : vector<256xf32> to vector<1x256xf32>
    %110 = arith.mulf %102, %102 : vector<3x256xf32>
    %cst_31 = arith.constant dense<0.000000e+00> : vector<256xf32>
    %111 = vector.multi_reduction <add>, %110, %cst_31 [0] : vector<3x256xf32> to vector<256xf32>
    %112 = vector.shape_cast %111 : vector<256xf32> to vector<1x256xf32>
    %113 = arith.index_cast %c4_i32 : i32 to index
    %114 = memref.load %arg4[%113] : memref<32xf32, #tpu.memory_space<smem>>
    %115 = vector.broadcast %114 : f32 to vector<1x256xf32>
    %116 = arith.mulf %115, %106 : vector<1x256xf32>
    %117 = arith.addf %94, %116 : vector<1x256xf32>
    %118 = arith.mulf %109, %112 : vector<1x256xf32>
    %119 = arith.addf %96, %118 : vector<1x256xf32>
    %c5_i32 = arith.constant 5 : i32
    %120 = arith.index_cast %c5_i32 : i32 to index
    %c0_32 = arith.constant 0 : index
    %c0_33 = arith.constant 0 : index
    %121 = vector.load %arg2[%120, %c0_32, %c0_33] : memref<32x8x256xbf16, #tpu.memory_space<vmem>>, vector<1x8x256xbf16>
    %122 = vector.shape_cast %121 : vector<1x8x256xbf16> to vector<8x256xbf16>
    %cst_34 = arith.constant dense<0.000000e+00> : vector<7x256xf32>
    %123 = tpu.matmul %3, %122, %cst_34 {dimension_numbers = #tpu.dot_dimension_numbers<[1], [0], [0], [1], [0, 0, 1, 1], [], []>} : vector<7x8xbf16>, vector<8x256xbf16>, vector<7x256xf32> -> vector<7x256xf32>
    %124 = vector.extract_strided_slice %123 {offsets = [1, 0], sizes = [3, 256], strides = [1, 1]} : vector<7x256xf32> to vector<3x256xf32>
    %125 = vector.extract_strided_slice %123 {offsets = [0, 0], sizes = [3, 256], strides = [1, 1]} : vector<7x256xf32> to vector<3x256xf32>
    %126 = vector.extract_strided_slice %123 {offsets = [4, 0], sizes = [3, 256], strides = [1, 1]} : vector<7x256xf32> to vector<3x256xf32>
    %127 = arith.mulf %124, %126 : vector<3x256xf32>
    %cst_35 = arith.constant dense<0.000000e+00> : vector<256xf32>
    %128 = vector.multi_reduction <add>, %127, %cst_35 [0] : vector<3x256xf32> to vector<256xf32>
    %129 = vector.shape_cast %128 : vector<256xf32> to vector<1x256xf32>
    %130 = arith.mulf %124, %124 : vector<3x256xf32>
    %cst_36 = arith.constant dense<0.000000e+00> : vector<256xf32>
    %131 = vector.multi_reduction <add>, %130, %cst_36 [0] : vector<3x256xf32> to vector<256xf32>
    %132 = vector.shape_cast %131 : vector<256xf32> to vector<1x256xf32>
    %133 = arith.mulf %125, %125 : vector<3x256xf32>
    %cst_37 = arith.constant dense<0.000000e+00> : vector<256xf32>
    %134 = vector.multi_reduction <add>, %133, %cst_37 [0] : vector<3x256xf32> to vector<256xf32>
    %135 = vector.shape_cast %134 : vector<256xf32> to vector<1x256xf32>
    %136 = arith.index_cast %c5_i32 : i32 to index
    %137 = memref.load %arg4[%136] : memref<32xf32, #tpu.memory_space<smem>>
    %138 = vector.broadcast %137 : f32 to vector<1x256xf32>
    %139 = arith.mulf %138, %129 : vector<1x256xf32>
    %140 = arith.addf %117, %139 : vector<1x256xf32>
    %141 = arith.mulf %132, %135 : vector<1x256xf32>
    %142 = arith.addf %119, %141 : vector<1x256xf32>
    %c6_i32 = arith.constant 6 : i32
    %143 = arith.index_cast %c6_i32 : i32 to index
    %c0_38 = arith.constant 0 : index
    %c0_39 = arith.constant 0 : index
    %144 = vector.load %arg2[%143, %c0_38, %c0_39] : memref<32x8x256xbf16, #tpu.memory_space<vmem>>, vector<1x8x256xbf16>
    %145 = vector.shape_cast %144 : vector<1x8x256xbf16> to vector<8x256xbf16>
    %cst_40 = arith.constant dense<0.000000e+00> : vector<7x256xf32>
    %146 = tpu.matmul %3, %145, %cst_40 {dimension_numbers = #tpu.dot_dimension_numbers<[1], [0], [0], [1], [0, 0, 1, 1], [], []>} : vector<7x8xbf16>, vector<8x256xbf16>, vector<7x256xf32> -> vector<7x256xf32>
    %147 = vector.extract_strided_slice %146 {offsets = [1, 0], sizes = [3, 256], strides = [1, 1]} : vector<7x256xf32> to vector<3x256xf32>
    %148 = vector.extract_strided_slice %146 {offsets = [0, 0], sizes = [3, 256], strides = [1, 1]} : vector<7x256xf32> to vector<3x256xf32>
    %149 = vector.extract_strided_slice %146 {offsets = [4, 0], sizes = [3, 256], strides = [1, 1]} : vector<7x256xf32> to vector<3x256xf32>
    %150 = arith.mulf %147, %149 : vector<3x256xf32>
    %cst_41 = arith.constant dense<0.000000e+00> : vector<256xf32>
    %151 = vector.multi_reduction <add>, %150, %cst_41 [0] : vector<3x256xf32> to vector<256xf32>
    %152 = vector.shape_cast %151 : vector<256xf32> to vector<1x256xf32>
    %153 = arith.mulf %147, %147 : vector<3x256xf32>
    %cst_42 = arith.constant dense<0.000000e+00> : vector<256xf32>
    %154 = vector.multi_reduction <add>, %153, %cst_42 [0] : vector<3x256xf32> to vector<256xf32>
    %155 = vector.shape_cast %154 : vector<256xf32> to vector<1x256xf32>
    %156 = arith.mulf %148, %148 : vector<3x256xf32>
    %cst_43 = arith.constant dense<0.000000e+00> : vector<256xf32>
    %157 = vector.multi_reduction <add>, %156, %cst_43 [0] : vector<3x256xf32> to vector<256xf32>
    %158 = vector.shape_cast %157 : vector<256xf32> to vector<1x256xf32>
    %159 = arith.index_cast %c6_i32 : i32 to index
    %160 = memref.load %arg4[%159] : memref<32xf32, #tpu.memory_space<smem>>
    %161 = vector.broadcast %160 : f32 to vector<1x256xf32>
    %162 = arith.mulf %161, %152 : vector<1x256xf32>
    %163 = arith.addf %140, %162 : vector<1x256xf32>
    %164 = arith.mulf %155, %158 : vector<1x256xf32>
    %165 = arith.addf %142, %164 : vector<1x256xf32>
    %c7_i32 = arith.constant 7 : i32
    %166 = arith.index_cast %c7_i32 : i32 to index
    %c0_44 = arith.constant 0 : index
    %c0_45 = arith.constant 0 : index
    %167 = vector.load %arg2[%166, %c0_44, %c0_45] : memref<32x8x256xbf16, #tpu.memory_space<vmem>>, vector<1x8x256xbf16>
    %168 = vector.shape_cast %167 : vector<1x8x256xbf16> to vector<8x256xbf16>
    %cst_46 = arith.constant dense<0.000000e+00> : vector<7x256xf32>
    %169 = tpu.matmul %3, %168, %cst_46 {dimension_numbers = #tpu.dot_dimension_numbers<[1], [0], [0], [1], [0, 0, 1, 1], [], []>} : vector<7x8xbf16>, vector<8x256xbf16>, vector<7x256xf32> -> vector<7x256xf32>
    %170 = vector.extract_strided_slice %169 {offsets = [1, 0], sizes = [3, 256], strides = [1, 1]} : vector<7x256xf32> to vector<3x256xf32>
    %171 = vector.extract_strided_slice %169 {offsets = [0, 0], sizes = [3, 256], strides = [1, 1]} : vector<7x256xf32> to vector<3x256xf32>
    %172 = vector.extract_strided_slice %169 {offsets = [4, 0], sizes = [3, 256], strides = [1, 1]} : vector<7x256xf32> to vector<3x256xf32>
    %173 = arith.mulf %170, %172 : vector<3x256xf32>
    %cst_47 = arith.constant dense<0.000000e+00> : vector<256xf32>
    %174 = vector.multi_reduction <add>, %173, %cst_47 [0] : vector<3x256xf32> to vector<256xf32>
    %175 = vector.shape_cast %174 : vector<256xf32> to vector<1x256xf32>
    %176 = arith.mulf %170, %170 : vector<3x256xf32>
    %cst_48 = arith.constant dense<0.000000e+00> : vector<256xf32>
    %177 = vector.multi_reduction <add>, %176, %cst_48 [0] : vector<3x256xf32> to vector<256xf32>
    %178 = vector.shape_cast %177 : vector<256xf32> to vector<1x256xf32>
    %179 = arith.mulf %171, %171 : vector<3x256xf32>
    %cst_49 = arith.constant dense<0.000000e+00> : vector<256xf32>
    %180 = vector.multi_reduction <add>, %179, %cst_49 [0] : vector<3x256xf32> to vector<256xf32>
    %181 = vector.shape_cast %180 : vector<256xf32> to vector<1x256xf32>
    %182 = arith.index_cast %c7_i32 : i32 to index
    %183 = memref.load %arg4[%182] : memref<32xf32, #tpu.memory_space<smem>>
    %184 = vector.broadcast %183 : f32 to vector<1x256xf32>
    %185 = arith.mulf %184, %175 : vector<1x256xf32>
    %186 = arith.addf %163, %185 : vector<1x256xf32>
    %187 = arith.mulf %178, %181 : vector<1x256xf32>
    %188 = arith.addf %165, %187 : vector<1x256xf32>
    %c8_i32 = arith.constant 8 : i32
    %189 = arith.index_cast %c8_i32 : i32 to index
    %c0_50 = arith.constant 0 : index
    %c0_51 = arith.constant 0 : index
    %190 = vector.load %arg2[%189, %c0_50, %c0_51] : memref<32x8x256xbf16, #tpu.memory_space<vmem>>, vector<1x8x256xbf16>
    %191 = vector.shape_cast %190 : vector<1x8x256xbf16> to vector<8x256xbf16>
    %cst_52 = arith.constant dense<0.000000e+00> : vector<7x256xf32>
    %192 = tpu.matmul %3, %191, %cst_52 {dimension_numbers = #tpu.dot_dimension_numbers<[1], [0], [0], [1], [0, 0, 1, 1], [], []>} : vector<7x8xbf16>, vector<8x256xbf16>, vector<7x256xf32> -> vector<7x256xf32>
    %193 = vector.extract_strided_slice %192 {offsets = [1, 0], sizes = [3, 256], strides = [1, 1]} : vector<7x256xf32> to vector<3x256xf32>
    %194 = vector.extract_strided_slice %192 {offsets = [0, 0], sizes = [3, 256], strides = [1, 1]} : vector<7x256xf32> to vector<3x256xf32>
    %195 = vector.extract_strided_slice %192 {offsets = [4, 0], sizes = [3, 256], strides = [1, 1]} : vector<7x256xf32> to vector<3x256xf32>
    %196 = arith.mulf %193, %195 : vector<3x256xf32>
    %cst_53 = arith.constant dense<0.000000e+00> : vector<256xf32>
    %197 = vector.multi_reduction <add>, %196, %cst_53 [0] : vector<3x256xf32> to vector<256xf32>
    %198 = vector.shape_cast %197 : vector<256xf32> to vector<1x256xf32>
    %199 = arith.mulf %193, %193 : vector<3x256xf32>
    %cst_54 = arith.constant dense<0.000000e+00> : vector<256xf32>
    %200 = vector.multi_reduction <add>, %199, %cst_54 [0] : vector<3x256xf32> to vector<256xf32>
    %201 = vector.shape_cast %200 : vector<256xf32> to vector<1x256xf32>
    %202 = arith.mulf %194, %194 : vector<3x256xf32>
    %cst_55 = arith.constant dense<0.000000e+00> : vector<256xf32>
    %203 = vector.multi_reduction <add>, %202, %cst_55 [0] : vector<3x256xf32> to vector<256xf32>
    %204 = vector.shape_cast %203 : vector<256xf32> to vector<1x256xf32>
    %205 = arith.index_cast %c8_i32 : i32 to index
    %206 = memref.load %arg4[%205] : memref<32xf32, #tpu.memory_space<smem>>
    %207 = vector.broadcast %206 : f32 to vector<1x256xf32>
    %208 = arith.mulf %207, %198 : vector<1x256xf32>
    %209 = arith.addf %186, %208 : vector<1x256xf32>
    %210 = arith.mulf %201, %204 : vector<1x256xf32>
    %211 = arith.addf %188, %210 : vector<1x256xf32>
    %c9_i32 = arith.constant 9 : i32
    %212 = arith.index_cast %c9_i32 : i32 to index
    %c0_56 = arith.constant 0 : index
    %c0_57 = arith.constant 0 : index
    %213 = vector.load %arg2[%212, %c0_56, %c0_57] : memref<32x8x256xbf16, #tpu.memory_space<vmem>>, vector<1x8x256xbf16>
    %214 = vector.shape_cast %213 : vector<1x8x256xbf16> to vector<8x256xbf16>
    %cst_58 = arith.constant dense<0.000000e+00> : vector<7x256xf32>
    %215 = tpu.matmul %3, %214, %cst_58 {dimension_numbers = #tpu.dot_dimension_numbers<[1], [0], [0], [1], [0, 0, 1, 1], [], []>} : vector<7x8xbf16>, vector<8x256xbf16>, vector<7x256xf32> -> vector<7x256xf32>
    %216 = vector.extract_strided_slice %215 {offsets = [1, 0], sizes = [3, 256], strides = [1, 1]} : vector<7x256xf32> to vector<3x256xf32>
    %217 = vector.extract_strided_slice %215 {offsets = [0, 0], sizes = [3, 256], strides = [1, 1]} : vector<7x256xf32> to vector<3x256xf32>
    %218 = vector.extract_strided_slice %215 {offsets = [4, 0], sizes = [3, 256], strides = [1, 1]} : vector<7x256xf32> to vector<3x256xf32>
    %219 = arith.mulf %216, %218 : vector<3x256xf32>
    %cst_59 = arith.constant dense<0.000000e+00> : vector<256xf32>
    %220 = vector.multi_reduction <add>, %219, %cst_59 [0] : vector<3x256xf32> to vector<256xf32>
    %221 = vector.shape_cast %220 : vector<256xf32> to vector<1x256xf32>
    %222 = arith.mulf %216, %216 : vector<3x256xf32>
    %cst_60 = arith.constant dense<0.000000e+00> : vector<256xf32>
    %223 = vector.multi_reduction <add>, %222, %cst_60 [0] : vector<3x256xf32> to vector<256xf32>
    %224 = vector.shape_cast %223 : vector<256xf32> to vector<1x256xf32>
    %225 = arith.mulf %217, %217 : vector<3x256xf32>
    %cst_61 = arith.constant dense<0.000000e+00> : vector<256xf32>
    %226 = vector.multi_reduction <add>, %225, %cst_61 [0] : vector<3x256xf32> to vector<256xf32>
    %227 = vector.shape_cast %226 : vector<256xf32> to vector<1x256xf32>
    %228 = arith.index_cast %c9_i32 : i32 to index
    %229 = memref.load %arg4[%228] : memref<32xf32, #tpu.memory_space<smem>>
    %230 = vector.broadcast %229 : f32 to vector<1x256xf32>
    %231 = arith.mulf %230, %221 : vector<1x256xf32>
    %232 = arith.addf %209, %231 : vector<1x256xf32>
    %233 = arith.mulf %224, %227 : vector<1x256xf32>
    %234 = arith.addf %211, %233 : vector<1x256xf32>
    %c10_i32 = arith.constant 10 : i32
    %235 = arith.index_cast %c10_i32 : i32 to index
    %c0_62 = arith.constant 0 : index
    %c0_63 = arith.constant 0 : index
    %236 = vector.load %arg2[%235, %c0_62, %c0_63] : memref<32x8x256xbf16, #tpu.memory_space<vmem>>, vector<1x8x256xbf16>
    %237 = vector.shape_cast %236 : vector<1x8x256xbf16> to vector<8x256xbf16>
    %cst_64 = arith.constant dense<0.000000e+00> : vector<7x256xf32>
    %238 = tpu.matmul %3, %237, %cst_64 {dimension_numbers = #tpu.dot_dimension_numbers<[1], [0], [0], [1], [0, 0, 1, 1], [], []>} : vector<7x8xbf16>, vector<8x256xbf16>, vector<7x256xf32> -> vector<7x256xf32>
    %239 = vector.extract_strided_slice %238 {offsets = [1, 0], sizes = [3, 256], strides = [1, 1]} : vector<7x256xf32> to vector<3x256xf32>
    %240 = vector.extract_strided_slice %238 {offsets = [0, 0], sizes = [3, 256], strides = [1, 1]} : vector<7x256xf32> to vector<3x256xf32>
    %241 = vector.extract_strided_slice %238 {offsets = [4, 0], sizes = [3, 256], strides = [1, 1]} : vector<7x256xf32> to vector<3x256xf32>
    %242 = arith.mulf %239, %241 : vector<3x256xf32>
    %cst_65 = arith.constant dense<0.000000e+00> : vector<256xf32>
    %243 = vector.multi_reduction <add>, %242, %cst_65 [0] : vector<3x256xf32> to vector<256xf32>
    %244 = vector.shape_cast %243 : vector<256xf32> to vector<1x256xf32>
    %245 = arith.mulf %239, %239 : vector<3x256xf32>
    %cst_66 = arith.constant dense<0.000000e+00> : vector<256xf32>
    %246 = vector.multi_reduction <add>, %245, %cst_66 [0] : vector<3x256xf32> to vector<256xf32>
    %247 = vector.shape_cast %246 : vector<256xf32> to vector<1x256xf32>
    %248 = arith.mulf %240, %240 : vector<3x256xf32>
    %cst_67 = arith.constant dense<0.000000e+00> : vector<256xf32>
    %249 = vector.multi_reduction <add>, %248, %cst_67 [0] : vector<3x256xf32> to vector<256xf32>
    %250 = vector.shape_cast %249 : vector<256xf32> to vector<1x256xf32>
    %251 = arith.index_cast %c10_i32 : i32 to index
    %252 = memref.load %arg4[%251] : memref<32xf32, #tpu.memory_space<smem>>
    %253 = vector.broadcast %252 : f32 to vector<1x256xf32>
    %254 = arith.mulf %253, %244 : vector<1x256xf32>
    %255 = arith.addf %232, %254 : vector<1x256xf32>
    %256 = arith.mulf %247, %250 : vector<1x256xf32>
    %257 = arith.addf %234, %256 : vector<1x256xf32>
    %c11_i32 = arith.constant 11 : i32
    %258 = arith.index_cast %c11_i32 : i32 to index
    %c0_68 = arith.constant 0 : index
    %c0_69 = arith.constant 0 : index
    %259 = vector.load %arg2[%258, %c0_68, %c0_69] : memref<32x8x256xbf16, #tpu.memory_space<vmem>>, vector<1x8x256xbf16>
    %260 = vector.shape_cast %259 : vector<1x8x256xbf16> to vector<8x256xbf16>
    %cst_70 = arith.constant dense<0.000000e+00> : vector<7x256xf32>
    %261 = tpu.matmul %3, %260, %cst_70 {dimension_numbers = #tpu.dot_dimension_numbers<[1], [0], [0], [1], [0, 0, 1, 1], [], []>} : vector<7x8xbf16>, vector<8x256xbf16>, vector<7x256xf32> -> vector<7x256xf32>
    %262 = vector.extract_strided_slice %261 {offsets = [1, 0], sizes = [3, 256], strides = [1, 1]} : vector<7x256xf32> to vector<3x256xf32>
    %263 = vector.extract_strided_slice %261 {offsets = [0, 0], sizes = [3, 256], strides = [1, 1]} : vector<7x256xf32> to vector<3x256xf32>
    %264 = vector.extract_strided_slice %261 {offsets = [4, 0], sizes = [3, 256], strides = [1, 1]} : vector<7x256xf32> to vector<3x256xf32>
    %265 = arith.mulf %262, %264 : vector<3x256xf32>
    %cst_71 = arith.constant dense<0.000000e+00> : vector<256xf32>
    %266 = vector.multi_reduction <add>, %265, %cst_71 [0] : vector<3x256xf32> to vector<256xf32>
    %267 = vector.shape_cast %266 : vector<256xf32> to vector<1x256xf32>
    %268 = arith.mulf %262, %262 : vector<3x256xf32>
    %cst_72 = arith.constant dense<0.000000e+00> : vector<256xf32>
    %269 = vector.multi_reduction <add>, %268, %cst_72 [0] : vector<3x256xf32> to vector<256xf32>
    %270 = vector.shape_cast %269 : vector<256xf32> to vector<1x256xf32>
    %271 = arith.mulf %263, %263 : vector<3x256xf32>
    %cst_73 = arith.constant dense<0.000000e+00> : vector<256xf32>
    %272 = vector.multi_reduction <add>, %271, %cst_73 [0] : vector<3x256xf32> to vector<256xf32>
    %273 = vector.shape_cast %272 : vector<256xf32> to vector<1x256xf32>
    %274 = arith.index_cast %c11_i32 : i32 to index
    %275 = memref.load %arg4[%274] : memref<32xf32, #tpu.memory_space<smem>>
    %276 = vector.broadcast %275 : f32 to vector<1x256xf32>
    %277 = arith.mulf %276, %267 : vector<1x256xf32>
    %278 = arith.addf %255, %277 : vector<1x256xf32>
    %279 = arith.mulf %270, %273 : vector<1x256xf32>
    %280 = arith.addf %257, %279 : vector<1x256xf32>
    %c12_i32 = arith.constant 12 : i32
    %281 = arith.index_cast %c12_i32 : i32 to index
    %c0_74 = arith.constant 0 : index
    %c0_75 = arith.constant 0 : index
    %282 = vector.load %arg2[%281, %c0_74, %c0_75] : memref<32x8x256xbf16, #tpu.memory_space<vmem>>, vector<1x8x256xbf16>
    %283 = vector.shape_cast %282 : vector<1x8x256xbf16> to vector<8x256xbf16>
    %cst_76 = arith.constant dense<0.000000e+00> : vector<7x256xf32>
    %284 = tpu.matmul %3, %283, %cst_76 {dimension_numbers = #tpu.dot_dimension_numbers<[1], [0], [0], [1], [0, 0, 1, 1], [], []>} : vector<7x8xbf16>, vector<8x256xbf16>, vector<7x256xf32> -> vector<7x256xf32>
    %285 = vector.extract_strided_slice %284 {offsets = [1, 0], sizes = [3, 256], strides = [1, 1]} : vector<7x256xf32> to vector<3x256xf32>
    %286 = vector.extract_strided_slice %284 {offsets = [0, 0], sizes = [3, 256], strides = [1, 1]} : vector<7x256xf32> to vector<3x256xf32>
    %287 = vector.extract_strided_slice %284 {offsets = [4, 0], sizes = [3, 256], strides = [1, 1]} : vector<7x256xf32> to vector<3x256xf32>
    %288 = arith.mulf %285, %287 : vector<3x256xf32>
    %cst_77 = arith.constant dense<0.000000e+00> : vector<256xf32>
    %289 = vector.multi_reduction <add>, %288, %cst_77 [0] : vector<3x256xf32> to vector<256xf32>
    %290 = vector.shape_cast %289 : vector<256xf32> to vector<1x256xf32>
    %291 = arith.mulf %285, %285 : vector<3x256xf32>
    %cst_78 = arith.constant dense<0.000000e+00> : vector<256xf32>
    %292 = vector.multi_reduction <add>, %291, %cst_78 [0] : vector<3x256xf32> to vector<256xf32>
    %293 = vector.shape_cast %292 : vector<256xf32> to vector<1x256xf32>
    %294 = arith.mulf %286, %286 : vector<3x256xf32>
    %cst_79 = arith.constant dense<0.000000e+00> : vector<256xf32>
    %295 = vector.multi_reduction <add>, %294, %cst_79 [0] : vector<3x256xf32> to vector<256xf32>
    %296 = vector.shape_cast %295 : vector<256xf32> to vector<1x256xf32>
    %297 = arith.index_cast %c12_i32 : i32 to index
    %298 = memref.load %arg4[%297] : memref<32xf32, #tpu.memory_space<smem>>
    %299 = vector.broadcast %298 : f32 to vector<1x256xf32>
    %300 = arith.mulf %299, %290 : vector<1x256xf32>
    %301 = arith.addf %278, %300 : vector<1x256xf32>
    %302 = arith.mulf %293, %296 : vector<1x256xf32>
    %303 = arith.addf %280, %302 : vector<1x256xf32>
    %c13_i32 = arith.constant 13 : i32
    %304 = arith.index_cast %c13_i32 : i32 to index
    %c0_80 = arith.constant 0 : index
    %c0_81 = arith.constant 0 : index
    %305 = vector.load %arg2[%304, %c0_80, %c0_81] : memref<32x8x256xbf16, #tpu.memory_space<vmem>>, vector<1x8x256xbf16>
    %306 = vector.shape_cast %305 : vector<1x8x256xbf16> to vector<8x256xbf16>
    %cst_82 = arith.constant dense<0.000000e+00> : vector<7x256xf32>
    %307 = tpu.matmul %3, %306, %cst_82 {dimension_numbers = #tpu.dot_dimension_numbers<[1], [0], [0], [1], [0, 0, 1, 1], [], []>} : vector<7x8xbf16>, vector<8x256xbf16>, vector<7x256xf32> -> vector<7x256xf32>
    %308 = vector.extract_strided_slice %307 {offsets = [1, 0], sizes = [3, 256], strides = [1, 1]} : vector<7x256xf32> to vector<3x256xf32>
    %309 = vector.extract_strided_slice %307 {offsets = [0, 0], sizes = [3, 256], strides = [1, 1]} : vector<7x256xf32> to vector<3x256xf32>
    %310 = vector.extract_strided_slice %307 {offsets = [4, 0], sizes = [3, 256], strides = [1, 1]} : vector<7x256xf32> to vector<3x256xf32>
    %311 = arith.mulf %308, %310 : vector<3x256xf32>
    %cst_83 = arith.constant dense<0.000000e+00> : vector<256xf32>
    %312 = vector.multi_reduction <add>, %311, %cst_83 [0] : vector<3x256xf32> to vector<256xf32>
    %313 = vector.shape_cast %312 : vector<256xf32> to vector<1x256xf32>
    %314 = arith.mulf %308, %308 : vector<3x256xf32>
    %cst_84 = arith.constant dense<0.000000e+00> : vector<256xf32>
    %315 = vector.multi_reduction <add>, %314, %cst_84 [0] : vector<3x256xf32> to vector<256xf32>
    %316 = vector.shape_cast %315 : vector<256xf32> to vector<1x256xf32>
    %317 = arith.mulf %309, %309 : vector<3x256xf32>
    %cst_85 = arith.constant dense<0.000000e+00> : vector<256xf32>
    %318 = vector.multi_reduction <add>, %317, %cst_85 [0] : vector<3x256xf32> to vector<256xf32>
    %319 = vector.shape_cast %318 : vector<256xf32> to vector<1x256xf32>
    %320 = arith.index_cast %c13_i32 : i32 to index
    %321 = memref.load %arg4[%320] : memref<32xf32, #tpu.memory_space<smem>>
    %322 = vector.broadcast %321 : f32 to vector<1x256xf32>
    %323 = arith.mulf %322, %313 : vector<1x256xf32>
    %324 = arith.addf %301, %323 : vector<1x256xf32>
    %325 = arith.mulf %316, %319 : vector<1x256xf32>
    %326 = arith.addf %303, %325 : vector<1x256xf32>
    %c14_i32 = arith.constant 14 : i32
    %327 = arith.index_cast %c14_i32 : i32 to index
    %c0_86 = arith.constant 0 : index
    %c0_87 = arith.constant 0 : index
    %328 = vector.load %arg2[%327, %c0_86, %c0_87] : memref<32x8x256xbf16, #tpu.memory_space<vmem>>, vector<1x8x256xbf16>
    %329 = vector.shape_cast %328 : vector<1x8x256xbf16> to vector<8x256xbf16>
    %cst_88 = arith.constant dense<0.000000e+00> : vector<7x256xf32>
    %330 = tpu.matmul %3, %329, %cst_88 {dimension_numbers = #tpu.dot_dimension_numbers<[1], [0], [0], [1], [0, 0, 1, 1], [], []>} : vector<7x8xbf16>, vector<8x256xbf16>, vector<7x256xf32> -> vector<7x256xf32>
    %331 = vector.extract_strided_slice %330 {offsets = [1, 0], sizes = [3, 256], strides = [1, 1]} : vector<7x256xf32> to vector<3x256xf32>
    %332 = vector.extract_strided_slice %330 {offsets = [0, 0], sizes = [3, 256], strides = [1, 1]} : vector<7x256xf32> to vector<3x256xf32>
    %333 = vector.extract_strided_slice %330 {offsets = [4, 0], sizes = [3, 256], strides = [1, 1]} : vector<7x256xf32> to vector<3x256xf32>
    %334 = arith.mulf %331, %333 : vector<3x256xf32>
    %cst_89 = arith.constant dense<0.000000e+00> : vector<256xf32>
    %335 = vector.multi_reduction <add>, %334, %cst_89 [0] : vector<3x256xf32> to vector<256xf32>
    %336 = vector.shape_cast %335 : vector<256xf32> to vector<1x256xf32>
    %337 = arith.mulf %331, %331 : vector<3x256xf32>
    %cst_90 = arith.constant dense<0.000000e+00> : vector<256xf32>
    %338 = vector.multi_reduction <add>, %337, %cst_90 [0] : vector<3x256xf32> to vector<256xf32>
    %339 = vector.shape_cast %338 : vector<256xf32> to vector<1x256xf32>
    %340 = arith.mulf %332, %332 : vector<3x256xf32>
    %cst_91 = arith.constant dense<0.000000e+00> : vector<256xf32>
    %341 = vector.multi_reduction <add>, %340, %cst_91 [0] : vector<3x256xf32> to vector<256xf32>
    %342 = vector.shape_cast %341 : vector<256xf32> to vector<1x256xf32>
    %343 = arith.index_cast %c14_i32 : i32 to index
    %344 = memref.load %arg4[%343] : memref<32xf32, #tpu.memory_space<smem>>
    %345 = vector.broadcast %344 : f32 to vector<1x256xf32>
    %346 = arith.mulf %345, %336 : vector<1x256xf32>
    %347 = arith.addf %324, %346 : vector<1x256xf32>
    %348 = arith.mulf %339, %342 : vector<1x256xf32>
    %349 = arith.addf %326, %348 : vector<1x256xf32>
    %c15_i32 = arith.constant 15 : i32
    %350 = arith.index_cast %c15_i32 : i32 to index
    %c0_92 = arith.constant 0 : index
    %c0_93 = arith.constant 0 : index
    %351 = vector.load %arg2[%350, %c0_92, %c0_93] : memref<32x8x256xbf16, #tpu.memory_space<vmem>>, vector<1x8x256xbf16>
    %352 = vector.shape_cast %351 : vector<1x8x256xbf16> to vector<8x256xbf16>
    %cst_94 = arith.constant dense<0.000000e+00> : vector<7x256xf32>
    %353 = tpu.matmul %3, %352, %cst_94 {dimension_numbers = #tpu.dot_dimension_numbers<[1], [0], [0], [1], [0, 0, 1, 1], [], []>} : vector<7x8xbf16>, vector<8x256xbf16>, vector<7x256xf32> -> vector<7x256xf32>
    %354 = vector.extract_strided_slice %353 {offsets = [1, 0], sizes = [3, 256], strides = [1, 1]} : vector<7x256xf32> to vector<3x256xf32>
    %355 = vector.extract_strided_slice %353 {offsets = [0, 0], sizes = [3, 256], strides = [1, 1]} : vector<7x256xf32> to vector<3x256xf32>
    %356 = vector.extract_strided_slice %353 {offsets = [4, 0], sizes = [3, 256], strides = [1, 1]} : vector<7x256xf32> to vector<3x256xf32>
    %357 = arith.mulf %354, %356 : vector<3x256xf32>
    %cst_95 = arith.constant dense<0.000000e+00> : vector<256xf32>
    %358 = vector.multi_reduction <add>, %357, %cst_95 [0] : vector<3x256xf32> to vector<256xf32>
    %359 = vector.shape_cast %358 : vector<256xf32> to vector<1x256xf32>
    %360 = arith.mulf %354, %354 : vector<3x256xf32>
    %cst_96 = arith.constant dense<0.000000e+00> : vector<256xf32>
    %361 = vector.multi_reduction <add>, %360, %cst_96 [0] : vector<3x256xf32> to vector<256xf32>
    %362 = vector.shape_cast %361 : vector<256xf32> to vector<1x256xf32>
    %363 = arith.mulf %355, %355 : vector<3x256xf32>
    %cst_97 = arith.constant dense<0.000000e+00> : vector<256xf32>
    %364 = vector.multi_reduction <add>, %363, %cst_97 [0] : vector<3x256xf32> to vector<256xf32>
    %365 = vector.shape_cast %364 : vector<256xf32> to vector<1x256xf32>
    %366 = arith.index_cast %c15_i32 : i32 to index
    %367 = memref.load %arg4[%366] : memref<32xf32, #tpu.memory_space<smem>>
    %368 = vector.broadcast %367 : f32 to vector<1x256xf32>
    %369 = arith.mulf %368, %359 : vector<1x256xf32>
    %370 = arith.addf %347, %369 : vector<1x256xf32>
    %371 = arith.mulf %362, %365 : vector<1x256xf32>
    %372 = arith.addf %349, %371 : vector<1x256xf32>
    %c16_i32 = arith.constant 16 : i32
    %373 = arith.index_cast %c16_i32 : i32 to index
    %c0_98 = arith.constant 0 : index
    %c0_99 = arith.constant 0 : index
    %374 = vector.load %arg2[%373, %c0_98, %c0_99] : memref<32x8x256xbf16, #tpu.memory_space<vmem>>, vector<1x8x256xbf16>
    %375 = vector.shape_cast %374 : vector<1x8x256xbf16> to vector<8x256xbf16>
    %cst_100 = arith.constant dense<0.000000e+00> : vector<7x256xf32>
    %376 = tpu.matmul %3, %375, %cst_100 {dimension_numbers = #tpu.dot_dimension_numbers<[1], [0], [0], [1], [0, 0, 1, 1], [], []>} : vector<7x8xbf16>, vector<8x256xbf16>, vector<7x256xf32> -> vector<7x256xf32>
    %377 = vector.extract_strided_slice %376 {offsets = [1, 0], sizes = [3, 256], strides = [1, 1]} : vector<7x256xf32> to vector<3x256xf32>
    %378 = vector.extract_strided_slice %376 {offsets = [0, 0], sizes = [3, 256], strides = [1, 1]} : vector<7x256xf32> to vector<3x256xf32>
    %379 = vector.extract_strided_slice %376 {offsets = [4, 0], sizes = [3, 256], strides = [1, 1]} : vector<7x256xf32> to vector<3x256xf32>
    %380 = arith.mulf %377, %379 : vector<3x256xf32>
    %cst_101 = arith.constant dense<0.000000e+00> : vector<256xf32>
    %381 = vector.multi_reduction <add>, %380, %cst_101 [0] : vector<3x256xf32> to vector<256xf32>
    %382 = vector.shape_cast %381 : vector<256xf32> to vector<1x256xf32>
    %383 = arith.mulf %377, %377 : vector<3x256xf32>
    %cst_102 = arith.constant dense<0.000000e+00> : vector<256xf32>
    %384 = vector.multi_reduction <add>, %383, %cst_102 [0] : vector<3x256xf32> to vector<256xf32>
    %385 = vector.shape_cast %384 : vector<256xf32> to vector<1x256xf32>
    %386 = arith.mulf %378, %378 : vector<3x256xf32>
    %cst_103 = arith.constant dense<0.000000e+00> : vector<256xf32>
    %387 = vector.multi_reduction <add>, %386, %cst_103 [0] : vector<3x256xf32> to vector<256xf32>
    %388 = vector.shape_cast %387 : vector<256xf32> to vector<1x256xf32>
    %389 = arith.index_cast %c16_i32 : i32 to index
    %390 = memref.load %arg4[%389] : memref<32xf32, #tpu.memory_space<smem>>
    %391 = vector.broadcast %390 : f32 to vector<1x256xf32>
    %392 = arith.mulf %391, %382 : vector<1x256xf32>
    %393 = arith.addf %370, %392 : vector<1x256xf32>
    %394 = arith.mulf %385, %388 : vector<1x256xf32>
    %395 = arith.addf %372, %394 : vector<1x256xf32>
    %c17_i32 = arith.constant 17 : i32
    %396 = arith.index_cast %c17_i32 : i32 to index
    %c0_104 = arith.constant 0 : index
    %c0_105 = arith.constant 0 : index
    %397 = vector.load %arg2[%396, %c0_104, %c0_105] : memref<32x8x256xbf16, #tpu.memory_space<vmem>>, vector<1x8x256xbf16>
    %398 = vector.shape_cast %397 : vector<1x8x256xbf16> to vector<8x256xbf16>
    %cst_106 = arith.constant dense<0.000000e+00> : vector<7x256xf32>
    %399 = tpu.matmul %3, %398, %cst_106 {dimension_numbers = #tpu.dot_dimension_numbers<[1], [0], [0], [1], [0, 0, 1, 1], [], []>} : vector<7x8xbf16>, vector<8x256xbf16>, vector<7x256xf32> -> vector<7x256xf32>
    %400 = vector.extract_strided_slice %399 {offsets = [1, 0], sizes = [3, 256], strides = [1, 1]} : vector<7x256xf32> to vector<3x256xf32>
    %401 = vector.extract_strided_slice %399 {offsets = [0, 0], sizes = [3, 256], strides = [1, 1]} : vector<7x256xf32> to vector<3x256xf32>
    %402 = vector.extract_strided_slice %399 {offsets = [4, 0], sizes = [3, 256], strides = [1, 1]} : vector<7x256xf32> to vector<3x256xf32>
    %403 = arith.mulf %400, %402 : vector<3x256xf32>
    %cst_107 = arith.constant dense<0.000000e+00> : vector<256xf32>
    %404 = vector.multi_reduction <add>, %403, %cst_107 [0] : vector<3x256xf32> to vector<256xf32>
    %405 = vector.shape_cast %404 : vector<256xf32> to vector<1x256xf32>
    %406 = arith.mulf %400, %400 : vector<3x256xf32>
    %cst_108 = arith.constant dense<0.000000e+00> : vector<256xf32>
    %407 = vector.multi_reduction <add>, %406, %cst_108 [0] : vector<3x256xf32> to vector<256xf32>
    %408 = vector.shape_cast %407 : vector<256xf32> to vector<1x256xf32>
    %409 = arith.mulf %401, %401 : vector<3x256xf32>
    %cst_109 = arith.constant dense<0.000000e+00> : vector<256xf32>
    %410 = vector.multi_reduction <add>, %409, %cst_109 [0] : vector<3x256xf32> to vector<256xf32>
    %411 = vector.shape_cast %410 : vector<256xf32> to vector<1x256xf32>
    %412 = arith.index_cast %c17_i32 : i32 to index
    %413 = memref.load %arg4[%412] : memref<32xf32, #tpu.memory_space<smem>>
    %414 = vector.broadcast %413 : f32 to vector<1x256xf32>
    %415 = arith.mulf %414, %405 : vector<1x256xf32>
    %416 = arith.addf %393, %415 : vector<1x256xf32>
    %417 = arith.mulf %408, %411 : vector<1x256xf32>
    %418 = arith.addf %395, %417 : vector<1x256xf32>
    %c18_i32 = arith.constant 18 : i32
    %419 = arith.index_cast %c18_i32 : i32 to index
    %c0_110 = arith.constant 0 : index
    %c0_111 = arith.constant 0 : index
    %420 = vector.load %arg2[%419, %c0_110, %c0_111] : memref<32x8x256xbf16, #tpu.memory_space<vmem>>, vector<1x8x256xbf16>
    %421 = vector.shape_cast %420 : vector<1x8x256xbf16> to vector<8x256xbf16>
    %cst_112 = arith.constant dense<0.000000e+00> : vector<7x256xf32>
    %422 = tpu.matmul %3, %421, %cst_112 {dimension_numbers = #tpu.dot_dimension_numbers<[1], [0], [0], [1], [0, 0, 1, 1], [], []>} : vector<7x8xbf16>, vector<8x256xbf16>, vector<7x256xf32> -> vector<7x256xf32>
    %423 = vector.extract_strided_slice %422 {offsets = [1, 0], sizes = [3, 256], strides = [1, 1]} : vector<7x256xf32> to vector<3x256xf32>
    %424 = vector.extract_strided_slice %422 {offsets = [0, 0], sizes = [3, 256], strides = [1, 1]} : vector<7x256xf32> to vector<3x256xf32>
    %425 = vector.extract_strided_slice %422 {offsets = [4, 0], sizes = [3, 256], strides = [1, 1]} : vector<7x256xf32> to vector<3x256xf32>
    %426 = arith.mulf %423, %425 : vector<3x256xf32>
    %cst_113 = arith.constant dense<0.000000e+00> : vector<256xf32>
    %427 = vector.multi_reduction <add>, %426, %cst_113 [0] : vector<3x256xf32> to vector<256xf32>
    %428 = vector.shape_cast %427 : vector<256xf32> to vector<1x256xf32>
    %429 = arith.mulf %423, %423 : vector<3x256xf32>
    %cst_114 = arith.constant dense<0.000000e+00> : vector<256xf32>
    %430 = vector.multi_reduction <add>, %429, %cst_114 [0] : vector<3x256xf32> to vector<256xf32>
    %431 = vector.shape_cast %430 : vector<256xf32> to vector<1x256xf32>
    %432 = arith.mulf %424, %424 : vector<3x256xf32>
    %cst_115 = arith.constant dense<0.000000e+00> : vector<256xf32>
    %433 = vector.multi_reduction <add>, %432, %cst_115 [0] : vector<3x256xf32> to vector<256xf32>
    %434 = vector.shape_cast %433 : vector<256xf32> to vector<1x256xf32>
    %435 = arith.index_cast %c18_i32 : i32 to index
    %436 = memref.load %arg4[%435] : memref<32xf32, #tpu.memory_space<smem>>
    %437 = vector.broadcast %436 : f32 to vector<1x256xf32>
    %438 = arith.mulf %437, %428 : vector<1x256xf32>
    %439 = arith.addf %416, %438 : vector<1x256xf32>
    %440 = arith.mulf %431, %434 : vector<1x256xf32>
    %441 = arith.addf %418, %440 : vector<1x256xf32>
    %c19_i32 = arith.constant 19 : i32
    %442 = arith.index_cast %c19_i32 : i32 to index
    %c0_116 = arith.constant 0 : index
    %c0_117 = arith.constant 0 : index
    %443 = vector.load %arg2[%442, %c0_116, %c0_117] : memref<32x8x256xbf16, #tpu.memory_space<vmem>>, vector<1x8x256xbf16>
    %444 = vector.shape_cast %443 : vector<1x8x256xbf16> to vector<8x256xbf16>
    %cst_118 = arith.constant dense<0.000000e+00> : vector<7x256xf32>
    %445 = tpu.matmul %3, %444, %cst_118 {dimension_numbers = #tpu.dot_dimension_numbers<[1], [0], [0], [1], [0, 0, 1, 1], [], []>} : vector<7x8xbf16>, vector<8x256xbf16>, vector<7x256xf32> -> vector<7x256xf32>
    %446 = vector.extract_strided_slice %445 {offsets = [1, 0], sizes = [3, 256], strides = [1, 1]} : vector<7x256xf32> to vector<3x256xf32>
    %447 = vector.extract_strided_slice %445 {offsets = [0, 0], sizes = [3, 256], strides = [1, 1]} : vector<7x256xf32> to vector<3x256xf32>
    %448 = vector.extract_strided_slice %445 {offsets = [4, 0], sizes = [3, 256], strides = [1, 1]} : vector<7x256xf32> to vector<3x256xf32>
    %449 = arith.mulf %446, %448 : vector<3x256xf32>
    %cst_119 = arith.constant dense<0.000000e+00> : vector<256xf32>
    %450 = vector.multi_reduction <add>, %449, %cst_119 [0] : vector<3x256xf32> to vector<256xf32>
    %451 = vector.shape_cast %450 : vector<256xf32> to vector<1x256xf32>
    %452 = arith.mulf %446, %446 : vector<3x256xf32>
    %cst_120 = arith.constant dense<0.000000e+00> : vector<256xf32>
    %453 = vector.multi_reduction <add>, %452, %cst_120 [0] : vector<3x256xf32> to vector<256xf32>
    %454 = vector.shape_cast %453 : vector<256xf32> to vector<1x256xf32>
    %455 = arith.mulf %447, %447 : vector<3x256xf32>
    %cst_121 = arith.constant dense<0.000000e+00> : vector<256xf32>
    %456 = vector.multi_reduction <add>, %455, %cst_121 [0] : vector<3x256xf32> to vector<256xf32>
    %457 = vector.shape_cast %456 : vector<256xf32> to vector<1x256xf32>
    %458 = arith.index_cast %c19_i32 : i32 to index
    %459 = memref.load %arg4[%458] : memref<32xf32, #tpu.memory_space<smem>>
    %460 = vector.broadcast %459 : f32 to vector<1x256xf32>
    %461 = arith.mulf %460, %451 : vector<1x256xf32>
    %462 = arith.addf %439, %461 : vector<1x256xf32>
    %463 = arith.mulf %454, %457 : vector<1x256xf32>
    %464 = arith.addf %441, %463 : vector<1x256xf32>
    %c20_i32 = arith.constant 20 : i32
    %465 = arith.index_cast %c20_i32 : i32 to index
    %c0_122 = arith.constant 0 : index
    %c0_123 = arith.constant 0 : index
    %466 = vector.load %arg2[%465, %c0_122, %c0_123] : memref<32x8x256xbf16, #tpu.memory_space<vmem>>, vector<1x8x256xbf16>
    %467 = vector.shape_cast %466 : vector<1x8x256xbf16> to vector<8x256xbf16>
    %cst_124 = arith.constant dense<0.000000e+00> : vector<7x256xf32>
    %468 = tpu.matmul %3, %467, %cst_124 {dimension_numbers = #tpu.dot_dimension_numbers<[1], [0], [0], [1], [0, 0, 1, 1], [], []>} : vector<7x8xbf16>, vector<8x256xbf16>, vector<7x256xf32> -> vector<7x256xf32>
    %469 = vector.extract_strided_slice %468 {offsets = [1, 0], sizes = [3, 256], strides = [1, 1]} : vector<7x256xf32> to vector<3x256xf32>
    %470 = vector.extract_strided_slice %468 {offsets = [0, 0], sizes = [3, 256], strides = [1, 1]} : vector<7x256xf32> to vector<3x256xf32>
    %471 = vector.extract_strided_slice %468 {offsets = [4, 0], sizes = [3, 256], strides = [1, 1]} : vector<7x256xf32> to vector<3x256xf32>
    %472 = arith.mulf %469, %471 : vector<3x256xf32>
    %cst_125 = arith.constant dense<0.000000e+00> : vector<256xf32>
    %473 = vector.multi_reduction <add>, %472, %cst_125 [0] : vector<3x256xf32> to vector<256xf32>
    %474 = vector.shape_cast %473 : vector<256xf32> to vector<1x256xf32>
    %475 = arith.mulf %469, %469 : vector<3x256xf32>
    %cst_126 = arith.constant dense<0.000000e+00> : vector<256xf32>
    %476 = vector.multi_reduction <add>, %475, %cst_126 [0] : vector<3x256xf32> to vector<256xf32>
    %477 = vector.shape_cast %476 : vector<256xf32> to vector<1x256xf32>
    %478 = arith.mulf %470, %470 : vector<3x256xf32>
    %cst_127 = arith.constant dense<0.000000e+00> : vector<256xf32>
    %479 = vector.multi_reduction <add>, %478, %cst_127 [0] : vector<3x256xf32> to vector<256xf32>
    %480 = vector.shape_cast %479 : vector<256xf32> to vector<1x256xf32>
    %481 = arith.index_cast %c20_i32 : i32 to index
    %482 = memref.load %arg4[%481] : memref<32xf32, #tpu.memory_space<smem>>
    %483 = vector.broadcast %482 : f32 to vector<1x256xf32>
    %484 = arith.mulf %483, %474 : vector<1x256xf32>
    %485 = arith.addf %462, %484 : vector<1x256xf32>
    %486 = arith.mulf %477, %480 : vector<1x256xf32>
    %487 = arith.addf %464, %486 : vector<1x256xf32>
    %c21_i32 = arith.constant 21 : i32
    %488 = arith.index_cast %c21_i32 : i32 to index
    %c0_128 = arith.constant 0 : index
    %c0_129 = arith.constant 0 : index
    %489 = vector.load %arg2[%488, %c0_128, %c0_129] : memref<32x8x256xbf16, #tpu.memory_space<vmem>>, vector<1x8x256xbf16>
    %490 = vector.shape_cast %489 : vector<1x8x256xbf16> to vector<8x256xbf16>
    %cst_130 = arith.constant dense<0.000000e+00> : vector<7x256xf32>
    %491 = tpu.matmul %3, %490, %cst_130 {dimension_numbers = #tpu.dot_dimension_numbers<[1], [0], [0], [1], [0, 0, 1, 1], [], []>} : vector<7x8xbf16>, vector<8x256xbf16>, vector<7x256xf32> -> vector<7x256xf32>
    %492 = vector.extract_strided_slice %491 {offsets = [1, 0], sizes = [3, 256], strides = [1, 1]} : vector<7x256xf32> to vector<3x256xf32>
    %493 = vector.extract_strided_slice %491 {offsets = [0, 0], sizes = [3, 256], strides = [1, 1]} : vector<7x256xf32> to vector<3x256xf32>
    %494 = vector.extract_strided_slice %491 {offsets = [4, 0], sizes = [3, 256], strides = [1, 1]} : vector<7x256xf32> to vector<3x256xf32>
    %495 = arith.mulf %492, %494 : vector<3x256xf32>
    %cst_131 = arith.constant dense<0.000000e+00> : vector<256xf32>
    %496 = vector.multi_reduction <add>, %495, %cst_131 [0] : vector<3x256xf32> to vector<256xf32>
    %497 = vector.shape_cast %496 : vector<256xf32> to vector<1x256xf32>
    %498 = arith.mulf %492, %492 : vector<3x256xf32>
    %cst_132 = arith.constant dense<0.000000e+00> : vector<256xf32>
    %499 = vector.multi_reduction <add>, %498, %cst_132 [0] : vector<3x256xf32> to vector<256xf32>
    %500 = vector.shape_cast %499 : vector<256xf32> to vector<1x256xf32>
    %501 = arith.mulf %493, %493 : vector<3x256xf32>
    %cst_133 = arith.constant dense<0.000000e+00> : vector<256xf32>
    %502 = vector.multi_reduction <add>, %501, %cst_133 [0] : vector<3x256xf32> to vector<256xf32>
    %503 = vector.shape_cast %502 : vector<256xf32> to vector<1x256xf32>
    %504 = arith.index_cast %c21_i32 : i32 to index
    %505 = memref.load %arg4[%504] : memref<32xf32, #tpu.memory_space<smem>>
    %506 = vector.broadcast %505 : f32 to vector<1x256xf32>
    %507 = arith.mulf %506, %497 : vector<1x256xf32>
    %508 = arith.addf %485, %507 : vector<1x256xf32>
    %509 = arith.mulf %500, %503 : vector<1x256xf32>
    %510 = arith.addf %487, %509 : vector<1x256xf32>
    %c22_i32 = arith.constant 22 : i32
    %511 = arith.index_cast %c22_i32 : i32 to index
    %c0_134 = arith.constant 0 : index
    %c0_135 = arith.constant 0 : index
    %512 = vector.load %arg2[%511, %c0_134, %c0_135] : memref<32x8x256xbf16, #tpu.memory_space<vmem>>, vector<1x8x256xbf16>
    %513 = vector.shape_cast %512 : vector<1x8x256xbf16> to vector<8x256xbf16>
    %cst_136 = arith.constant dense<0.000000e+00> : vector<7x256xf32>
    %514 = tpu.matmul %3, %513, %cst_136 {dimension_numbers = #tpu.dot_dimension_numbers<[1], [0], [0], [1], [0, 0, 1, 1], [], []>} : vector<7x8xbf16>, vector<8x256xbf16>, vector<7x256xf32> -> vector<7x256xf32>
    %515 = vector.extract_strided_slice %514 {offsets = [1, 0], sizes = [3, 256], strides = [1, 1]} : vector<7x256xf32> to vector<3x256xf32>
    %516 = vector.extract_strided_slice %514 {offsets = [0, 0], sizes = [3, 256], strides = [1, 1]} : vector<7x256xf32> to vector<3x256xf32>
    %517 = vector.extract_strided_slice %514 {offsets = [4, 0], sizes = [3, 256], strides = [1, 1]} : vector<7x256xf32> to vector<3x256xf32>
    %518 = arith.mulf %515, %517 : vector<3x256xf32>
    %cst_137 = arith.constant dense<0.000000e+00> : vector<256xf32>
    %519 = vector.multi_reduction <add>, %518, %cst_137 [0] : vector<3x256xf32> to vector<256xf32>
    %520 = vector.shape_cast %519 : vector<256xf32> to vector<1x256xf32>
    %521 = arith.mulf %515, %515 : vector<3x256xf32>
    %cst_138 = arith.constant dense<0.000000e+00> : vector<256xf32>
    %522 = vector.multi_reduction <add>, %521, %cst_138 [0] : vector<3x256xf32> to vector<256xf32>
    %523 = vector.shape_cast %522 : vector<256xf32> to vector<1x256xf32>
    %524 = arith.mulf %516, %516 : vector<3x256xf32>
    %cst_139 = arith.constant dense<0.000000e+00> : vector<256xf32>
    %525 = vector.multi_reduction <add>, %524, %cst_139 [0] : vector<3x256xf32> to vector<256xf32>
    %526 = vector.shape_cast %525 : vector<256xf32> to vector<1x256xf32>
    %527 = arith.index_cast %c22_i32 : i32 to index
    %528 = memref.load %arg4[%527] : memref<32xf32, #tpu.memory_space<smem>>
    %529 = vector.broadcast %528 : f32 to vector<1x256xf32>
    %530 = arith.mulf %529, %520 : vector<1x256xf32>
    %531 = arith.addf %508, %530 : vector<1x256xf32>
    %532 = arith.mulf %523, %526 : vector<1x256xf32>
    %533 = arith.addf %510, %532 : vector<1x256xf32>
    %c23_i32 = arith.constant 23 : i32
    %534 = arith.index_cast %c23_i32 : i32 to index
    %c0_140 = arith.constant 0 : index
    %c0_141 = arith.constant 0 : index
    %535 = vector.load %arg2[%534, %c0_140, %c0_141] : memref<32x8x256xbf16, #tpu.memory_space<vmem>>, vector<1x8x256xbf16>
    %536 = vector.shape_cast %535 : vector<1x8x256xbf16> to vector<8x256xbf16>
    %cst_142 = arith.constant dense<0.000000e+00> : vector<7x256xf32>
    %537 = tpu.matmul %3, %536, %cst_142 {dimension_numbers = #tpu.dot_dimension_numbers<[1], [0], [0], [1], [0, 0, 1, 1], [], []>} : vector<7x8xbf16>, vector<8x256xbf16>, vector<7x256xf32> -> vector<7x256xf32>
    %538 = vector.extract_strided_slice %537 {offsets = [1, 0], sizes = [3, 256], strides = [1, 1]} : vector<7x256xf32> to vector<3x256xf32>
    %539 = vector.extract_strided_slice %537 {offsets = [0, 0], sizes = [3, 256], strides = [1, 1]} : vector<7x256xf32> to vector<3x256xf32>
    %540 = vector.extract_strided_slice %537 {offsets = [4, 0], sizes = [3, 256], strides = [1, 1]} : vector<7x256xf32> to vector<3x256xf32>
    %541 = arith.mulf %538, %540 : vector<3x256xf32>
    %cst_143 = arith.constant dense<0.000000e+00> : vector<256xf32>
    %542 = vector.multi_reduction <add>, %541, %cst_143 [0] : vector<3x256xf32> to vector<256xf32>
    %543 = vector.shape_cast %542 : vector<256xf32> to vector<1x256xf32>
    %544 = arith.mulf %538, %538 : vector<3x256xf32>
    %cst_144 = arith.constant dense<0.000000e+00> : vector<256xf32>
    %545 = vector.multi_reduction <add>, %544, %cst_144 [0] : vector<3x256xf32> to vector<256xf32>
    %546 = vector.shape_cast %545 : vector<256xf32> to vector<1x256xf32>
    %547 = arith.mulf %539, %539 : vector<3x256xf32>
    %cst_145 = arith.constant dense<0.000000e+00> : vector<256xf32>
    %548 = vector.multi_reduction <add>, %547, %cst_145 [0] : vector<3x256xf32> to vector<256xf32>
    %549 = vector.shape_cast %548 : vector<256xf32> to vector<1x256xf32>
    %550 = arith.index_cast %c23_i32 : i32 to index
    %551 = memref.load %arg4[%550] : memref<32xf32, #tpu.memory_space<smem>>
    %552 = vector.broadcast %551 : f32 to vector<1x256xf32>
    %553 = arith.mulf %552, %543 : vector<1x256xf32>
    %554 = arith.addf %531, %553 : vector<1x256xf32>
    %555 = arith.mulf %546, %549 : vector<1x256xf32>
    %556 = arith.addf %533, %555 : vector<1x256xf32>
    %c24_i32 = arith.constant 24 : i32
    %557 = arith.index_cast %c24_i32 : i32 to index
    %c0_146 = arith.constant 0 : index
    %c0_147 = arith.constant 0 : index
    %558 = vector.load %arg2[%557, %c0_146, %c0_147] : memref<32x8x256xbf16, #tpu.memory_space<vmem>>, vector<1x8x256xbf16>
    %559 = vector.shape_cast %558 : vector<1x8x256xbf16> to vector<8x256xbf16>
    %cst_148 = arith.constant dense<0.000000e+00> : vector<7x256xf32>
    %560 = tpu.matmul %3, %559, %cst_148 {dimension_numbers = #tpu.dot_dimension_numbers<[1], [0], [0], [1], [0, 0, 1, 1], [], []>} : vector<7x8xbf16>, vector<8x256xbf16>, vector<7x256xf32> -> vector<7x256xf32>
    %561 = vector.extract_strided_slice %560 {offsets = [1, 0], sizes = [3, 256], strides = [1, 1]} : vector<7x256xf32> to vector<3x256xf32>
    %562 = vector.extract_strided_slice %560 {offsets = [0, 0], sizes = [3, 256], strides = [1, 1]} : vector<7x256xf32> to vector<3x256xf32>
    %563 = vector.extract_strided_slice %560 {offsets = [4, 0], sizes = [3, 256], strides = [1, 1]} : vector<7x256xf32> to vector<3x256xf32>
    %564 = arith.mulf %561, %563 : vector<3x256xf32>
    %cst_149 = arith.constant dense<0.000000e+00> : vector<256xf32>
    %565 = vector.multi_reduction <add>, %564, %cst_149 [0] : vector<3x256xf32> to vector<256xf32>
    %566 = vector.shape_cast %565 : vector<256xf32> to vector<1x256xf32>
    %567 = arith.mulf %561, %561 : vector<3x256xf32>
    %cst_150 = arith.constant dense<0.000000e+00> : vector<256xf32>
    %568 = vector.multi_reduction <add>, %567, %cst_150 [0] : vector<3x256xf32> to vector<256xf32>
    %569 = vector.shape_cast %568 : vector<256xf32> to vector<1x256xf32>
    %570 = arith.mulf %562, %562 : vector<3x256xf32>
    %cst_151 = arith.constant dense<0.000000e+00> : vector<256xf32>
    %571 = vector.multi_reduction <add>, %570, %cst_151 [0] : vector<3x256xf32> to vector<256xf32>
    %572 = vector.shape_cast %571 : vector<256xf32> to vector<1x256xf32>
    %573 = arith.index_cast %c24_i32 : i32 to index
    %574 = memref.load %arg4[%573] : memref<32xf32, #tpu.memory_space<smem>>
    %575 = vector.broadcast %574 : f32 to vector<1x256xf32>
    %576 = arith.mulf %575, %566 : vector<1x256xf32>
    %577 = arith.addf %554, %576 : vector<1x256xf32>
    %578 = arith.mulf %569, %572 : vector<1x256xf32>
    %579 = arith.addf %556, %578 : vector<1x256xf32>
    %c25_i32 = arith.constant 25 : i32
    %580 = arith.index_cast %c25_i32 : i32 to index
    %c0_152 = arith.constant 0 : index
    %c0_153 = arith.constant 0 : index
    %581 = vector.load %arg2[%580, %c0_152, %c0_153] : memref<32x8x256xbf16, #tpu.memory_space<vmem>>, vector<1x8x256xbf16>
    %582 = vector.shape_cast %581 : vector<1x8x256xbf16> to vector<8x256xbf16>
    %cst_154 = arith.constant dense<0.000000e+00> : vector<7x256xf32>
    %583 = tpu.matmul %3, %582, %cst_154 {dimension_numbers = #tpu.dot_dimension_numbers<[1], [0], [0], [1], [0, 0, 1, 1], [], []>} : vector<7x8xbf16>, vector<8x256xbf16>, vector<7x256xf32> -> vector<7x256xf32>
    %584 = vector.extract_strided_slice %583 {offsets = [1, 0], sizes = [3, 256], strides = [1, 1]} : vector<7x256xf32> to vector<3x256xf32>
    %585 = vector.extract_strided_slice %583 {offsets = [0, 0], sizes = [3, 256], strides = [1, 1]} : vector<7x256xf32> to vector<3x256xf32>
    %586 = vector.extract_strided_slice %583 {offsets = [4, 0], sizes = [3, 256], strides = [1, 1]} : vector<7x256xf32> to vector<3x256xf32>
    %587 = arith.mulf %584, %586 : vector<3x256xf32>
    %cst_155 = arith.constant dense<0.000000e+00> : vector<256xf32>
    %588 = vector.multi_reduction <add>, %587, %cst_155 [0] : vector<3x256xf32> to vector<256xf32>
    %589 = vector.shape_cast %588 : vector<256xf32> to vector<1x256xf32>
    %590 = arith.mulf %584, %584 : vector<3x256xf32>
    %cst_156 = arith.constant dense<0.000000e+00> : vector<256xf32>
    %591 = vector.multi_reduction <add>, %590, %cst_156 [0] : vector<3x256xf32> to vector<256xf32>
    %592 = vector.shape_cast %591 : vector<256xf32> to vector<1x256xf32>
    %593 = arith.mulf %585, %585 : vector<3x256xf32>
    %cst_157 = arith.constant dense<0.000000e+00> : vector<256xf32>
    %594 = vector.multi_reduction <add>, %593, %cst_157 [0] : vector<3x256xf32> to vector<256xf32>
    %595 = vector.shape_cast %594 : vector<256xf32> to vector<1x256xf32>
    %596 = arith.index_cast %c25_i32 : i32 to index
    %597 = memref.load %arg4[%596] : memref<32xf32, #tpu.memory_space<smem>>
    %598 = vector.broadcast %597 : f32 to vector<1x256xf32>
    %599 = arith.mulf %598, %589 : vector<1x256xf32>
    %600 = arith.addf %577, %599 : vector<1x256xf32>
    %601 = arith.mulf %592, %595 : vector<1x256xf32>
    %602 = arith.addf %579, %601 : vector<1x256xf32>
    %c26_i32 = arith.constant 26 : i32
    %603 = arith.index_cast %c26_i32 : i32 to index
    %c0_158 = arith.constant 0 : index
    %c0_159 = arith.constant 0 : index
    %604 = vector.load %arg2[%603, %c0_158, %c0_159] : memref<32x8x256xbf16, #tpu.memory_space<vmem>>, vector<1x8x256xbf16>
    %605 = vector.shape_cast %604 : vector<1x8x256xbf16> to vector<8x256xbf16>
    %cst_160 = arith.constant dense<0.000000e+00> : vector<7x256xf32>
    %606 = tpu.matmul %3, %605, %cst_160 {dimension_numbers = #tpu.dot_dimension_numbers<[1], [0], [0], [1], [0, 0, 1, 1], [], []>} : vector<7x8xbf16>, vector<8x256xbf16>, vector<7x256xf32> -> vector<7x256xf32>
    %607 = vector.extract_strided_slice %606 {offsets = [1, 0], sizes = [3, 256], strides = [1, 1]} : vector<7x256xf32> to vector<3x256xf32>
    %608 = vector.extract_strided_slice %606 {offsets = [0, 0], sizes = [3, 256], strides = [1, 1]} : vector<7x256xf32> to vector<3x256xf32>
    %609 = vector.extract_strided_slice %606 {offsets = [4, 0], sizes = [3, 256], strides = [1, 1]} : vector<7x256xf32> to vector<3x256xf32>
    %610 = arith.mulf %607, %609 : vector<3x256xf32>
    %cst_161 = arith.constant dense<0.000000e+00> : vector<256xf32>
    %611 = vector.multi_reduction <add>, %610, %cst_161 [0] : vector<3x256xf32> to vector<256xf32>
    %612 = vector.shape_cast %611 : vector<256xf32> to vector<1x256xf32>
    %613 = arith.mulf %607, %607 : vector<3x256xf32>
    %cst_162 = arith.constant dense<0.000000e+00> : vector<256xf32>
    %614 = vector.multi_reduction <add>, %613, %cst_162 [0] : vector<3x256xf32> to vector<256xf32>
    %615 = vector.shape_cast %614 : vector<256xf32> to vector<1x256xf32>
    %616 = arith.mulf %608, %608 : vector<3x256xf32>
    %cst_163 = arith.constant dense<0.000000e+00> : vector<256xf32>
    %617 = vector.multi_reduction <add>, %616, %cst_163 [0] : vector<3x256xf32> to vector<256xf32>
    %618 = vector.shape_cast %617 : vector<256xf32> to vector<1x256xf32>
    %619 = arith.index_cast %c26_i32 : i32 to index
    %620 = memref.load %arg4[%619] : memref<32xf32, #tpu.memory_space<smem>>
    %621 = vector.broadcast %620 : f32 to vector<1x256xf32>
    %622 = arith.mulf %621, %612 : vector<1x256xf32>
    %623 = arith.addf %600, %622 : vector<1x256xf32>
    %624 = arith.mulf %615, %618 : vector<1x256xf32>
    %625 = arith.addf %602, %624 : vector<1x256xf32>
    %c27_i32 = arith.constant 27 : i32
    %626 = arith.index_cast %c27_i32 : i32 to index
    %c0_164 = arith.constant 0 : index
    %c0_165 = arith.constant 0 : index
    %627 = vector.load %arg2[%626, %c0_164, %c0_165] : memref<32x8x256xbf16, #tpu.memory_space<vmem>>, vector<1x8x256xbf16>
    %628 = vector.shape_cast %627 : vector<1x8x256xbf16> to vector<8x256xbf16>
    %cst_166 = arith.constant dense<0.000000e+00> : vector<7x256xf32>
    %629 = tpu.matmul %3, %628, %cst_166 {dimension_numbers = #tpu.dot_dimension_numbers<[1], [0], [0], [1], [0, 0, 1, 1], [], []>} : vector<7x8xbf16>, vector<8x256xbf16>, vector<7x256xf32> -> vector<7x256xf32>
    %630 = vector.extract_strided_slice %629 {offsets = [1, 0], sizes = [3, 256], strides = [1, 1]} : vector<7x256xf32> to vector<3x256xf32>
    %631 = vector.extract_strided_slice %629 {offsets = [0, 0], sizes = [3, 256], strides = [1, 1]} : vector<7x256xf32> to vector<3x256xf32>
    %632 = vector.extract_strided_slice %629 {offsets = [4, 0], sizes = [3, 256], strides = [1, 1]} : vector<7x256xf32> to vector<3x256xf32>
    %633 = arith.mulf %630, %632 : vector<3x256xf32>
    %cst_167 = arith.constant dense<0.000000e+00> : vector<256xf32>
    %634 = vector.multi_reduction <add>, %633, %cst_167 [0] : vector<3x256xf32> to vector<256xf32>
    %635 = vector.shape_cast %634 : vector<256xf32> to vector<1x256xf32>
    %636 = arith.mulf %630, %630 : vector<3x256xf32>
    %cst_168 = arith.constant dense<0.000000e+00> : vector<256xf32>
    %637 = vector.multi_reduction <add>, %636, %cst_168 [0] : vector<3x256xf32> to vector<256xf32>
    %638 = vector.shape_cast %637 : vector<256xf32> to vector<1x256xf32>
    %639 = arith.mulf %631, %631 : vector<3x256xf32>
    %cst_169 = arith.constant dense<0.000000e+00> : vector<256xf32>
    %640 = vector.multi_reduction <add>, %639, %cst_169 [0] : vector<3x256xf32> to vector<256xf32>
    %641 = vector.shape_cast %640 : vector<256xf32> to vector<1x256xf32>
    %642 = arith.index_cast %c27_i32 : i32 to index
    %643 = memref.load %arg4[%642] : memref<32xf32, #tpu.memory_space<smem>>
    %644 = vector.broadcast %643 : f32 to vector<1x256xf32>
    %645 = arith.mulf %644, %635 : vector<1x256xf32>
    %646 = arith.addf %623, %645 : vector<1x256xf32>
    %647 = arith.mulf %638, %641 : vector<1x256xf32>
    %648 = arith.addf %625, %647 : vector<1x256xf32>
    %c28_i32 = arith.constant 28 : i32
    %649 = arith.index_cast %c28_i32 : i32 to index
    %c0_170 = arith.constant 0 : index
    %c0_171 = arith.constant 0 : index
    %650 = vector.load %arg2[%649, %c0_170, %c0_171] : memref<32x8x256xbf16, #tpu.memory_space<vmem>>, vector<1x8x256xbf16>
    %651 = vector.shape_cast %650 : vector<1x8x256xbf16> to vector<8x256xbf16>
    %cst_172 = arith.constant dense<0.000000e+00> : vector<7x256xf32>
    %652 = tpu.matmul %3, %651, %cst_172 {dimension_numbers = #tpu.dot_dimension_numbers<[1], [0], [0], [1], [0, 0, 1, 1], [], []>} : vector<7x8xbf16>, vector<8x256xbf16>, vector<7x256xf32> -> vector<7x256xf32>
    %653 = vector.extract_strided_slice %652 {offsets = [1, 0], sizes = [3, 256], strides = [1, 1]} : vector<7x256xf32> to vector<3x256xf32>
    %654 = vector.extract_strided_slice %652 {offsets = [0, 0], sizes = [3, 256], strides = [1, 1]} : vector<7x256xf32> to vector<3x256xf32>
    %655 = vector.extract_strided_slice %652 {offsets = [4, 0], sizes = [3, 256], strides = [1, 1]} : vector<7x256xf32> to vector<3x256xf32>
    %656 = arith.mulf %653, %655 : vector<3x256xf32>
    %cst_173 = arith.constant dense<0.000000e+00> : vector<256xf32>
    %657 = vector.multi_reduction <add>, %656, %cst_173 [0] : vector<3x256xf32> to vector<256xf32>
    %658 = vector.shape_cast %657 : vector<256xf32> to vector<1x256xf32>
    %659 = arith.mulf %653, %653 : vector<3x256xf32>
    %cst_174 = arith.constant dense<0.000000e+00> : vector<256xf32>
    %660 = vector.multi_reduction <add>, %659, %cst_174 [0] : vector<3x256xf32> to vector<256xf32>
    %661 = vector.shape_cast %660 : vector<256xf32> to vector<1x256xf32>
    %662 = arith.mulf %654, %654 : vector<3x256xf32>
    %cst_175 = arith.constant dense<0.000000e+00> : vector<256xf32>
    %663 = vector.multi_reduction <add>, %662, %cst_175 [0] : vector<3x256xf32> to vector<256xf32>
    %664 = vector.shape_cast %663 : vector<256xf32> to vector<1x256xf32>
    %665 = arith.index_cast %c28_i32 : i32 to index
    %666 = memref.load %arg4[%665] : memref<32xf32, #tpu.memory_space<smem>>
    %667 = vector.broadcast %666 : f32 to vector<1x256xf32>
    %668 = arith.mulf %667, %658 : vector<1x256xf32>
    %669 = arith.addf %646, %668 : vector<1x256xf32>
    %670 = arith.mulf %661, %664 : vector<1x256xf32>
    %671 = arith.addf %648, %670 : vector<1x256xf32>
    %c29_i32 = arith.constant 29 : i32
    %672 = arith.index_cast %c29_i32 : i32 to index
    %c0_176 = arith.constant 0 : index
    %c0_177 = arith.constant 0 : index
    %673 = vector.load %arg2[%672, %c0_176, %c0_177] : memref<32x8x256xbf16, #tpu.memory_space<vmem>>, vector<1x8x256xbf16>
    %674 = vector.shape_cast %673 : vector<1x8x256xbf16> to vector<8x256xbf16>
    %cst_178 = arith.constant dense<0.000000e+00> : vector<7x256xf32>
    %675 = tpu.matmul %3, %674, %cst_178 {dimension_numbers = #tpu.dot_dimension_numbers<[1], [0], [0], [1], [0, 0, 1, 1], [], []>} : vector<7x8xbf16>, vector<8x256xbf16>, vector<7x256xf32> -> vector<7x256xf32>
    %676 = vector.extract_strided_slice %675 {offsets = [1, 0], sizes = [3, 256], strides = [1, 1]} : vector<7x256xf32> to vector<3x256xf32>
    %677 = vector.extract_strided_slice %675 {offsets = [0, 0], sizes = [3, 256], strides = [1, 1]} : vector<7x256xf32> to vector<3x256xf32>
    %678 = vector.extract_strided_slice %675 {offsets = [4, 0], sizes = [3, 256], strides = [1, 1]} : vector<7x256xf32> to vector<3x256xf32>
    %679 = arith.mulf %676, %678 : vector<3x256xf32>
    %cst_179 = arith.constant dense<0.000000e+00> : vector<256xf32>
    %680 = vector.multi_reduction <add>, %679, %cst_179 [0] : vector<3x256xf32> to vector<256xf32>
    %681 = vector.shape_cast %680 : vector<256xf32> to vector<1x256xf32>
    %682 = arith.mulf %676, %676 : vector<3x256xf32>
    %cst_180 = arith.constant dense<0.000000e+00> : vector<256xf32>
    %683 = vector.multi_reduction <add>, %682, %cst_180 [0] : vector<3x256xf32> to vector<256xf32>
    %684 = vector.shape_cast %683 : vector<256xf32> to vector<1x256xf32>
    %685 = arith.mulf %677, %677 : vector<3x256xf32>
    %cst_181 = arith.constant dense<0.000000e+00> : vector<256xf32>
    %686 = vector.multi_reduction <add>, %685, %cst_181 [0] : vector<3x256xf32> to vector<256xf32>
    %687 = vector.shape_cast %686 : vector<256xf32> to vector<1x256xf32>
    %688 = arith.index_cast %c29_i32 : i32 to index
    %689 = memref.load %arg4[%688] : memref<32xf32, #tpu.memory_space<smem>>
    %690 = vector.broadcast %689 : f32 to vector<1x256xf32>
    %691 = arith.mulf %690, %681 : vector<1x256xf32>
    %692 = arith.addf %669, %691 : vector<1x256xf32>
    %693 = arith.mulf %684, %687 : vector<1x256xf32>
    %694 = arith.addf %671, %693 : vector<1x256xf32>
    %c30_i32 = arith.constant 30 : i32
    %695 = arith.index_cast %c30_i32 : i32 to index
    %c0_182 = arith.constant 0 : index
    %c0_183 = arith.constant 0 : index
    %696 = vector.load %arg2[%695, %c0_182, %c0_183] : memref<32x8x256xbf16, #tpu.memory_space<vmem>>, vector<1x8x256xbf16>
    %697 = vector.shape_cast %696 : vector<1x8x256xbf16> to vector<8x256xbf16>
    %cst_184 = arith.constant dense<0.000000e+00> : vector<7x256xf32>
    %698 = tpu.matmul %3, %697, %cst_184 {dimension_numbers = #tpu.dot_dimension_numbers<[1], [0], [0], [1], [0, 0, 1, 1], [], []>} : vector<7x8xbf16>, vector<8x256xbf16>, vector<7x256xf32> -> vector<7x256xf32>
    %699 = vector.extract_strided_slice %698 {offsets = [1, 0], sizes = [3, 256], strides = [1, 1]} : vector<7x256xf32> to vector<3x256xf32>
    %700 = vector.extract_strided_slice %698 {offsets = [0, 0], sizes = [3, 256], strides = [1, 1]} : vector<7x256xf32> to vector<3x256xf32>
    %701 = vector.extract_strided_slice %698 {offsets = [4, 0], sizes = [3, 256], strides = [1, 1]} : vector<7x256xf32> to vector<3x256xf32>
    %702 = arith.mulf %699, %701 : vector<3x256xf32>
    %cst_185 = arith.constant dense<0.000000e+00> : vector<256xf32>
    %703 = vector.multi_reduction <add>, %702, %cst_185 [0] : vector<3x256xf32> to vector<256xf32>
    %704 = vector.shape_cast %703 : vector<256xf32> to vector<1x256xf32>
    %705 = arith.mulf %699, %699 : vector<3x256xf32>
    %cst_186 = arith.constant dense<0.000000e+00> : vector<256xf32>
    %706 = vector.multi_reduction <add>, %705, %cst_186 [0] : vector<3x256xf32> to vector<256xf32>
    %707 = vector.shape_cast %706 : vector<256xf32> to vector<1x256xf32>
    %708 = arith.mulf %700, %700 : vector<3x256xf32>
    %cst_187 = arith.constant dense<0.000000e+00> : vector<256xf32>
    %709 = vector.multi_reduction <add>, %708, %cst_187 [0] : vector<3x256xf32> to vector<256xf32>
    %710 = vector.shape_cast %709 : vector<256xf32> to vector<1x256xf32>
    %711 = arith.index_cast %c30_i32 : i32 to index
    %712 = memref.load %arg4[%711] : memref<32xf32, #tpu.memory_space<smem>>
    %713 = vector.broadcast %712 : f32 to vector<1x256xf32>
    %714 = arith.mulf %713, %704 : vector<1x256xf32>
    %715 = arith.addf %692, %714 : vector<1x256xf32>
    %716 = arith.mulf %707, %710 : vector<1x256xf32>
    %717 = arith.addf %694, %716 : vector<1x256xf32>
    %c31_i32 = arith.constant 31 : i32
    %718 = arith.index_cast %c31_i32 : i32 to index
    %c0_188 = arith.constant 0 : index
    %c0_189 = arith.constant 0 : index
    %719 = vector.load %arg2[%718, %c0_188, %c0_189] : memref<32x8x256xbf16, #tpu.memory_space<vmem>>, vector<1x8x256xbf16>
    %720 = vector.shape_cast %719 : vector<1x8x256xbf16> to vector<8x256xbf16>
    %cst_190 = arith.constant dense<0.000000e+00> : vector<7x256xf32>
    %721 = tpu.matmul %3, %720, %cst_190 {dimension_numbers = #tpu.dot_dimension_numbers<[1], [0], [0], [1], [0, 0, 1, 1], [], []>} : vector<7x8xbf16>, vector<8x256xbf16>, vector<7x256xf32> -> vector<7x256xf32>
    %722 = vector.extract_strided_slice %721 {offsets = [1, 0], sizes = [3, 256], strides = [1, 1]} : vector<7x256xf32> to vector<3x256xf32>
    %723 = vector.extract_strided_slice %721 {offsets = [0, 0], sizes = [3, 256], strides = [1, 1]} : vector<7x256xf32> to vector<3x256xf32>
    %724 = vector.extract_strided_slice %721 {offsets = [4, 0], sizes = [3, 256], strides = [1, 1]} : vector<7x256xf32> to vector<3x256xf32>
    %725 = arith.mulf %722, %724 : vector<3x256xf32>
    %cst_191 = arith.constant dense<0.000000e+00> : vector<256xf32>
    %726 = vector.multi_reduction <add>, %725, %cst_191 [0] : vector<3x256xf32> to vector<256xf32>
    %727 = vector.shape_cast %726 : vector<256xf32> to vector<1x256xf32>
    %728 = arith.mulf %722, %722 : vector<3x256xf32>
    %cst_192 = arith.constant dense<0.000000e+00> : vector<256xf32>
    %729 = vector.multi_reduction <add>, %728, %cst_192 [0] : vector<3x256xf32> to vector<256xf32>
    %730 = vector.shape_cast %729 : vector<256xf32> to vector<1x256xf32>
    %731 = arith.mulf %723, %723 : vector<3x256xf32>
    %cst_193 = arith.constant dense<0.000000e+00> : vector<256xf32>
    %732 = vector.multi_reduction <add>, %731, %cst_193 [0] : vector<3x256xf32> to vector<256xf32>
    %733 = vector.shape_cast %732 : vector<256xf32> to vector<1x256xf32>
    %734 = arith.index_cast %c31_i32 : i32 to index
    %735 = memref.load %arg4[%734] : memref<32xf32, #tpu.memory_space<smem>>
    %736 = vector.broadcast %735 : f32 to vector<1x256xf32>
    %737 = arith.mulf %736, %727 : vector<1x256xf32>
    %738 = arith.addf %715, %737 : vector<1x256xf32>
    %739 = arith.mulf %730, %733 : vector<1x256xf32>
    %740 = arith.addf %717, %739 : vector<1x256xf32>
    %c32_i32 = arith.constant 32 : i32
    %c0_194 = arith.constant 0 : index
    %c0_195 = arith.constant 0 : index
    %741 = vector.load %arg3[%c0_194, %c0_195] : memref<8x256xbf16, #tpu.memory_space<vmem>>, vector<8x256xbf16>
    %742 = arith.extf %741 : vector<8x256xbf16> to vector<8x256xf32>
    %cst_196 = arith.constant dense<0.000000e+00> : vector<256xf32>
    %743 = vector.multi_reduction <add>, %742, %cst_196 [0] : vector<8x256xf32> to vector<256xf32>
    %744 = vector.shape_cast %743 : vector<256xf32> to vector<1x256xf32>
    %745 = arith.mulf %742, %742 : vector<8x256xf32>
    %cst_197 = arith.constant dense<0.000000e+00> : vector<256xf32>
    %746 = vector.multi_reduction <add>, %745, %cst_197 [0] : vector<8x256xf32> to vector<256xf32>
    %747 = vector.shape_cast %746 : vector<256xf32> to vector<1x256xf32>
    %748 = vector.broadcast %0 : f32 to vector<1x256xf32>
    %749 = arith.addf %748, %744 : vector<1x256xf32>
    %750 = arith.addf %749, %738 : vector<1x256xf32>
    %c0_198 = arith.constant 0 : index
    %c0_199 = arith.constant 0 : index
    %751 = vector.load %arg6[%c0_198, %c0_199] : memref<1x256xf32, #tpu.memory_space<vmem>>, vector<1x256xf32>
    tpu.vector_store %arg6[%c0_198, %c0_199], %750 {strides = array<i32>} : memref<1x256xf32, #tpu.memory_space<vmem>>, vector<1x256xf32>,
    %752 = vector.broadcast %1 : f32 to vector<1x256xf32>
    %753 = arith.mulf %752, %747 : vector<1x256xf32>
    %754 = vector.broadcast %2 : f32 to vector<1x256xf32>
    %755 = arith.mulf %754, %740 : vector<1x256xf32>
    %756 = arith.addf %753, %755 : vector<1x256xf32>
    %c0_200 = arith.constant 0 : index
    %c0_201 = arith.constant 0 : index
    %757 = vector.load %arg7[%c0_200, %c0_201] : memref<1x256xf32, #tpu.memory_space<vmem>>, vector<1x256xf32>
    tpu.vector_store %arg7[%c0_200, %c0_201], %756 {strides = array<i32>} : memref<1x256xf32, #tpu.memory_space<vmem>>, vector<1x256xf32>,
    return
  }
  func.func @transform_0(%arg0: i32) -> (i32, i32) {
    %c0_i32 = arith.constant 0 : i32
    %c0_i32_0 = arith.constant 0 : i32
    %c0_i32_1 = arith.constant 0 : i32
    return %c0_i32, %c0_i32_0 : i32, i32
  }
  func.func @transform_1(%arg0: i32) -> (i32, i32, i32) {
    %c0_i32 = arith.constant 0 : i32
    %c0_i32_0 = arith.constant 0 : i32
    %c0_i32_1 = arith.constant 0 : i32
    return %c0_i32, %c0_i32_0, %arg0 : i32, i32, i32
  }
  func.func @transform_2(%arg0: i32) -> (i32, i32) {
    %c0_i32 = arith.constant 0 : i32
    %c0_i32_0 = arith.constant 0 : i32
    return %c0_i32, %arg0 : i32, i32
  }
  func.func @transform_3(%arg0: i32) -> i32 {
    %c0_i32 = arith.constant 0 : i32
    %c0_i32_0 = arith.constant 0 : i32
    return %c0_i32 : i32
  }
  func.func @transform_4(%arg0: i32) -> i32 {
    %c0_i32 = arith.constant 0 : i32
    %c0_i32_0 = arith.constant 0 : i32
    return %c0_i32 : i32
  }
  func.func @transform_5(%arg0: i32) -> (i32, i32) {
    %c0_i32 = arith.constant 0 : i32
    %c0_i32_0 = arith.constant 0 : i32
    return %c0_i32, %arg0 : i32, i32
  }
  func.func @transform_6(%arg0: i32) -> (i32, i32) {
    %c0_i32 = arith.constant 0 : i32
    %c0_i32_0 = arith.constant 0 : i32
    return %c0_i32, %arg0 : i32, i32
  }
}

</mosaic_0001>

<llo_original>
// kernel: tpu_custom_call.1
$region0: #{tpu_custom_call.1}
  #allocation0 [shape = 'u32[]', space=smem, size = 0x4, offset = 0x4, fixed_abs, tag = 'smem constant byte address 0x4 - core index']
  #allocation1 [shape = 'u32[144,128]{1,0:T(1,128)}', space=vmem, size = 0x12000, scoped, tag = 'internal scratch']
  %s0 = inlined_call_operand.hbm [shape: bf16[7,8], index: 0, kind: input, shape index: {}]
  %s1 = inlined_call_operand.hbm [shape: bf16[32,8,512], index: 1, kind: input, shape index: {}]
  %s2 = inlined_call_operand.hbm [shape: bf16[8,512], index: 2, kind: input, shape index: {}]
  %s3 = inlined_call_operand.vmem [shape: f32[32], index: 3, kind: input, shape index: {}]
  %s4 = inlined_call_operand.vmem [shape: f32[3], index: 4, kind: input, shape index: {}]
  %s5 = inlined_call_operand.hbm [shape: f32[1,512], index: 5, kind: output, shape index: {0}]
  %s6 = inlined_call_operand.hbm [shape: f32[1,512], index: 6, kind: output, shape index: {1}]
  %7 = xla_tuple %s5, %s6
  %s8 = sld [smem:[#allocation0]]
  $region81: #{tpu_custom_call.1} parent=0
    _
  %s10 = ssub.s32 1, %s8
  %s11 = scalar_select 0, %s10, %s8
  $region1: #{tpu_custom_call.1} parent=0
    #allocation2 [shape = 'u8[2048]{0}', space=vmem, size = 0x800, scoped, tag = 'input window, operand 0, single buffered']
    #allocation3 [shape = 's32[2]{0}', space=sflag, size = 0x8, scoped, tag = 'scoped memory for tpu_custom_call.1']
    #allocation4 [shape = 's32[2]{0}', space=sflag, size = 0x8, scoped, tag = 'scoped memory for tpu_custom_call.1']
    #allocation5 [shape = 's32[2]{0}', space=sflag, size = 0x8, scoped, tag = 'scoped memory for tpu_custom_call.1']
    #allocation6 [shape = 'u8[262144]{0}', space=vmem, size = 0x40000, scoped, tag = 'input window, operand 1']
    #allocation7 [shape = 's32[2]{0}', space=sflag, size = 0x8, scoped, tag = 'scoped memory for tpu_custom_call.1']
    #allocation8 [shape = 'u8[8192]{0}', space=vmem, size = 0x2000, scoped, tag = 'input window, operand 2']
    #allocation9 [shape = 'u8[512]{0}', space=smem, size = 0x200, scoped, tag = 'input window, operand 3, single buffered']
    #allocation10 [shape = 'u8[512]{0}', space=smem, size = 0x200, scoped, tag = 'input window, operand 4, single buffered']
    #allocation11 [shape = 's32[1]{0}', space=sflag, size = 0x4, scoped, tag = 'scoped memory for tpu_custom_call.1']
    #allocation12 [shape = 'u8[2048]{0}', space=vmem, size = 0x800, scoped, tag = 'output window, operand 0']
    #allocation13 [shape = 'u8[2048]{0}', space=vmem, size = 0x800, scoped, tag = 'output window, operand 1']
    #allocation14 [shape = 's32[2]{0}', space=sflag, size = 0x8, scoped, tag = 'scoped memory for tpu_custom_call.1']
    %12 = vsyncpa [#allocation3], 0
    %13 = vsyncpa [#allocation7], 0
    %s14 = scalar_lea.sflag [#allocation7], 1
    %15 = vsyncpa %s14, 0
    %16 = vsyncpa [#allocation5], 0
    %17 = vsyncpa [#allocation11], 0
    %18 = vsyncpa [#allocation4], 0
    %s19 = scalar_lea.sflag [#allocation4], 1
    %20 = vsyncpa %s19, 0
    %21 = vsyncpa [#allocation14], 0
    %s22 = scalar_lea.sflag [#allocation14], 1
    %23 = vsyncpa %s22, 0
    loop: start=0, step=1, limit=4
    $region2: #{tpu_custom_call.1} parent=1 // loop_pre_header
      _
    $region3: #{tpu_custom_call.1} parent=1 // loop_header
      %s25 = sphi 0, %s29
      %p26 = scmp.ge.s32.totalorder %s25, 4
      %s33 = sphi 0, %s33
      %s35 = sphi 0, %s33
      %s36 = sphi 0, %s35
      %s50 = sphi 0, %s36
      %s56 = sphi 0, %s58
      %s59 = sphi 0, %s56
      %s60 = sphi 0, %s59
      %s76 = sphi 0, %s60
      %s82 = sphi 0, %s84
      %s85 = sphi 0, %s82
      %s86 = sphi 0, %s85
      %s102 = sphi 0, %s86
      %s106 = sphi 0, %s106
      %s108 = sphi 0, %s106
      %s109 = sphi 0, %s108
      %s123 = sphi 0, %s109
      %s127 = sphi 0, %s127
      %s129 = sphi 0, %s127
      %s130 = sphi 0, %s129
      %s144 = sphi 0, %s130
      %s150 = sphi 0, %s152
      %s153 = sphi 0, %s150
      %s154 = sphi 0, %s153
      %s170 = sphi 0, %s154
      %s176 = sphi 0, %s178
      %s179 = sphi 0, %s176
      %s180 = sphi 0, %s179
      %s196 = sphi 0, %s180
    $region4: #{tpu_custom_call.1} parent=1 // loop_header_branch
      %28 = sbr.rel (%p26) target = $region8
    $region5: #{tpu_custom_call.1} parent=1 // loop_body
      %s30 = ssub.s32 %s25, 1
      %s31 = ssub.s32 %s25, 2
      %s32 = sadd.s32 %s25, 1
      %s34 = sadd.s32 %s33, 1
      %p37 = scmp.eq.s32.totalorder %s25, 1
      %p38 = scmp.ne.s32.totalorder %s33, %s35
      %p39 = scmp.eq.s32.totalorder %s25, 0
      %p40 = por %p38, %p39
      %p41 = scmp.ne.s32.totalorder %s33, %s35
      %p42 = scmp.eq.s32.totalorder %s30, 1
      %p43 = por %p41, %p42
      %p44 = scmp.ne.s32.totalorder %s35, %s36
      %p45 = scmp.eq.s32.totalorder %s30, 0
      %p46 = por %p44, %p45
      %p47 = scmp.ne.s32.totalorder %s35, %s36
      %p48 = scmp.eq.s32.totalorder %s31, 1
      %p49 = por %p47, %p48
      %p51 = scmp.ne.s32.totalorder %s36, %s50
      %p52 = scmp.eq.s32.totalorder %s31, 0
      %p53 = por %p51, %p52
      %s54 = ssub.s32 %s25, %s32
      %p55 = scmp.eq.s32.totalorder %s54, 0
      %s57 = sadd.s32 %s56, 1
      %s58 = scalar_select %p55, %s56, %s57
      %p61 = pneg %p55
      %p62 = scmp.eq.s32.totalorder %s25, 1
      %p63 = por %p61, %p62
      %p64 = scmp.ne.s32.totalorder %s56, %s59
      %p65 = scmp.eq.s32.totalorder %s25, 0
      %p66 = por %p64, %p65
      %p67 = scmp.ne.s32.totalorder %s56, %s59
      %p68 = scmp.eq.s32.totalorder %s30, 1
      %p69 = por %p67, %p68
      %p70 = scmp.ne.s32.totalorder %s59, %s60
      %p71 = scmp.eq.s32.totalorder %s30, 0
      %p72 = por %p70, %p71
      %p73 = scmp.ne.s32.totalorder %s59, %s60
      %p74 = scmp.eq.s32.totalorder %s31, 1
      %p75 = por %p73, %p74
      %p77 = scmp.ne.s32.totalorder %s60, %s76
      %p78 = scmp.eq.s32.totalorder %s31, 0
      %p79 = por %p77, %p78
      %s80 = ssub.s32 %s25, %s32
      %p81 = scmp.eq.s32.totalorder %s80, 0
      %s83 = sadd.s32 %s82, 1
      %s84 = scalar_select %p81, %s82, %s83
      %p87 = pneg %p81
      %p88 = scmp.eq.s32.totalorder %s25, 1
      %p89 = por %p87, %p88
      %p90 = scmp.ne.s32.totalorder %s82, %s85
      %p91 = scmp.eq.s32.totalorder %s25, 0
      %p92 = por %p90, %p91
      %p93 = scmp.ne.s32.totalorder %s82, %s85
      %p94 = scmp.eq.s32.totalorder %s30, 1
      %p95 = por %p93, %p94
      %p96 = scmp.ne.s32.totalorder %s85, %s86
      %p97 = scmp.eq.s32.totalorder %s30, 0
      %p98 = por %p96, %p97
      %p99 = scmp.ne.s32.totalorder %s85, %s86
      %p100 = scmp.eq.s32.totalorder %s31, 1
      %p101 = por %p99, %p100
      %p103 = scmp.ne.s32.totalorder %s86, %s102
      %p104 = scmp.eq.s32.totalorder %s31, 0
      %p105 = por %p103, %p104
      %s107 = sadd.s32 %s106, 1
      %p110 = scmp.eq.s32.totalorder %s25, 1
      %p111 = scmp.ne.s32.totalorder %s106, %s108
      %p112 = scmp.eq.s32.totalorder %s25, 0
      %p113 = por %p111, %p112
      %p114 = scmp.ne.s32.totalorder %s106, %s108
      %p115 = scmp.eq.s32.totalorder %s30, 1
      %p116 = por %p114, %p115
      %p117 = scmp.ne.s32.totalorder %s108, %s109
      %p118 = scmp.eq.s32.totalorder %s30, 0
      %p119 = por %p117, %p118
      %p120 = scmp.ne.s32.totalorder %s108, %s109
      %p121 = scmp.eq.s32.totalorder %s31, 1
      %p122 = por %p120, %p121
      %p124 = scmp.ne.s32.totalorder %s109, %s123
      %p125 = scmp.eq.s32.totalorder %s31, 0
      %p126 = por %p124, %p125
      %s128 = sadd.s32 %s127, 1
      %p131 = scmp.eq.s32.totalorder %s25, 1
      %p132 = scmp.ne.s32.totalorder %s127, %s129
      %p133 = scmp.eq.s32.totalorder %s25, 0
      %p134 = por %p132, %p133
      %p135 = scmp.ne.s32.totalorder %s127, %s129
      %p136 = scmp.eq.s32.totalorder %s30, 1
      %p137 = por %p135, %p136
      %p138 = scmp.ne.s32.totalorder %s129, %s130
      %p139 = scmp.eq.s32.totalorder %s30, 0
      %p140 = por %p138, %p139
      %p141 = scmp.ne.s32.totalorder %s129, %s130
      %p142 = scmp.eq.s32.totalorder %s31, 1
      %p143 = por %p141, %p142
      %p145 = scmp.ne.s32.totalorder %s130, %s144
      %p146 = scmp.eq.s32.totalorder %s31, 0
      %p147 = por %p145, %p146
      %s148 = ssub.s32 %s25, %s32
      %p149 = scmp.eq.s32.totalorder %s148, 0
      %s151 = sadd.s32 %s150, 1
      %s152 = scalar_select %p149, %s150, %s151
      %p155 = pneg %p149
      %p156 = scmp.eq.s32.totalorder %s25, 1
      %p157 = por %p155, %p156
      %p158 = scmp.ne.s32.totalorder %s150, %s153
      %p159 = scmp.eq.s32.totalorder %s25, 0
      %p160 = por %p158, %p159
      %p161 = scmp.ne.s32.totalorder %s150, %s153
      %p162 = scmp.eq.s32.totalorder %s30, 1
      %p163 = por %p161, %p162
      %p164 = scmp.ne.s32.totalorder %s153, %s154
      %p165 = scmp.eq.s32.totalorder %s30, 0
      %p166 = por %p164, %p165
      %p167 = scmp.ne.s32.totalorder %s153, %s154
      %p168 = scmp.eq.s32.totalorder %s31, 1
      %p169 = por %p167, %p168
      %p171 = scmp.ne.s32.totalorder %s154, %s170
      %p172 = scmp.eq.s32.totalorder %s31, 0
      %p173 = por %p171, %p172
      %s174 = ssub.s32 %s25, %s32
      %p175 = scmp.eq.s32.totalorder %s174, 0
      %s177 = sadd.s32 %s176, 1
      %s178 = scalar_select %p175, %s176, %s177
      %p181 = pneg %p175
      %p182 = scmp.eq.s32.totalorder %s25, 1
      %p183 = por %p181, %p182
      %p184 = scmp.ne.s32.totalorder %s176, %s179
      %p185 = scmp.eq.s32.totalorder %s25, 0
      %p186 = por %p184, %p185
      %p187 = scmp.ne.s32.totalorder %s176, %s179
      %p188 = scmp.eq.s32.totalorder %s30, 1
      %p189 = por %p187, %p188
      %p190 = scmp.ne.s32.totalorder %s179, %s180
      %p191 = scmp.eq.s32.totalorder %s30, 0
      %p192 = por %p190, %p191
      %p193 = scmp.ne.s32.totalorder %s179, %s180
      %p194 = scmp.eq.s32.totalorder %s31, 1
      %p195 = por %p193, %p194
      %p197 = scmp.ne.s32.totalorder %s180, %s196
      %p198 = scmp.eq.s32.totalorder %s31, 0
      %p199 = por %p197, %p198
      %p200 = scmp.le.s32.totalorder 1, %s25
      %p201 = scmp.lt.s32.totalorder %s25, 3
      %p202 = pnand %p200, %p201
      %p203 = pneg %p202
      // Predicated region
      $region9: #{tpu_custom_call.1} parent=5 // pred_check
        _
      $region10: #{tpu_custom_call.1} parent=5 // pred_check_branch
        %205 = sbr.rel (%p202) target = $region12
      $region11: #{tpu_custom_call.1} parent=5 // pred_region
        %s206 = ssub.s32 %s25, 1
        // Predicated region
        $region13: #{tpu_custom_call.1} parent=11 // pred_check
          %p207 = pneg %p46
        $region14: #{tpu_custom_call.1} parent=11 // pred_check_branch
          %209 = sbr.rel (%p207) target = $region16
        $region15: #{tpu_custom_call.1} parent=11 // pred_region
          %s211 = ssub.s32 64, 64
          %212 = vsyncadd [#allocation3], %s211
          %s214 = sshll.u32 [#allocation2], 4
          %s215 = int_to_ptr.vmem [resolvable:$true] %s214
          %217 = dma.hbm_to_vmem [thread:$0]  %s0, 64, %s215, [#allocation3]
        $region16: #{tpu_custom_call.1} parent=11 // pred_fallthru
          _
        // Predicated region
        $region17: #{tpu_custom_call.1} parent=11 // pred_check
          %p218 = pneg %p119
        $region18: #{tpu_custom_call.1} parent=11 // pred_check_branch
          %220 = sbr.rel (%p218) target = $region20
        $region19: #{tpu_custom_call.1} parent=11 // pred_region
          %s222 = ssub.s32 16, 16
          %223 = vsyncadd [#allocation5], %s222
          %s225 = sshll.u32 %s3, 4
          %s226 = int_to_ptr.vmem [resolvable:$true] %s225
          %228 = dma.vmem_to_smem %s226, 16, [#allocation9], [#allocation5]
        $region20: #{tpu_custom_call.1} parent=11 // pred_fallthru
          _
        // Predicated region
        $region21: #{tpu_custom_call.1} parent=11 // pred_check
          %p229 = pneg %p140
        $region22: #{tpu_custom_call.1} parent=11 // pred_check_branch
          %231 = sbr.rel (%p229) target = $region24
        $region23: #{tpu_custom_call.1} parent=11 // pred_region
          %s233 = ssub.s32 16, 16
          %234 = vsyncadd [#allocation11], %s233
          %s236 = sshll.u32 %s4, 4
          %s237 = int_to_ptr.vmem [resolvable:$true] %s236
          %239 = dma.vmem_to_smem %s237, 16, [#allocation10], [#allocation11]
        $region24: #{tpu_custom_call.1} parent=11 // pred_fallthru
          _
      $region12: #{tpu_custom_call.1} parent=5 // pred_fallthru
        _
      %p240 = scmp.lt.s32.totalorder %s25, 2
      // Predicated region
      $region25: #{tpu_custom_call.1} parent=5 // pred_check
        %p241 = pneg %p240
      $region26: #{tpu_custom_call.1} parent=5 // pred_check_branch
        %243 = sbr.rel (%p241) target = $region28
      $region27: #{tpu_custom_call.1} parent=5 // pred_region
        // Predicated region
        $region29: #{tpu_custom_call.1} parent=27 // pred_check
          %p244 = pneg %p66
        $region30: #{tpu_custom_call.1} parent=27 // pred_check_branch
          %246 = sbr.rel (%p244) target = $region32
        $region31: #{tpu_custom_call.1} parent=27 // pred_region
          %s247 = sand.u32 %s25, 1
          %s248 = scalar_lea.sflag [#allocation7], %s247
          %s249 = sand.u32 %s56, 1
          %s250 = smul.addr %s249, 256
          %s251 = scalar_lea.vmem [#allocation6], %s250
          %s252 = smul.u32 2, %s25
          %s254 = ssub.s32 4096, 4096
          %255 = vsyncadd %s248, %s254
          %s256 = smul.addr %s252, 64
          %s257 = scalar_lea.hbm %s1, %s256
          %s258 = sshll.u32 %s251, 4
          %s259 = int_to_ptr.vmem [resolvable:$true] %s258
          %264 = dma.hbm_to_vmem [thread:$0]  %s257, 4096, %s259, %s248, 256, 128, 8
        $region32: #{tpu_custom_call.1} parent=27 // pred_fallthru
          _
        // Predicated region
        $region33: #{tpu_custom_call.1} parent=27 // pred_check
          %p265 = pneg %p92
        $region34: #{tpu_custom_call.1} parent=27 // pred_check_branch
          %267 = sbr.rel (%p265) target = $region36
        $region35: #{tpu_custom_call.1} parent=27 // pred_region
          %s268 = sand.u32 %s25, 1
          %s269 = scalar_lea.sflag [#allocation7], %s268
          %s270 = sand.u32 %s82, 1
          %s271 = smul.addr %s270, 8
          %s272 = scalar_lea.vmem [#allocation8], %s271
          %s273 = smul.u32 2, %s25
          %s275 = ssub.s32 128, 128
          %276 = vsyncadd %s269, %s275
          %s277 = smul.addr %s273, 64
          %s278 = scalar_lea.hbm %s2, %s277
          %s280 = sshll.u32 %s272, 4
          %s281 = int_to_ptr.vmem [resolvable:$true] %s280
          %283 = dma.hbm_to_vmem [thread:$0]  %s278, 128, %s281, %s269
        $region36: #{tpu_custom_call.1} parent=27 // pred_fallthru
          _
      $region28: #{tpu_custom_call.1} parent=5 // pred_fallthru
        _
      %p284 = scmp.le.s32.totalorder 1, %s25
      %p285 = scmp.lt.s32.totalorder %s25, 3
      %p286 = pnand %p284, %p285
      %p287 = pneg %p286
      // Predicated region
      $region37: #{tpu_custom_call.1} parent=5 // pred_check
        _
      $region38: #{tpu_custom_call.1} parent=5 // pred_check_branch
        %289 = sbr.rel (%p286) target = $region40
      $region39: #{tpu_custom_call.1} parent=5 // pred_region
        %s290 = ssub.s32 %s25, 1
        // Predicated region
        $region41: #{tpu_custom_call.1} parent=39 // pred_check
          %p291 = pneg %p46
        $region42: #{tpu_custom_call.1} parent=39 // pred_check_branch
          %293 = sbr.rel (%p291) target = $region44
        $region43: #{tpu_custom_call.1} parent=39 // pred_region
          %294 = dma.done [#allocation3], 64
        $region44: #{tpu_custom_call.1} parent=39 // pred_fallthru
          _
        %s295 = sand.u32 %s30, 1
        %s296 = scalar_lea.sflag [#allocation7], %s295
        %s297 = sand.u32 %s59, 1
        %s298 = smul.addr %s297, 256
        %s299 = scalar_lea.vmem [#allocation6], %s298
        // Predicated region
        $region45: #{tpu_custom_call.1} parent=39 // pred_check
          %p300 = pneg %p72
        $region46: #{tpu_custom_call.1} parent=39 // pred_check_branch
          %302 = sbr.rel (%p300) target = $region48
        $region47: #{tpu_custom_call.1} parent=39 // pred_region
          %303 = dma.done %s296, 4096
        $region48: #{tpu_custom_call.1} parent=39 // pred_fallthru
          _
        %s304 = sand.u32 %s30, 1
        %s305 = scalar_lea.sflag [#allocation7], %s304
        %s306 = sand.u32 %s85, 1
        %s307 = smul.addr %s306, 8
        %s308 = scalar_lea.vmem [#allocation8], %s307
        // Predicated region
        $region49: #{tpu_custom_call.1} parent=39 // pred_check
          %p309 = pneg %p98
        $region50: #{tpu_custom_call.1} parent=39 // pred_check_branch
          %311 = sbr.rel (%p309) target = $region52
        $region51: #{tpu_custom_call.1} parent=39 // pred_region
          %312 = dma.done %s305, 128
        $region52: #{tpu_custom_call.1} parent=39 // pred_fallthru
          _
        // Predicated region
        $region53: #{tpu_custom_call.1} parent=39 // pred_check
          %p313 = pneg %p119
        $region54: #{tpu_custom_call.1} parent=39 // pred_check_branch
          %315 = sbr.rel (%p313) target = $region56
        $region55: #{tpu_custom_call.1} parent=39 // pred_region
          %316 = dma.done [#allocation5], 16
        $region56: #{tpu_custom_call.1} parent=39 // pred_fallthru
          _
        // Predicated region
        $region57: #{tpu_custom_call.1} parent=39 // pred_check
          %p317 = pneg %p140
        $region58: #{tpu_custom_call.1} parent=39 // pred_check_branch
          %319 = sbr.rel (%p317) target = $region60
        $region59: #{tpu_custom_call.1} parent=39 // pred_region
          %320 = dma.done [#allocation11], 16
        $region60: #{tpu_custom_call.1} parent=39 // pred_fallthru
          _
        %321 = sfence
        %p322 = pneg %p46
        %p323 = pneg %p43
        %s324 = sand.u32 %s30, 1
        %s325 = scalar_lea.sflag [#allocation7], %s324
        %s326 = sand.u32 %s59, 1
        %s327 = smul.addr %s326, 256
        %s328 = scalar_lea.vmem [#allocation6], %s327
        %p329 = pneg %p72
        %p330 = pneg %p69
        %s331 = sand.u32 %s30, 1
        %s332 = scalar_lea.sflag [#allocation7], %s331
        %s333 = sand.u32 %s85, 1
        %s334 = smul.addr %s333, 8
        %s335 = scalar_lea.vmem [#allocation8], %s334
        %p336 = pneg %p98
        %p337 = pneg %p95
        %p338 = pneg %p119
        %p339 = pneg %p116
        %p340 = pneg %p140
        %p341 = pneg %p137
        %p342 = pneg %p166
        %p343 = pneg %p163
        %s344 = sand.u32 %s153, 1
        %s345 = scalar_lea.sflag [#allocation4], %s344
        %s346 = sand.u32 %s153, 1
        %s347 = smul.addr %s346, 2
        %s348 = scalar_lea.vmem [#allocation12], %s347
        %p349 = pneg %p192
        %p350 = pneg %p189
        %s351 = sand.u32 %s179, 1
        %s352 = scalar_lea.sflag [#allocation14], %s351
        %s353 = sand.u32 %s179, 1
        %s354 = smul.addr %s353, 2
        %s355 = scalar_lea.vmem [#allocation13], %s354
        %s356 = smul.u32 2, %s30
        %s357 = smul.u32 2, %s30
        %s358 = smul.u32 2, %s30
        %s359 = smul.u32 2, %s30
        %s361 = sld [smem:[#allocation10]]
        %s362 = sld [smem:[#allocation10 + $0x1]]
        %s363 = sld [smem:[#allocation10 + $0x2]]
        %v364 = vld [vmem:[#allocation2] sm:$0xf]
        %v365 = vld [vmem:[%s299] sm:$0xff]
        %v367 = vunpack.c.l.b16 %v365
        %v368 = vunpack.c.h.b16 %v365
        %v369 = vpack.c.b16 %v367, %v367
        %v370 = vpack.c.b16 %v368, %v368
        %vm371 = vcmask 64512
        %v373 = vsel %vm371, %v364, 0
        %vm375 = vcmask 1043456
        %v377 = vsel %vm375, %v369, 0
        %v380 = vsel %vm375, %v370, 0
        %382 = vmatprep.subr.bf16.mxu0 %v380
        %383 = vmatpush1.bf16.msra.mxu0 %v377
        %384 = vmatprep.subr.bf16.mxu0 0
        %385 = vmatpush1.bf16.msra.mxu0 0
        %386 = vmatprep.subr.bf16.mxu0 0
        %387 = vmatpush1.bf16.msra.mxu0 0
        %388 = vmatprep.subr.bf16.mxu0 0
        %389 = vmatpush1.bf16.msra.mxu0 0
        %390 = vmatprep.subr.bf16.mxu0 0
        %391 = vmatpush1.bf16.msra.mxu0 0
        %392 = vmatprep.subr.bf16.mxu0 0
        %393 = vmatpush1.bf16.msra.mxu0 0
        %394 = vmatprep.subr.bf16.mxu0 0
        %395 = vmatpush1.bf16.msra.mxu0 0
        %396 = vmatprep.subr.bf16.mxu0 0
        %397 = vmatpush1.bf16.msra.mxu0 0
        %398 = vmatprep.subr.bf16.mxu0 0
        %399 = vmatpush1.bf16.msra.mxu0 0
        %400 = vmatprep.subr.bf16.mxu0 0
        %401 = vmatpush1.bf16.msra.mxu0 0
        %402 = vmatprep.subr.bf16.mxu0 0
        %403 = vmatpush1.bf16.msra.mxu0 0
        %404 = vmatprep.subr.bf16.mxu0 0
        %405 = vmatpush1.bf16.msra.mxu0 0
        %406 = vmatprep.subr.bf16.mxu0 0
        %407 = vmatpush1.bf16.msra.mxu0 0
        %408 = vmatprep.subr.bf16.mxu0 0
        %409 = vmatpush1.bf16.msra.mxu0 0
        %410 = vmatprep.subr.bf16.mxu0 0
        %411 = vmatpush1.bf16.msra.mxu0 0
        %412 = vmatprep.subr.bf16.mxu0 0
        %413 = vmatpush1.bf16.msra.mxu0 0
        %414 = vmatprep.mubr.bf16.mxu0 0
        %415 = vmatmul.mubr.bf16.gmra.mrb[0].mxu0 %v373
        %v416 = vpop.f32.mrb[0].mxu0
        %v417 = vadd.f32 0.0, %v416
        %v418 = vpop.f32.mrb[0].mxu0
        %v419 = vadd.f32 0.0, %v418
        %v420 = vpop.f32.mrb[0].mxu0
        %v421 = vpop.f32.mrb[0].mxu0
        %422 = vdwg.mxu0
        %v425 = vrot.slane %v417, 3
        %v426 = vrot.slane %v419, 3
        %v429 = vmul.f32 %v417, %v425
        %v430 = vmul.f32 %v419, %v426
        %v433 = vrot.slane %v429, 1
        %v434 = vrot.slane %v430, 1
        %vm437 = vcmask 1042432
        %v438 = vsel %vm437, %v433, 0.0
        %v439 = vrot.slane %v438, 4
        %v440 = vadd.f32 %v438, %v439
        %v441 = vrot.slane %v440, 2
        %v442 = vadd.f32 %v440, %v441
        %v443 = vrot.slane %v442, 1
        %v444 = vadd.f32 %v442, %v443
        %v445 = vsel %vm437, %v434, 0.0
        %v446 = vrot.slane %v445, 4
        %v447 = vadd.f32 %v445, %v446
        %v448 = vrot.slane %v447, 2
        %v449 = vadd.f32 %v447, %v448
        %v450 = vrot.slane %v449, 1
        %v451 = vadd.f32 %v449, %v450
        %v452 = vmul.f32 %v417, %v417
        %v453 = vmul.f32 %v419, %v419
        %v456 = vrot.slane %v452, 1
        %v457 = vrot.slane %v453, 1
        %v460 = vsel %vm437, %v456, 0.0
        %v461 = vrot.slane %v460, 4
        %v462 = vadd.f32 %v460, %v461
        %v463 = vrot.slane %v462, 2
        %v464 = vadd.f32 %v462, %v463
        %v465 = vrot.slane %v464, 1
        %v466 = vadd.f32 %v464, %v465
        %v467 = vsel %vm437, %v457, 0.0
        %v468 = vrot.slane %v467, 4
        %v469 = vadd.f32 %v467, %v468
        %v470 = vrot.slane %v469, 2
        %v471 = vadd.f32 %v469, %v470
        %v472 = vrot.slane %v471, 1
        %v473 = vadd.f32 %v471, %v472
        %v474 = vsel %vm437, %v452, 0.0
        %v475 = vrot.slane %v474, 4
        %v476 = vadd.f32 %v474, %v475
        %v477 = vrot.slane %v476, 2
        %v478 = vadd.f32 %v476, %v477
        %v479 = vrot.slane %v478, 1
        %v480 = vadd.f32 %v478, %v479
        %v481 = vsel %vm437, %v453, 0.0
        %v482 = vrot.slane %v481, 4
        %v483 = vadd.f32 %v481, %v482
        %v484 = vrot.slane %v483, 2
        %v485 = vadd.f32 %v483, %v484
        %v486 = vrot.slane %v485, 1
        %v487 = vadd.f32 %v485, %v486
        %s488 = sld [smem:[#allocation9]]
        %v489 = vstv %s488
        %v490 = vmul.f32 %v489, %v444
        %v491 = vmul.f32 %v489, %v451
        %v492 = vadd.f32 %v490, 0.0
        %v493 = vadd.f32 %v491, 0.0
        %v494 = vmul.f32 %v466, %v480
        %v495 = vmul.f32 %v473, %v487
        %v496 = vadd.f32 %v494, 0.0
        %v497 = vadd.f32 %v495, 0.0
        %s498 = scalar_lea.vmem %s299, 8 [#allocation6]
        %v499 = vld [vmem:[%s498] sm:$0xff]
        %v501 = vunpack.c.l.b16 %v499
        %v502 = vunpack.c.h.b16 %v499
        %v503 = vpack.c.b16 %v501, %v501
        %v504 = vpack.c.b16 %v502, %v502
        %v506 = vsel %vm375, %v503, 0
        %v509 = vsel %vm375, %v504, 0
        %511 = vmatprep.subr.bf16.mxu0 %v509
        %512 = vmatpush1.bf16.msra.mxu0 %v506
        %513 = vmatprep.subr.bf16.mxu0 0
        %514 = vmatpush1.bf16.msra.mxu0 0
        %515 = vmatprep.subr.bf16.mxu0 0
        %516 = vmatpush1.bf16.msra.mxu0 0
        %517 = vmatprep.subr.bf16.mxu0 0
        %518 = vmatpush1.bf16.msra.mxu0 0
        %519 = vmatprep.subr.bf16.mxu0 0
        %520 = vmatpush1.bf16.msra.mxu0 0
        %521 = vmatprep.subr.bf16.mxu0 0
        %522 = vmatpush1.bf16.msra.mxu0 0
        %523 = vmatprep.subr.bf16.mxu0 0
        %524 = vmatpush1.bf16.msra.mxu0 0
        %525 = vmatprep.subr.bf16.mxu0 0
        %526 = vmatpush1.bf16.msra.mxu0 0
        %527 = vmatprep.subr.bf16.mxu0 0
        %528 = vmatpush1.bf16.msra.mxu0 0
        %529 = vmatprep.subr.bf16.mxu0 0
        %530 = vmatpush1.bf16.msra.mxu0 0
        %531 = vmatprep.subr.bf16.mxu0 0
        %532 = vmatpush1.bf16.msra.mxu0 0
        %533 = vmatprep.subr.bf16.mxu0 0
        %534 = vmatpush1.bf16.msra.mxu0 0
        %535 = vmatprep.subr.bf16.mxu0 0
        %536 = vmatpush1.bf16.msra.mxu0 0
        %537 = vmatprep.subr.bf16.mxu0 0
        %538 = vmatpush1.bf16.msra.mxu0 0
        %539 = vmatprep.subr.bf16.mxu0 0
        %540 = vmatpush1.bf16.msra.mxu0 0
        %541 = vmatprep.subr.bf16.mxu0 0
        %542 = vmatpush1.bf16.msra.mxu0 0
        %543 = vmatprep.mubr.bf16.mxu0 0
        %544 = vmatmul.mubr.bf16.gmra.mrb[0].mxu0 %v373
        %v545 = vpop.f32.mrb[0].mxu0
        %v546 = vadd.f32 0.0, %v545
        %v547 = vpop.f32.mrb[0].mxu0
        %v548 = vadd.f32 0.0, %v547
        %v549 = vpop.f32.mrb[0].mxu0
        %v550 = vpop.f32.mrb[0].mxu0
        %551 = vdwg.mxu0
        %v554 = vrot.slane %v546, 3
        %v555 = vrot.slane %v548, 3
        %v558 = vmul.f32 %v546, %v554
        %v559 = vmul.f32 %v548, %v555
        %v562 = vrot.slane %v558, 1
        %v563 = vrot.slane %v559, 1
        %v566 = vsel %vm437, %v562, 0.0
        %v567 = vrot.slane %v566, 4
        %v568 = vadd.f32 %v566, %v567
        %v569 = vrot.slane %v568, 2
        %v570 = vadd.f32 %v568, %v569
        %v571 = vrot.slane %v570, 1
        %v572 = vadd.f32 %v570, %v571
        %v573 = vsel %vm437, %v563, 0.0
        %v574 = vrot.slane %v573, 4
        %v575 = vadd.f32 %v573, %v574
        %v576 = vrot.slane %v575, 2
        %v577 = vadd.f32 %v575, %v576
        %v578 = vrot.slane %v577, 1
        %v579 = vadd.f32 %v577, %v578
        %v580 = vmul.f32 %v546, %v546
        %v581 = vmul.f32 %v548, %v548
        %v584 = vrot.slane %v580, 1
        %v585 = vrot.slane %v581, 1
        %v588 = vsel %vm437, %v584, 0.0
        %v589 = vrot.slane %v588, 4
        %v590 = vadd.f32 %v588, %v589
        %v591 = vrot.slane %v590, 2
        %v592 = vadd.f32 %v590, %v591
        %v593 = vrot.slane %v592, 1
        %v594 = vadd.f32 %v592, %v593
        %v595 = vsel %vm437, %v585, 0.0
        %v596 = vrot.slane %v595, 4
        %v597 = vadd.f32 %v595, %v596
        %v598 = vrot.slane %v597, 2
        %v599 = vadd.f32 %v597, %v598
        %v600 = vrot.slane %v599, 1
        %v601 = vadd.f32 %v599, %v600
        %v602 = vsel %vm437, %v580, 0.0
        %v603 = vrot.slane %v602, 4
        %v604 = vadd.f32 %v602, %v603
        %v605 = vrot.slane %v604, 2
        %v606 = vadd.f32 %v604, %v605
        %v607 = vrot.slane %v606, 1
        %v608 = vadd.f32 %v606, %v607
        %v609 = vsel %vm437, %v581, 0.0
        %v610 = vrot.slane %v609, 4
        %v611 = vadd.f32 %v609, %v610
        %v612 = vrot.slane %v611, 2
        %v613 = vadd.f32 %v611, %v612
        %v614 = vrot.slane %v613, 1
        %v615 = vadd.f32 %v613, %v614
        %s616 = sld [smem:[#allocation9 + $0x1]]
        %v617 = vstv %s616
        %v618 = vmul.f32 %v617, %v572
        %v619 = vmul.f32 %v617, %v579
        %v620 = vadd.f32 %v492, %v618
        %v621 = vadd.f32 %v493, %v619
        %v622 = vmul.f32 %v594, %v608
        %v623 = vmul.f32 %v601, %v615
        %v624 = vadd.f32 %v496, %v622
        %v625 = vadd.f32 %v497, %v623
        %s626 = scalar_lea.vmem %s299, 16 [#allocation6]
        %v627 = vld [vmem:[%s626] sm:$0xff]
        %v629 = vunpack.c.l.b16 %v627
        %v630 = vunpack.c.h.b16 %v627
        %v631 = vpack.c.b16 %v629, %v629
        %v632 = vpack.c.b16 %v630, %v630
        %v634 = vsel %vm375, %v631, 0
        %v637 = vsel %vm375, %v632, 0
        %639 = vmatprep.subr.bf16.mxu0 %v637
        %640 = vmatpush1.bf16.msra.mxu0 %v634
        %641 = vmatprep.subr.bf16.mxu0 0
        %642 = vmatpush1.bf16.msra.mxu0 0
        %643 = vmatprep.subr.bf16.mxu0 0
        %644 = vmatpush1.bf16.msra.mxu0 0
        %645 = vmatprep.subr.bf16.mxu0 0
        %646 = vmatpush1.bf16.msra.mxu0 0
        %647 = vmatprep.subr.bf16.mxu0 0
        %648 = vmatpush1.bf16.msra.mxu0 0
        %649 = vmatprep.subr.bf16.mxu0 0
        %650 = vmatpush1.bf16.msra.mxu0 0
        %651 = vmatprep.subr.bf16.mxu0 0
        %652 = vmatpush1.bf16.msra.mxu0 0
        %653 = vmatprep.subr.bf16.mxu0 0
        %654 = vmatpush1.bf16.msra.mxu0 0
        %655 = vmatprep.subr.bf16.mxu0 0
        %656 = vmatpush1.bf16.msra.mxu0 0
        %657 = vmatprep.subr.bf16.mxu0 0
        %658 = vmatpush1.bf16.msra.mxu0 0
        %659 = vmatprep.subr.bf16.mxu0 0
        %660 = vmatpush1.bf16.msra.mxu0 0
        %661 = vmatprep.subr.bf16.mxu0 0
        %662 = vmatpush1.bf16.msra.mxu0 0
        %663 = vmatprep.subr.bf16.mxu0 0
        %664 = vmatpush1.bf16.msra.mxu0 0
        %665 = vmatprep.subr.bf16.mxu0 0
        %666 = vmatpush1.bf16.msra.mxu0 0
        %667 = vmatprep.subr.bf16.mxu0 0
        %668 = vmatpush1.bf16.msra.mxu0 0
        %669 = vmatprep.subr.bf16.mxu0 0
        %670 = vmatpush1.bf16.msra.mxu0 0
        %671 = vmatprep.mubr.bf16.mxu0 0
        %672 = vmatmul.mubr.bf16.gmra.mrb[0].mxu0 %v373
        %v673 = vpop.f32.mrb[0].mxu0
        %v674 = vadd.f32 0.0, %v673
        %v675 = vpop.f32.mrb[0].mxu0
        %v676 = vadd.f32 0.0, %v675
        %v677 = vpop.f32.mrb[0].mxu0
        %v678 = vpop.f32.mrb[0].mxu0
        %679 = vdwg.mxu0
        %v682 = vrot.slane %v674, 3
        %v683 = vrot.slane %v676, 3
        %v686 = vmul.f32 %v674, %v682
        %v687 = vmul.f32 %v676, %v683
        %v690 = vrot.slane %v686, 1
        %v691 = vrot.slane %v687, 1
        %v694 = vsel %vm437, %v690, 0.0
        %v695 = vrot.slane %v694, 4
        %v696 = vadd.f32 %v694, %v695
        %v697 = vrot.slane %v696, 2
        %v698 = vadd.f32 %v696, %v697
        %v699 = vrot.slane %v698, 1
        %v700 = vadd.f32 %v698, %v699
        %v701 = vsel %vm437, %v691, 0.0
        %v702 = vrot.slane %v701, 4
        %v703 = vadd.f32 %v701, %v702
        %v704 = vrot.slane %v703, 2
        %v705 = vadd.f32 %v703, %v704
        %v706 = vrot.slane %v705, 1
        %v707 = vadd.f32 %v705, %v706
        %v708 = vmul.f32 %v674, %v674
        %v709 = vmul.f32 %v676, %v676
        %v712 = vrot.slane %v708, 1
        %v713 = vrot.slane %v709, 1
        %v716 = vsel %vm437, %v712, 0.0
        %v717 = vrot.slane %v716, 4
        %v718 = vadd.f32 %v716, %v717
        %v719 = vrot.slane %v718, 2
        %v720 = vadd.f32 %v718, %v719
        %v721 = vrot.slane %v720, 1
        %v722 = vadd.f32 %v720, %v721
        %v723 = vsel %vm437, %v713, 0.0
        %v724 = vrot.slane %v723, 4
        %v725 = vadd.f32 %v723, %v724
        %v726 = vrot.slane %v725, 2
        %v727 = vadd.f32 %v725, %v726
        %v728 = vrot.slane %v727, 1
        %v729 = vadd.f32 %v727, %v728
        %v730 = vsel %vm437, %v708, 0.0
        %v731 = vrot.slane %v730, 4
        %v732 = vadd.f32 %v730, %v731
        %v733 = vrot.slane %v732, 2
        %v734 = vadd.f32 %v732, %v733
        %v735 = vrot.slane %v734, 1
        %v736 = vadd.f32 %v734, %v735
        %v737 = vsel %vm437, %v709, 0.0
        %v738 = vrot.slane %v737, 4
        %v739 = vadd.f32 %v737, %v738
        %v740 = vrot.slane %v739, 2
        %v741 = vadd.f32 %v739, %v740
        %v742 = vrot.slane %v741, 1
        %v743 = vadd.f32 %v741, %v742
        %s744 = sld [smem:[#allocation9 + $0x2]]
        %v745 = vstv %s744
        %v746 = vmul.f32 %v745, %v700
        %v747 = vmul.f32 %v745, %v707
        %v748 = vadd.f32 %v620, %v746
        %v749 = vadd.f32 %v621, %v747
        %v750 = vmul.f32 %v722, %v736
        %v751 = vmul.f32 %v729, %v743
        %v752 = vadd.f32 %v624, %v750
        %v753 = vadd.f32 %v625, %v751
        %s754 = scalar_lea.vmem %s299, 24 [#allocation6]
        %v755 = vld [vmem:[%s754] sm:$0xff]
        %v757 = vunpack.c.l.b16 %v755
        %v758 = vunpack.c.h.b16 %v755
        %v759 = vpack.c.b16 %v757, %v757
        %v760 = vpack.c.b16 %v758, %v758
        %v762 = vsel %vm375, %v759, 0
        %v765 = vsel %vm375, %v760, 0
        %767 = vmatprep.subr.bf16.mxu0 %v765
        %768 = vmatpush1.bf16.msra.mxu0 %v762
        %769 = vmatprep.subr.bf16.mxu0 0
        %770 = vmatpush1.bf16.msra.mxu0 0
        %771 = vmatprep.subr.bf16.mxu0 0
        %772 = vmatpush1.bf16.msra.mxu0 0
        %773 = vmatprep.subr.bf16.mxu0 0
        %774 = vmatpush1.bf16.msra.mxu0 0
        %775 = vmatprep.subr.bf16.mxu0 0
        %776 = vmatpush1.bf16.msra.mxu0 0
        %777 = vmatprep.subr.bf16.mxu0 0
        %778 = vmatpush1.bf16.msra.mxu0 0
        %779 = vmatprep.subr.bf16.mxu0 0
        %780 = vmatpush1.bf16.msra.mxu0 0
        %781 = vmatprep.subr.bf16.mxu0 0
        %782 = vmatpush1.bf16.msra.mxu0 0
        %783 = vmatprep.subr.bf16.mxu0 0
        %784 = vmatpush1.bf16.msra.mxu0 0
        %785 = vmatprep.subr.bf16.mxu0 0
        %786 = vmatpush1.bf16.msra.mxu0 0
        %787 = vmatprep.subr.bf16.mxu0 0
        %788 = vmatpush1.bf16.msra.mxu0 0
        %789 = vmatprep.subr.bf16.mxu0 0
        %790 = vmatpush1.bf16.msra.mxu0 0
        %791 = vmatprep.subr.bf16.mxu0 0
        %792 = vmatpush1.bf16.msra.mxu0 0
        %793 = vmatprep.subr.bf16.mxu0 0
        %794 = vmatpush1.bf16.msra.mxu0 0
        %795 = vmatprep.subr.bf16.mxu0 0
        %796 = vmatpush1.bf16.msra.mxu0 0
        %797 = vmatprep.subr.bf16.mxu0 0
        %798 = vmatpush1.bf16.msra.mxu0 0
        %799 = vmatprep.mubr.bf16.mxu0 0
        %800 = vmatmul.mubr.bf16.gmra.mrb[0].mxu0 %v373
        %v801 = vpop.f32.mrb[0].mxu0
        %v802 = vadd.f32 0.0, %v801
        %v803 = vpop.f32.mrb[0].mxu0
        %v804 = vadd.f32 0.0, %v803
        %v805 = vpop.f32.mrb[0].mxu0
        %v806 = vpop.f32.mrb[0].mxu0
        %807 = vdwg.mxu0
        %v810 = vrot.slane %v802, 3
        %v811 = vrot.slane %v804, 3
        %v814 = vmul.f32 %v802, %v810
        %v815 = vmul.f32 %v804, %v811
        %v818 = vrot.slane %v814, 1
        %v819 = vrot.slane %v815, 1
        %v822 = vsel %vm437, %v818, 0.0
        %v823 = vrot.slane %v822, 4
        %v824 = vadd.f32 %v822, %v823
        %v825 = vrot.slane %v824, 2
        %v826 = vadd.f32 %v824, %v825
        %v827 = vrot.slane %v826, 1
        %v828 = vadd.f32 %v826, %v827
        %v829 = vsel %vm437, %v819, 0.0
        %v830 = vrot.slane %v829, 4
        %v831 = vadd.f32 %v829, %v830
        %v832 = vrot.slane %v831, 2
        %v833 = vadd.f32 %v831, %v832
        %v834 = vrot.slane %v833, 1
        %v835 = vadd.f32 %v833, %v834
        %v836 = vmul.f32 %v802, %v802
        %v837 = vmul.f32 %v804, %v804
        %v840 = vrot.slane %v836, 1
        %v841 = vrot.slane %v837, 1
        %v844 = vsel %vm437, %v840, 0.0
        %v845 = vrot.slane %v844, 4
        %v846 = vadd.f32 %v844, %v845
        %v847 = vrot.slane %v846, 2
        %v848 = vadd.f32 %v846, %v847
        %v849 = vrot.slane %v848, 1
        %v850 = vadd.f32 %v848, %v849
        %v851 = vsel %vm437, %v841, 0.0
        %v852 = vrot.slane %v851, 4
        %v853 = vadd.f32 %v851, %v852
        %v854 = vrot.slane %v853, 2
        %v855 = vadd.f32 %v853, %v854
        %v856 = vrot.slane %v855, 1
        %v857 = vadd.f32 %v855, %v856
        %v858 = vsel %vm437, %v836, 0.0
        %v859 = vrot.slane %v858, 4
        %v860 = vadd.f32 %v858, %v859
        %v861 = vrot.slane %v860, 2
        %v862 = vadd.f32 %v860, %v861
        %v863 = vrot.slane %v862, 1
        %v864 = vadd.f32 %v862, %v863
        %v865 = vsel %vm437, %v837, 0.0
        %v866 = vrot.slane %v865, 4
        %v867 = vadd.f32 %v865, %v866
        %v868 = vrot.slane %v867, 2
        %v869 = vadd.f32 %v867, %v868
        %v870 = vrot.slane %v869, 1
        %v871 = vadd.f32 %v869, %v870
        %s872 = sld [smem:[#allocation9 + $0x3]]
        %v873 = vstv %s872
        %v874 = vmul.f32 %v873, %v828
        %v875 = vmul.f32 %v873, %v835
        %v876 = vadd.f32 %v748, %v874
        %v877 = vadd.f32 %v749, %v875
        %v878 = vmul.f32 %v850, %v864
        %v879 = vmul.f32 %v857, %v871
        %v880 = vadd.f32 %v752, %v878
        %v881 = vadd.f32 %v753, %v879
        %s882 = scalar_lea.vmem %s299, 32 [#allocation6]
        %v883 = vld [vmem:[%s882] sm:$0xff]
        %v885 = vunpack.c.l.b16 %v883
        %v886 = vunpack.c.h.b16 %v883
        %v887 = vpack.c.b16 %v885, %v885
        %v888 = vpack.c.b16 %v886, %v886
        %v890 = vsel %vm375, %v887, 0
        %v893 = vsel %vm375, %v888, 0
        %895 = vmatprep.subr.bf16.mxu0 %v893
        %896 = vmatpush1.bf16.msra.mxu0 %v890
        %897 = vmatprep.subr.bf16.mxu0 0
        %898 = vmatpush1.bf16.msra.mxu0 0
        %899 = vmatprep.subr.bf16.mxu0 0
        %900 = vmatpush1.bf16.msra.mxu0 0
        %901 = vmatprep.subr.bf16.mxu0 0
        %902 = vmatpush1.bf16.msra.mxu0 0
        %903 = vmatprep.subr.bf16.mxu0 0
        %904 = vmatpush1.bf16.msra.mxu0 0
        %905 = vmatprep.subr.bf16.mxu0 0
        %906 = vmatpush1.bf16.msra.mxu0 0
        %907 = vmatprep.subr.bf16.mxu0 0
        %908 = vmatpush1.bf16.msra.mxu0 0
        %909 = vmatprep.subr.bf16.mxu0 0
        %910 = vmatpush1.bf16.msra.mxu0 0
        %911 = vmatprep.subr.bf16.mxu0 0
        %912 = vmatpush1.bf16.msra.mxu0 0
        %913 = vmatprep.subr.bf16.mxu0 0
        %914 = vmatpush1.bf16.msra.mxu0 0
        %915 = vmatprep.subr.bf16.mxu0 0
        %916 = vmatpush1.bf16.msra.mxu0 0
        %917 = vmatprep.subr.bf16.mxu0 0
        %918 = vmatpush1.bf16.msra.mxu0 0
        %919 = vmatprep.subr.bf16.mxu0 0
        %920 = vmatpush1.bf16.msra.mxu0 0
        %921 = vmatprep.subr.bf16.mxu0 0
        %922 = vmatpush1.bf16.msra.mxu0 0
        %923 = vmatprep.subr.bf16.mxu0 0
        %924 = vmatpush1.bf16.msra.mxu0 0
        %925 = vmatprep.subr.bf16.mxu0 0
        %926 = vmatpush1.bf16.msra.mxu0 0
        %927 = vmatprep.mubr.bf16.mxu0 0
        %928 = vmatmul.mubr.bf16.gmra.mrb[0].mxu0 %v373
        %v929 = vpop.f32.mrb[0].mxu0
        %v930 = vadd.f32 0.0, %v929
        %v931 = vpop.f32.mrb[0].mxu0
        %v932 = vadd.f32 0.0, %v931
        %v933 = vpop.f32.mrb[0].mxu0
        %v934 = vpop.f32.mrb[0].mxu0
        %935 = vdwg.mxu0
        %v938 = vrot.slane %v930, 3
        %v939 = vrot.slane %v932, 3
        %v942 = vmul.f32 %v930, %v938
        %v943 = vmul.f32 %v932, %v939
        %v946 = vrot.slane %v942, 1
        %v947 = vrot.slane %v943, 1
        %v950 = vsel %vm437, %v946, 0.0
        %v951 = vrot.slane %v950, 4
        %v952 = vadd.f32 %v950, %v951
        %v953 = vrot.slane %v952, 2
        %v954 = vadd.f32 %v952, %v953
        %v955 = vrot.slane %v954, 1
        %v956 = vadd.f32 %v954, %v955
        %v957 = vsel %vm437, %v947, 0.0
        %v958 = vrot.slane %v957, 4
        %v959 = vadd.f32 %v957, %v958
        %v960 = vrot.slane %v959, 2
        %v961 = vadd.f32 %v959, %v960
        %v962 = vrot.slane %v961, 1
        %v963 = vadd.f32 %v961, %v962
        %v964 = vmul.f32 %v930, %v930
        %v965 = vmul.f32 %v932, %v932
        %v968 = vrot.slane %v964, 1
        %v969 = vrot.slane %v965, 1
        %v972 = vsel %vm437, %v968, 0.0
        %v973 = vrot.slane %v972, 4
        %v974 = vadd.f32 %v972, %v973
        %v975 = vrot.slane %v974, 2
        %v976 = vadd.f32 %v974, %v975
        %v977 = vrot.slane %v976, 1
        %v978 = vadd.f32 %v976, %v977
        %v979 = vsel %vm437, %v969, 0.0
        %v980 = vrot.slane %v979, 4
        %v981 = vadd.f32 %v979, %v980
        %v982 = vrot.slane %v981, 2
        %v983 = vadd.f32 %v981, %v982
        %v984 = vrot.slane %v983, 1
        %v985 = vadd.f32 %v983, %v984
        %v986 = vsel %vm437, %v964, 0.0
        %v987 = vrot.slane %v986, 4
        %v988 = vadd.f32 %v986, %v987
        %v989 = vrot.slane %v988, 2
        %v990 = vadd.f32 %v988, %v989
        %v991 = vrot.slane %v990, 1
        %v992 = vadd.f32 %v990, %v991
        %v993 = vsel %vm437, %v965, 0.0
        %v994 = vrot.slane %v993, 4
        %v995 = vadd.f32 %v993, %v994
        %v996 = vrot.slane %v995, 2
        %v997 = vadd.f32 %v995, %v996
        %v998 = vrot.slane %v997, 1
        %v999 = vadd.f32 %v997, %v998
        %s1000 = sld [smem:[#allocation9 + $0x4]]
        %v1001 = vstv %s1000
        %v1002 = vmul.f32 %v1001, %v956
        %v1003 = vmul.f32 %v1001, %v963
        %v1004 = vadd.f32 %v876, %v1002
        %v1005 = vadd.f32 %v877, %v1003
        %v1006 = vmul.f32 %v978, %v992
        %v1007 = vmul.f32 %v985, %v999
        %v1008 = vadd.f32 %v880, %v1006
        %v1009 = vadd.f32 %v881, %v1007
        %s1010 = scalar_lea.vmem %s299, 40 [#allocation6]
        %v1011 = vld [vmem:[%s1010] sm:$0xff]
        %v1013 = vunpack.c.l.b16 %v1011
        %v1014 = vunpack.c.h.b16 %v1011
        %v1015 = vpack.c.b16 %v1013, %v1013
        %v1016 = vpack.c.b16 %v1014, %v1014
        %v1018 = vsel %vm375, %v1015, 0
        %v1021 = vsel %vm375, %v1016, 0
        %1023 = vmatprep.subr.bf16.mxu0 %v1021
        %1024 = vmatpush1.bf16.msra.mxu0 %v1018
        %1025 = vmatprep.subr.bf16.mxu0 0
        %1026 = vmatpush1.bf16.msra.mxu0 0
        %1027 = vmatprep.subr.bf16.mxu0 0
        %1028 = vmatpush1.bf16.msra.mxu0 0
        %1029 = vmatprep.subr.bf16.mxu0 0
        %1030 = vmatpush1.bf16.msra.mxu0 0
        %1031 = vmatprep.subr.bf16.mxu0 0
        %1032 = vmatpush1.bf16.msra.mxu0 0
        %1033 = vmatprep.subr.bf16.mxu0 0
        %1034 = vmatpush1.bf16.msra.mxu0 0
        %1035 = vmatprep.subr.bf16.mxu0 0
        %1036 = vmatpush1.bf16.msra.mxu0 0
        %1037 = vmatprep.subr.bf16.mxu0 0
        %1038 = vmatpush1.bf16.msra.mxu0 0
        %1039 = vmatprep.subr.bf16.mxu0 0
        %1040 = vmatpush1.bf16.msra.mxu0 0
        %1041 = vmatprep.subr.bf16.mxu0 0
        %1042 = vmatpush1.bf16.msra.mxu0 0
        %1043 = vmatprep.subr.bf16.mxu0 0
        %1044 = vmatpush1.bf16.msra.mxu0 0
        %1045 = vmatprep.subr.bf16.mxu0 0
        %1046 = vmatpush1.bf16.msra.mxu0 0
        %1047 = vmatprep.subr.bf16.mxu0 0
        %1048 = vmatpush1.bf16.msra.mxu0 0
        %1049 = vmatprep.subr.bf16.mxu0 0
        %1050 = vmatpush1.bf16.msra.mxu0 0
        %1051 = vmatprep.subr.bf16.mxu0 0
        %1052 = vmatpush1.bf16.msra.mxu0 0
        %1053 = vmatprep.subr.bf16.mxu0 0
        %1054 = vmatpush1.bf16.msra.mxu0 0
        %1055 = vmatprep.mubr.bf16.mxu0 0
        %1056 = vmatmul.mubr.bf16.gmra.mrb[0].mxu0 %v373
        %v1057 = vpop.f32.mrb[0].mxu0
        %v1058 = vadd.f32 0.0, %v1057
        %v1059 = vpop.f32.mrb[0].mxu0
        %v1060 = vadd.f32 0.0, %v1059
        %v1061 = vpop.f32.mrb[0].mxu0
        %v1062 = vpop.f32.mrb[0].mxu0
        %1063 = vdwg.mxu0
        %v1066 = vrot.slane %v1058, 3
        %v1067 = vrot.slane %v1060, 3
        %v1070 = vmul.f32 %v1058, %v1066
        %v1071 = vmul.f32 %v1060, %v1067
        %v1074 = vrot.slane %v1070, 1
        %v1075 = vrot.slane %v1071, 1
        %v1078 = vsel %vm437, %v1074, 0.0
        %v1079 = vrot.slane %v1078, 4
        %v1080 = vadd.f32 %v1078, %v1079
        %v1081 = vrot.slane %v1080, 2
        %v1082 = vadd.f32 %v1080, %v1081
        %v1083 = vrot.slane %v1082, 1
        %v1084 = vadd.f32 %v1082, %v1083
        %v1085 = vsel %vm437, %v1075, 0.0
        %v1086 = vrot.slane %v1085, 4
        %v1087 = vadd.f32 %v1085, %v1086
        %v1088 = vrot.slane %v1087, 2
        %v1089 = vadd.f32 %v1087, %v1088
        %v1090 = vrot.slane %v1089, 1
        %v1091 = vadd.f32 %v1089, %v1090
        %v1092 = vmul.f32 %v1058, %v1058
        %v1093 = vmul.f32 %v1060, %v1060
        %v1096 = vrot.slane %v1092, 1
        %v1097 = vrot.slane %v1093, 1
        %v1100 = vsel %vm437, %v1096, 0.0
        %v1101 = vrot.slane %v1100, 4
        %v1102 = vadd.f32 %v1100, %v1101
        %v1103 = vrot.slane %v1102, 2
        %v1104 = vadd.f32 %v1102, %v1103
        %v1105 = vrot.slane %v1104, 1
        %v1106 = vadd.f32 %v1104, %v1105
        %v1107 = vsel %vm437, %v1097, 0.0
        %v1108 = vrot.slane %v1107, 4
        %v1109 = vadd.f32 %v1107, %v1108
        %v1110 = vrot.slane %v1109, 2
        %v1111 = vadd.f32 %v1109, %v1110
        %v1112 = vrot.slane %v1111, 1
        %v1113 = vadd.f32 %v1111, %v1112
        %v1114 = vsel %vm437, %v1092, 0.0
        %v1115 = vrot.slane %v1114, 4
        %v1116 = vadd.f32 %v1114, %v1115
        %v1117 = vrot.slane %v1116, 2
        %v1118 = vadd.f32 %v1116, %v1117
        %v1119 = vrot.slane %v1118, 1
        %v1120 = vadd.f32 %v1118, %v1119
        %v1121 = vsel %vm437, %v1093, 0.0
        %v1122 = vrot.slane %v1121, 4
        %v1123 = vadd.f32 %v1121, %v1122
        %v1124 = vrot.slane %v1123, 2
        %v1125 = vadd.f32 %v1123, %v1124
        %v1126 = vrot.slane %v1125, 1
        %v1127 = vadd.f32 %v1125, %v1126
        %s1128 = sld [smem:[#allocation9 + $0x5]]
        %v1129 = vstv %s1128
        %v1130 = vmul.f32 %v1129, %v1084
        %v1131 = vmul.f32 %v1129, %v1091
        %v1132 = vadd.f32 %v1004, %v1130
        %v1133 = vadd.f32 %v1005, %v1131
        %v1134 = vmul.f32 %v1106, %v1120
        %v1135 = vmul.f32 %v1113, %v1127
        %v1136 = vadd.f32 %v1008, %v1134
        %v1137 = vadd.f32 %v1009, %v1135
        %s1138 = scalar_lea.vmem %s299, 48 [#allocation6]
        %v1139 = vld [vmem:[%s1138] sm:$0xff]
        %v1141 = vunpack.c.l.b16 %v1139
        %v1142 = vunpack.c.h.b16 %v1139
        %v1143 = vpack.c.b16 %v1141, %v1141
        %v1144 = vpack.c.b16 %v1142, %v1142
        %v1146 = vsel %vm375, %v1143, 0
        %v1149 = vsel %vm375, %v1144, 0
        %1151 = vmatprep.subr.bf16.mxu0 %v1149
        %1152 = vmatpush1.bf16.msra.mxu0 %v1146
        %1153 = vmatprep.subr.bf16.mxu0 0
        %1154 = vmatpush1.bf16.msra.mxu0 0
        %1155 = vmatprep.subr.bf16.mxu0 0
        %1156 = vmatpush1.bf16.msra.mxu0 0
        %1157 = vmatprep.subr.bf16.mxu0 0
        %1158 = vmatpush1.bf16.msra.mxu0 0
        %1159 = vmatprep.subr.bf16.mxu0 0
        %1160 = vmatpush1.bf16.msra.mxu0 0
        %1161 = vmatprep.subr.bf16.mxu0 0
        %1162 = vmatpush1.bf16.msra.mxu0 0
        %1163 = vmatprep.subr.bf16.mxu0 0
        %1164 = vmatpush1.bf16.msra.mxu0 0
        %1165 = vmatprep.subr.bf16.mxu0 0
        %1166 = vmatpush1.bf16.msra.mxu0 0
        %1167 = vmatprep.subr.bf16.mxu0 0
        %1168 = vmatpush1.bf16.msra.mxu0 0
        %1169 = vmatprep.subr.bf16.mxu0 0
        %1170 = vmatpush1.bf16.msra.mxu0 0
        %1171 = vmatprep.subr.bf16.mxu0 0
        %1172 = vmatpush1.bf16.msra.mxu0 0
        %1173 = vmatprep.subr.bf16.mxu0 0
        %1174 = vmatpush1.bf16.msra.mxu0 0
        %1175 = vmatprep.subr.bf16.mxu0 0
        %1176 = vmatpush1.bf16.msra.mxu0 0
        %1177 = vmatprep.subr.bf16.mxu0 0
        %1178 = vmatpush1.bf16.msra.mxu0 0
        %1179 = vmatprep.subr.bf16.mxu0 0
        %1180 = vmatpush1.bf16.msra.mxu0 0
        %1181 = vmatprep.subr.bf16.mxu0 0
        %1182 = vmatpush1.bf16.msra.mxu0 0
        %1183 = vmatprep.mubr.bf16.mxu0 0
        %1184 = vmatmul.mubr.bf16.gmra.mrb[0].mxu0 %v373
        %v1185 = vpop.f32.mrb[0].mxu0
        %v1186 = vadd.f32 0.0, %v1185
        %v1187 = vpop.f32.mrb[0].mxu0
        %v1188 = vadd.f32 0.0, %v1187
        %v1189 = vpop.f32.mrb[0].mxu0
        %v1190 = vpop.f32.mrb[0].mxu0
        %1191 = vdwg.mxu0
        %v1194 = vrot.slane %v1186, 3
        %v1195 = vrot.slane %v1188, 3
        %v1198 = vmul.f32 %v1186, %v1194
        %v1199 = vmul.f32 %v1188, %v1195
        %v1202 = vrot.slane %v1198, 1
        %v1203 = vrot.slane %v1199, 1
        %v1206 = vsel %vm437, %v1202, 0.0
        %v1207 = vrot.slane %v1206, 4
        %v1208 = vadd.f32 %v1206, %v1207
        %v1209 = vrot.slane %v1208, 2
        %v1210 = vadd.f32 %v1208, %v1209
        %v1211 = vrot.slane %v1210, 1
        %v1212 = vadd.f32 %v1210, %v1211
        %v1213 = vsel %vm437, %v1203, 0.0
        %v1214 = vrot.slane %v1213, 4
        %v1215 = vadd.f32 %v1213, %v1214
        %v1216 = vrot.slane %v1215, 2
        %v1217 = vadd.f32 %v1215, %v1216
        %v1218 = vrot.slane %v1217, 1
        %v1219 = vadd.f32 %v1217, %v1218
        %v1220 = vmul.f32 %v1186, %v1186
        %v1221 = vmul.f32 %v1188, %v1188
        %v1224 = vrot.slane %v1220, 1
        %v1225 = vrot.slane %v1221, 1
        %v1228 = vsel %vm437, %v1224, 0.0
        %v1229 = vrot.slane %v1228, 4
        %v1230 = vadd.f32 %v1228, %v1229
        %v1231 = vrot.slane %v1230, 2
        %v1232 = vadd.f32 %v1230, %v1231
        %v1233 = vrot.slane %v1232, 1
        %v1234 = vadd.f32 %v1232, %v1233
        %v1235 = vsel %vm437, %v1225, 0.0
        %v1236 = vrot.slane %v1235, 4
        %v1237 = vadd.f32 %v1235, %v1236
        %v1238 = vrot.slane %v1237, 2
        %v1239 = vadd.f32 %v1237, %v1238
        %v1240 = vrot.slane %v1239, 1
        %v1241 = vadd.f32 %v1239, %v1240
        %v1242 = vsel %vm437, %v1220, 0.0
        %v1243 = vrot.slane %v1242, 4
        %v1244 = vadd.f32 %v1242, %v1243
        %v1245 = vrot.slane %v1244, 2
        %v1246 = vadd.f32 %v1244, %v1245
        %v1247 = vrot.slane %v1246, 1
        %v1248 = vadd.f32 %v1246, %v1247
        %v1249 = vsel %vm437, %v1221, 0.0
        %v1250 = vrot.slane %v1249, 4
        %v1251 = vadd.f32 %v1249, %v1250
        %v1252 = vrot.slane %v1251, 2
        %v1253 = vadd.f32 %v1251, %v1252
        %v1254 = vrot.slane %v1253, 1
        %v1255 = vadd.f32 %v1253, %v1254
        %s1256 = sld [smem:[#allocation9 + $0x6]]
        %v1257 = vstv %s1256
        %v1258 = vmul.f32 %v1257, %v1212
        %v1259 = vmul.f32 %v1257, %v1219
        %v1260 = vadd.f32 %v1132, %v1258
        %v1261 = vadd.f32 %v1133, %v1259
        %v1262 = vmul.f32 %v1234, %v1248
        %v1263 = vmul.f32 %v1241, %v1255
        %v1264 = vadd.f32 %v1136, %v1262
        %v1265 = vadd.f32 %v1137, %v1263
        %s1266 = scalar_lea.vmem %s299, 56 [#allocation6]
        %v1267 = vld [vmem:[%s1266] sm:$0xff]
        %v1269 = vunpack.c.l.b16 %v1267
        %v1270 = vunpack.c.h.b16 %v1267
        %v1271 = vpack.c.b16 %v1269, %v1269
        %v1272 = vpack.c.b16 %v1270, %v1270
        %v1274 = vsel %vm375, %v1271, 0
        %v1277 = vsel %vm375, %v1272, 0
        %1279 = vmatprep.subr.bf16.mxu0 %v1277
        %1280 = vmatpush1.bf16.msra.mxu0 %v1274
        %1281 = vmatprep.subr.bf16.mxu0 0
        %1282 = vmatpush1.bf16.msra.mxu0 0
        %1283 = vmatprep.subr.bf16.mxu0 0
        %1284 = vmatpush1.bf16.msra.mxu0 0
        %1285 = vmatprep.subr.bf16.mxu0 0
        %1286 = vmatpush1.bf16.msra.mxu0 0
        %1287 = vmatprep.subr.bf16.mxu0 0
        %1288 = vmatpush1.bf16.msra.mxu0 0
        %1289 = vmatprep.subr.bf16.mxu0 0
        %1290 = vmatpush1.bf16.msra.mxu0 0
        %1291 = vmatprep.subr.bf16.mxu0 0
        %1292 = vmatpush1.bf16.msra.mxu0 0
        %1293 = vmatprep.subr.bf16.mxu0 0
        %1294 = vmatpush1.bf16.msra.mxu0 0
        %1295 = vmatprep.subr.bf16.mxu0 0
        %1296 = vmatpush1.bf16.msra.mxu0 0
        %1297 = vmatprep.subr.bf16.mxu0 0
        %1298 = vmatpush1.bf16.msra.mxu0 0
        %1299 = vmatprep.subr.bf16.mxu0 0
        %1300 = vmatpush1.bf16.msra.mxu0 0
        %1301 = vmatprep.subr.bf16.mxu0 0
        %1302 = vmatpush1.bf16.msra.mxu0 0
        %1303 = vmatprep.subr.bf16.mxu0 0
        %1304 = vmatpush1.bf16.msra.mxu0 0
        %1305 = vmatprep.subr.bf16.mxu0 0
        %1306 = vmatpush1.bf16.msra.mxu0 0
        %1307 = vmatprep.subr.bf16.mxu0 0
        %1308 = vmatpush1.bf16.msra.mxu0 0
        %1309 = vmatprep.subr.bf16.mxu0 0
        %1310 = vmatpush1.bf16.msra.mxu0 0
        %1311 = vmatprep.mubr.bf16.mxu0 0
        %1312 = vmatmul.mubr.bf16.gmra.mrb[0].mxu0 %v373
        %v1313 = vpop.f32.mrb[0].mxu0
        %v1314 = vadd.f32 0.0, %v1313
        %v1315 = vpop.f32.mrb[0].mxu0
        %v1316 = vadd.f32 0.0, %v1315
        %v1317 = vpop.f32.mrb[0].mxu0
        %v1318 = vpop.f32.mrb[0].mxu0
        %1319 = vdwg.mxu0
        %v1322 = vrot.slane %v1314, 3
        %v1323 = vrot.slane %v1316, 3
        %v1326 = vmul.f32 %v1314, %v1322
        %v1327 = vmul.f32 %v1316, %v1323
        %v1330 = vrot.slane %v1326, 1
        %v1331 = vrot.slane %v1327, 1
        %v1334 = vsel %vm437, %v1330, 0.0
        %v1335 = vrot.slane %v1334, 4
        %v1336 = vadd.f32 %v1334, %v1335
        %v1337 = vrot.slane %v1336, 2
        %v1338 = vadd.f32 %v1336, %v1337
        %v1339 = vrot.slane %v1338, 1
        %v1340 = vadd.f32 %v1338, %v1339
        %v1341 = vsel %vm437, %v1331, 0.0
        %v1342 = vrot.slane %v1341, 4
        %v1343 = vadd.f32 %v1341, %v1342
        %v1344 = vrot.slane %v1343, 2
        %v1345 = vadd.f32 %v1343, %v1344
        %v1346 = vrot.slane %v1345, 1
        %v1347 = vadd.f32 %v1345, %v1346
        %v1348 = vmul.f32 %v1314, %v1314
        %v1349 = vmul.f32 %v1316, %v1316
        %v1352 = vrot.slane %v1348, 1
        %v1353 = vrot.slane %v1349, 1
        %v1356 = vsel %vm437, %v1352, 0.0
        %v1357 = vrot.slane %v1356, 4
        %v1358 = vadd.f32 %v1356, %v1357
        %v1359 = vrot.slane %v1358, 2
        %v1360 = vadd.f32 %v1358, %v1359
        %v1361 = vrot.slane %v1360, 1
        %v1362 = vadd.f32 %v1360, %v1361
        %v1363 = vsel %vm437, %v1353, 0.0
        %v1364 = vrot.slane %v1363, 4
        %v1365 = vadd.f32 %v1363, %v1364
        %v1366 = vrot.slane %v1365, 2
        %v1367 = vadd.f32 %v1365, %v1366
        %v1368 = vrot.slane %v1367, 1
        %v1369 = vadd.f32 %v1367, %v1368
        %v1370 = vsel %vm437, %v1348, 0.0
        %v1371 = vrot.slane %v1370, 4
        %v1372 = vadd.f32 %v1370, %v1371
        %v1373 = vrot.slane %v1372, 2
        %v1374 = vadd.f32 %v1372, %v1373
        %v1375 = vrot.slane %v1374, 1
        %v1376 = vadd.f32 %v1374, %v1375
        %v1377 = vsel %vm437, %v1349, 0.0
        %v1378 = vrot.slane %v1377, 4
        %v1379 = vadd.f32 %v1377, %v1378
        %v1380 = vrot.slane %v1379, 2
        %v1381 = vadd.f32 %v1379, %v1380
        %v1382 = vrot.slane %v1381, 1
        %v1383 = vadd.f32 %v1381, %v1382
        %s1384 = sld [smem:[#allocation9 + $0x7]]
        %v1385 = vstv %s1384
        %v1386 = vmul.f32 %v1385, %v1340
        %v1387 = vmul.f32 %v1385, %v1347
        %v1388 = vadd.f32 %v1260, %v1386
        %v1389 = vadd.f32 %v1261, %v1387
        %v1390 = vmul.f32 %v1362, %v1376
        %v1391 = vmul.f32 %v1369, %v1383
        %v1392 = vadd.f32 %v1264, %v1390
        %v1393 = vadd.f32 %v1265, %v1391
        %s1394 = scalar_lea.vmem %s299, 64 [#allocation6]
        %v1395 = vld [vmem:[%s1394] sm:$0xff]
        %v1397 = vunpack.c.l.b16 %v1395
        %v1398 = vunpack.c.h.b16 %v1395
        %v1399 = vpack.c.b16 %v1397, %v1397
        %v1400 = vpack.c.b16 %v1398, %v1398
        %v1402 = vsel %vm375, %v1399, 0
        %v1405 = vsel %vm375, %v1400, 0
        %1407 = vmatprep.subr.bf16.mxu0 %v1405
        %1408 = vmatpush1.bf16.msra.mxu0 %v1402
        %1409 = vmatprep.subr.bf16.mxu0 0
        %1410 = vmatpush1.bf16.msra.mxu0 0
        %1411 = vmatprep.subr.bf16.mxu0 0
        %1412 = vmatpush1.bf16.msra.mxu0 0
        %1413 = vmatprep.subr.bf16.mxu0 0
        %1414 = vmatpush1.bf16.msra.mxu0 0
        %1415 = vmatprep.subr.bf16.mxu0 0
        %1416 = vmatpush1.bf16.msra.mxu0 0
        %1417 = vmatprep.subr.bf16.mxu0 0
        %1418 = vmatpush1.bf16.msra.mxu0 0
        %1419 = vmatprep.subr.bf16.mxu0 0
        %1420 = vmatpush1.bf16.msra.mxu0 0
        %1421 = vmatprep.subr.bf16.mxu0 0
        %1422 = vmatpush1.bf16.msra.mxu0 0
        %1423 = vmatprep.subr.bf16.mxu0 0
        %1424 = vmatpush1.bf16.msra.mxu0 0
        %1425 = vmatprep.subr.bf16.mxu0 0
        %1426 = vmatpush1.bf16.msra.mxu0 0
        %1427 = vmatprep.subr.bf16.mxu0 0
        %1428 = vmatpush1.bf16.msra.mxu0 0
        %1429 = vmatprep.subr.bf16.mxu0 0
        %1430 = vmatpush1.bf16.msra.mxu0 0
        %1431 = vmatprep.subr.bf16.mxu0 0
        %1432 = vmatpush1.bf16.msra.mxu0 0
        %1433 = vmatprep.subr.bf16.mxu0 0
        %1434 = vmatpush1.bf16.msra.mxu0 0
        %1435 = vmatprep.subr.bf16.mxu0 0
        %1436 = vmatpush1.bf16.msra.mxu0 0
        %1437 = vmatprep.subr.bf16.mxu0 0
        %1438 = vmatpush1.bf16.msra.mxu0 0
        %1439 = vmatprep.mubr.bf16.mxu0 0
        %1440 = vmatmul.mubr.bf16.gmra.mrb[0].mxu0 %v373
        %v1441 = vpop.f32.mrb[0].mxu0
        %v1442 = vadd.f32 0.0, %v1441
        %v1443 = vpop.f32.mrb[0].mxu0
        %v1444 = vadd.f32 0.0, %v1443
        %v1445 = vpop.f32.mrb[0].mxu0
        %v1446 = vpop.f32.mrb[0].mxu0
        %1447 = vdwg.mxu0
        %v1450 = vrot.slane %v1442, 3
        %v1451 = vrot.slane %v1444, 3
        %v1454 = vmul.f32 %v1442, %v1450
        %v1455 = vmul.f32 %v1444, %v1451
        %v1458 = vrot.slane %v1454, 1
        %v1459 = vrot.slane %v1455, 1
        %v1462 = vsel %vm437, %v1458, 0.0
        %v1463 = vrot.slane %v1462, 4
        %v1464 = vadd.f32 %v1462, %v1463
        %v1465 = vrot.slane %v1464, 2
        %v1466 = vadd.f32 %v1464, %v1465
        %v1467 = vrot.slane %v1466, 1
        %v1468 = vadd.f32 %v1466, %v1467
        %v1469 = vsel %vm437, %v1459, 0.0
        %v1470 = vrot.slane %v1469, 4
        %v1471 = vadd.f32 %v1469, %v1470
        %v1472 = vrot.slane %v1471, 2
        %v1473 = vadd.f32 %v1471, %v1472
        %v1474 = vrot.slane %v1473, 1
        %v1475 = vadd.f32 %v1473, %v1474
        %v1476 = vmul.f32 %v1442, %v1442
        %v1477 = vmul.f32 %v1444, %v1444
        %v1480 = vrot.slane %v1476, 1
        %v1481 = vrot.slane %v1477, 1
        %v1484 = vsel %vm437, %v1480, 0.0
        %v1485 = vrot.slane %v1484, 4
        %v1486 = vadd.f32 %v1484, %v1485
        %v1487 = vrot.slane %v1486, 2
        %v1488 = vadd.f32 %v1486, %v1487
        %v1489 = vrot.slane %v1488, 1
        %v1490 = vadd.f32 %v1488, %v1489
        %v1491 = vsel %vm437, %v1481, 0.0
        %v1492 = vrot.slane %v1491, 4
        %v1493 = vadd.f32 %v1491, %v1492
        %v1494 = vrot.slane %v1493, 2
        %v1495 = vadd.f32 %v1493, %v1494
        %v1496 = vrot.slane %v1495, 1
        %v1497 = vadd.f32 %v1495, %v1496
        %v1498 = vsel %vm437, %v1476, 0.0
        %v1499 = vrot.slane %v1498, 4
        %v1500 = vadd.f32 %v1498, %v1499
        %v1501 = vrot.slane %v1500, 2
        %v1502 = vadd.f32 %v1500, %v1501
        %v1503 = vrot.slane %v1502, 1
        %v1504 = vadd.f32 %v1502, %v1503
        %v1505 = vsel %vm437, %v1477, 0.0
        %v1506 = vrot.slane %v1505, 4
        %v1507 = vadd.f32 %v1505, %v1506
        %v1508 = vrot.slane %v1507, 2
        %v1509 = vadd.f32 %v1507, %v1508
        %v1510 = vrot.slane %v1509, 1
        %v1511 = vadd.f32 %v1509, %v1510
        %s1512 = sld [smem:[#allocation9 + $0x8]]
        %v1513 = vstv %s1512
        %v1514 = vmul.f32 %v1513, %v1468
        %v1515 = vmul.f32 %v1513, %v1475
        %v1516 = vadd.f32 %v1388, %v1514
        %v1517 = vadd.f32 %v1389, %v1515
        %v1518 = vmul.f32 %v1490, %v1504
        %v1519 = vmul.f32 %v1497, %v1511
        %v1520 = vadd.f32 %v1392, %v1518
        %v1521 = vadd.f32 %v1393, %v1519
        %s1522 = scalar_lea.vmem %s299, 72 [#allocation6]
        %v1523 = vld [vmem:[%s1522] sm:$0xff]
        %v1525 = vunpack.c.l.b16 %v1523
        %v1526 = vunpack.c.h.b16 %v1523
        %v1527 = vpack.c.b16 %v1525, %v1525
        %v1528 = vpack.c.b16 %v1526, %v1526
        %v1530 = vsel %vm375, %v1527, 0
        %v1533 = vsel %vm375, %v1528, 0
        %1535 = vmatprep.subr.bf16.mxu0 %v1533
        %1536 = vmatpush1.bf16.msra.mxu0 %v1530
        %1537 = vmatprep.subr.bf16.mxu0 0
        %1538 = vmatpush1.bf16.msra.mxu0 0
        %1539 = vmatprep.subr.bf16.mxu0 0
        %1540 = vmatpush1.bf16.msra.mxu0 0
        %1541 = vmatprep.subr.bf16.mxu0 0
        %1542 = vmatpush1.bf16.msra.mxu0 0
        %1543 = vmatprep.subr.bf16.mxu0 0
        %1544 = vmatpush1.bf16.msra.mxu0 0
        %1545 = vmatprep.subr.bf16.mxu0 0
        %1546 = vmatpush1.bf16.msra.mxu0 0
        %1547 = vmatprep.subr.bf16.mxu0 0
        %1548 = vmatpush1.bf16.msra.mxu0 0
        %1549 = vmatprep.subr.bf16.mxu0 0
        %1550 = vmatpush1.bf16.msra.mxu0 0
        %1551 = vmatprep.subr.bf16.mxu0 0
        %1552 = vmatpush1.bf16.msra.mxu0 0
        %1553 = vmatprep.subr.bf16.mxu0 0
        %1554 = vmatpush1.bf16.msra.mxu0 0
        %1555 = vmatprep.subr.bf16.mxu0 0
        %1556 = vmatpush1.bf16.msra.mxu0 0
        %1557 = vmatprep.subr.bf16.mxu0 0
        %1558 = vmatpush1.bf16.msra.mxu0 0
        %1559 = vmatprep.subr.bf16.mxu0 0
        %1560 = vmatpush1.bf16.msra.mxu0 0
        %1561 = vmatprep.subr.bf16.mxu0 0
        %1562 = vmatpush1.bf16.msra.mxu0 0
        %1563 = vmatprep.subr.bf16.mxu0 0
        %1564 = vmatpush1.bf16.msra.mxu0 0
        %1565 = vmatprep.subr.bf16.mxu0 0
        %1566 = vmatpush1.bf16.msra.mxu0 0
        %1567 = vmatprep.mubr.bf16.mxu0 0
        %1568 = vmatmul.mubr.bf16.gmra.mrb[0].mxu0 %v373
        %v1569 = vpop.f32.mrb[0].mxu0
        %v1570 = vadd.f32 0.0, %v1569
        %v1571 = vpop.f32.mrb[0].mxu0
        %v1572 = vadd.f32 0.0, %v1571
        %v1573 = vpop.f32.mrb[0].mxu0
        %v1574 = vpop.f32.mrb[0].mxu0
        %1575 = vdwg.mxu0
        %v1578 = vrot.slane %v1570, 3
        %v1579 = vrot.slane %v1572, 3
        %v1582 = vmul.f32 %v1570, %v1578
        %v1583 = vmul.f32 %v1572, %v1579
        %v1586 = vrot.slane %v1582, 1
        %v1587 = vrot.slane %v1583, 1
        %v1590 = vsel %vm437, %v1586, 0.0
        %v1591 = vrot.slane %v1590, 4
        %v1592 = vadd.f32 %v1590, %v1591
        %v1593 = vrot.slane %v1592, 2
        %v1594 = vadd.f32 %v1592, %v1593
        %v1595 = vrot.slane %v1594, 1
        %v1596 = vadd.f32 %v1594, %v1595
        %v1597 = vsel %vm437, %v1587, 0.0
        %v1598 = vrot.slane %v1597, 4
        %v1599 = vadd.f32 %v1597, %v1598
        %v1600 = vrot.slane %v1599, 2
        %v1601 = vadd.f32 %v1599, %v1600
        %v1602 = vrot.slane %v1601, 1
        %v1603 = vadd.f32 %v1601, %v1602
        %v1604 = vmul.f32 %v1570, %v1570
        %v1605 = vmul.f32 %v1572, %v1572
        %v1608 = vrot.slane %v1604, 1
        %v1609 = vrot.slane %v1605, 1
        %v1612 = vsel %vm437, %v1608, 0.0
        %v1613 = vrot.slane %v1612, 4
        %v1614 = vadd.f32 %v1612, %v1613
        %v1615 = vrot.slane %v1614, 2
        %v1616 = vadd.f32 %v1614, %v1615
        %v1617 = vrot.slane %v1616, 1
        %v1618 = vadd.f32 %v1616, %v1617
        %v1619 = vsel %vm437, %v1609, 0.0
        %v1620 = vrot.slane %v1619, 4
        %v1621 = vadd.f32 %v1619, %v1620
        %v1622 = vrot.slane %v1621, 2
        %v1623 = vadd.f32 %v1621, %v1622
        %v1624 = vrot.slane %v1623, 1
        %v1625 = vadd.f32 %v1623, %v1624
        %v1626 = vsel %vm437, %v1604, 0.0
        %v1627 = vrot.slane %v1626, 4
        %v1628 = vadd.f32 %v1626, %v1627
        %v1629 = vrot.slane %v1628, 2
        %v1630 = vadd.f32 %v1628, %v1629
        %v1631 = vrot.slane %v1630, 1
        %v1632 = vadd.f32 %v1630, %v1631
        %v1633 = vsel %vm437, %v1605, 0.0
        %v1634 = vrot.slane %v1633, 4
        %v1635 = vadd.f32 %v1633, %v1634
        %v1636 = vrot.slane %v1635, 2
        %v1637 = vadd.f32 %v1635, %v1636
        %v1638 = vrot.slane %v1637, 1
        %v1639 = vadd.f32 %v1637, %v1638
        %s1640 = sld [smem:[#allocation9 + $0x9]]
        %v1641 = vstv %s1640
        %v1642 = vmul.f32 %v1641, %v1596
        %v1643 = vmul.f32 %v1641, %v1603
        %v1644 = vadd.f32 %v1516, %v1642
        %v1645 = vadd.f32 %v1517, %v1643
        %v1646 = vmul.f32 %v1618, %v1632
        %v1647 = vmul.f32 %v1625, %v1639
        %v1648 = vadd.f32 %v1520, %v1646
        %v1649 = vadd.f32 %v1521, %v1647
        %s1650 = scalar_lea.vmem %s299, 80 [#allocation6]
        %v1651 = vld [vmem:[%s1650] sm:$0xff]
        %v1653 = vunpack.c.l.b16 %v1651
        %v1654 = vunpack.c.h.b16 %v1651
        %v1655 = vpack.c.b16 %v1653, %v1653
        %v1656 = vpack.c.b16 %v1654, %v1654
        %v1658 = vsel %vm375, %v1655, 0
        %v1661 = vsel %vm375, %v1656, 0
        %1663 = vmatprep.subr.bf16.mxu0 %v1661
        %1664 = vmatpush1.bf16.msra.mxu0 %v1658
        %1665 = vmatprep.subr.bf16.mxu0 0
        %1666 = vmatpush1.bf16.msra.mxu0 0
        %1667 = vmatprep.subr.bf16.mxu0 0
        %1668 = vmatpush1.bf16.msra.mxu0 0
        %1669 = vmatprep.subr.bf16.mxu0 0
        %1670 = vmatpush1.bf16.msra.mxu0 0
        %1671 = vmatprep.subr.bf16.mxu0 0
        %1672 = vmatpush1.bf16.msra.mxu0 0
        %1673 = vmatprep.subr.bf16.mxu0 0
        %1674 = vmatpush1.bf16.msra.mxu0 0
        %1675 = vmatprep.subr.bf16.mxu0 0
        %1676 = vmatpush1.bf16.msra.mxu0 0
        %1677 = vmatprep.subr.bf16.mxu0 0
        %1678 = vmatpush1.bf16.msra.mxu0 0
        %1679 = vmatprep.subr.bf16.mxu0 0
        %1680 = vmatpush1.bf16.msra.mxu0 0
        %1681 = vmatprep.subr.bf16.mxu0 0
        %1682 = vmatpush1.bf16.msra.mxu0 0
        %1683 = vmatprep.subr.bf16.mxu0 0
        %1684 = vmatpush1.bf16.msra.mxu0 0
        %1685 = vmatprep.subr.bf16.mxu0 0
        %1686 = vmatpush1.bf16.msra.mxu0 0
        %1687 = vmatprep.subr.bf16.mxu0 0
        %1688 = vmatpush1.bf16.msra.mxu0 0
        %1689 = vmatprep.subr.bf16.mxu0 0
        %1690 = vmatpush1.bf16.msra.mxu0 0
        %1691 = vmatprep.subr.bf16.mxu0 0
        %1692 = vmatpush1.bf16.msra.mxu0 0
        %1693 = vmatprep.subr.bf16.mxu0 0
        %1694 = vmatpush1.bf16.msra.mxu0 0
        %1695 = vmatprep.mubr.bf16.mxu0 0
        %1696 = vmatmul.mubr.bf16.gmra.mrb[0].mxu0 %v373
        %v1697 = vpop.f32.mrb[0].mxu0
        %v1698 = vadd.f32 0.0, %v1697
        %v1699 = vpop.f32.mrb[0].mxu0
        %v1700 = vadd.f32 0.0, %v1699
        %v1701 = vpop.f32.mrb[0].mxu0
        %v1702 = vpop.f32.mrb[0].mxu0
        %1703 = vdwg.mxu0
        %v1706 = vrot.slane %v1698, 3
        %v1707 = vrot.slane %v1700, 3
        %v1710 = vmul.f32 %v1698, %v1706
        %v1711 = vmul.f32 %v1700, %v1707
        %v1714 = vrot.slane %v1710, 1
        %v1715 = vrot.slane %v1711, 1
        %v1718 = vsel %vm437, %v1714, 0.0
        %v1719 = vrot.slane %v1718, 4
        %v1720 = vadd.f32 %v1718, %v1719
        %v1721 = vrot.slane %v1720, 2
        %v1722 = vadd.f32 %v1720, %v1721
        %v1723 = vrot.slane %v1722, 1
        %v1724 = vadd.f32 %v1722, %v1723
        %v1725 = vsel %vm437, %v1715, 0.0
        %v1726 = vrot.slane %v1725, 4
        %v1727 = vadd.f32 %v1725, %v1726
        %v1728 = vrot.slane %v1727, 2
        %v1729 = vadd.f32 %v1727, %v1728
        %v1730 = vrot.slane %v1729, 1
        %v1731 = vadd.f32 %v1729, %v1730
        %v1732 = vmul.f32 %v1698, %v1698
        %v1733 = vmul.f32 %v1700, %v1700
        %v1736 = vrot.slane %v1732, 1
        %v1737 = vrot.slane %v1733, 1
        %v1740 = vsel %vm437, %v1736, 0.0
        %v1741 = vrot.slane %v1740, 4
        %v1742 = vadd.f32 %v1740, %v1741
        %v1743 = vrot.slane %v1742, 2
        %v1744 = vadd.f32 %v1742, %v1743
        %v1745 = vrot.slane %v1744, 1
        %v1746 = vadd.f32 %v1744, %v1745
        %v1747 = vsel %vm437, %v1737, 0.0
        %v1748 = vrot.slane %v1747, 4
        %v1749 = vadd.f32 %v1747, %v1748
        %v1750 = vrot.slane %v1749, 2
        %v1751 = vadd.f32 %v1749, %v1750
        %v1752 = vrot.slane %v1751, 1
        %v1753 = vadd.f32 %v1751, %v1752
        %v1754 = vsel %vm437, %v1732, 0.0
        %v1755 = vrot.slane %v1754, 4
        %v1756 = vadd.f32 %v1754, %v1755
        %v1757 = vrot.slane %v1756, 2
        %v1758 = vadd.f32 %v1756, %v1757
        %v1759 = vrot.slane %v1758, 1
        %v1760 = vadd.f32 %v1758, %v1759
        %v1761 = vsel %vm437, %v1733, 0.0
        %v1762 = vrot.slane %v1761, 4
        %v1763 = vadd.f32 %v1761, %v1762
        %v1764 = vrot.slane %v1763, 2
        %v1765 = vadd.f32 %v1763, %v1764
        %v1766 = vrot.slane %v1765, 1
        %v1767 = vadd.f32 %v1765, %v1766
        %s1768 = sld [smem:[#allocation9 + $0xa]]
        %v1769 = vstv %s1768
        %v1770 = vmul.f32 %v1769, %v1724
        %v1771 = vmul.f32 %v1769, %v1731
        %v1772 = vadd.f32 %v1644, %v1770
        %v1773 = vadd.f32 %v1645, %v1771
        %v1774 = vmul.f32 %v1746, %v1760
        %v1775 = vmul.f32 %v1753, %v1767
        %v1776 = vadd.f32 %v1648, %v1774
        %v1777 = vadd.f32 %v1649, %v1775
        %s1778 = scalar_lea.vmem %s299, 88 [#allocation6]
        %v1779 = vld [vmem:[%s1778] sm:$0xff]
        %v1781 = vunpack.c.l.b16 %v1779
        %v1782 = vunpack.c.h.b16 %v1779
        %v1783 = vpack.c.b16 %v1781, %v1781
        %v1784 = vpack.c.b16 %v1782, %v1782
        %v1786 = vsel %vm375, %v1783, 0
        %v1789 = vsel %vm375, %v1784, 0
        %1791 = vmatprep.subr.bf16.mxu0 %v1789
        %1792 = vmatpush1.bf16.msra.mxu0 %v1786
        %1793 = vmatprep.subr.bf16.mxu0 0
        %1794 = vmatpush1.bf16.msra.mxu0 0
        %1795 = vmatprep.subr.bf16.mxu0 0
        %1796 = vmatpush1.bf16.msra.mxu0 0
        %1797 = vmatprep.subr.bf16.mxu0 0
        %1798 = vmatpush1.bf16.msra.mxu0 0
        %1799 = vmatprep.subr.bf16.mxu0 0
        %1800 = vmatpush1.bf16.msra.mxu0 0
        %1801 = vmatprep.subr.bf16.mxu0 0
        %1802 = vmatpush1.bf16.msra.mxu0 0
        %1803 = vmatprep.subr.bf16.mxu0 0
        %1804 = vmatpush1.bf16.msra.mxu0 0
        %1805 = vmatprep.subr.bf16.mxu0 0
        %1806 = vmatpush1.bf16.msra.mxu0 0
        %1807 = vmatprep.subr.bf16.mxu0 0
        %1808 = vmatpush1.bf16.msra.mxu0 0
        %1809 = vmatprep.subr.bf16.mxu0 0
        %1810 = vmatpush1.bf16.msra.mxu0 0
        %1811 = vmatprep.subr.bf16.mxu0 0
        %1812 = vmatpush1.bf16.msra.mxu0 0
        %1813 = vmatprep.subr.bf16.mxu0 0
        %1814 = vmatpush1.bf16.msra.mxu0 0
        %1815 = vmatprep.subr.bf16.mxu0 0
        %1816 = vmatpush1.bf16.msra.mxu0 0
        %1817 = vmatprep.subr.bf16.mxu0 0
        %1818 = vmatpush1.bf16.msra.mxu0 0
        %1819 = vmatprep.subr.bf16.mxu0 0
        %1820 = vmatpush1.bf16.msra.mxu0 0
        %1821 = vmatprep.subr.bf16.mxu0 0
        %1822 = vmatpush1.bf16.msra.mxu0 0
        %1823 = vmatprep.mubr.bf16.mxu0 0
        %1824 = vmatmul.mubr.bf16.gmra.mrb[0].mxu0 %v373
        %v1825 = vpop.f32.mrb[0].mxu0
        %v1826 = vadd.f32 0.0, %v1825
        %v1827 = vpop.f32.mrb[0].mxu0
        %v1828 = vadd.f32 0.0, %v1827
        %v1829 = vpop.f32.mrb[0].mxu0
        %v1830 = vpop.f32.mrb[0].mxu0
        %1831 = vdwg.mxu0
        %v1834 = vrot.slane %v1826, 3
        %v1835 = vrot.slane %v1828, 3
        %v1838 = vmul.f32 %v1826, %v1834
        %v1839 = vmul.f32 %v1828, %v1835
        %v1842 = vrot.slane %v1838, 1
        %v1843 = vrot.slane %v1839, 1
        %v1846 = vsel %vm437, %v1842, 0.0
        %v1847 = vrot.slane %v1846, 4
        %v1848 = vadd.f32 %v1846, %v1847
        %v1849 = vrot.slane %v1848, 2
        %v1850 = vadd.f32 %v1848, %v1849
        %v1851 = vrot.slane %v1850, 1
        %v1852 = vadd.f32 %v1850, %v1851
        %v1853 = vsel %vm437, %v1843, 0.0
        %v1854 = vrot.slane %v1853, 4
        %v1855 = vadd.f32 %v1853, %v1854
        %v1856 = vrot.slane %v1855, 2
        %v1857 = vadd.f32 %v1855, %v1856
        %v1858 = vrot.slane %v1857, 1
        %v1859 = vadd.f32 %v1857, %v1858
        %v1860 = vmul.f32 %v1826, %v1826
        %v1861 = vmul.f32 %v1828, %v1828
        %v1864 = vrot.slane %v1860, 1
        %v1865 = vrot.slane %v1861, 1
        %v1868 = vsel %vm437, %v1864, 0.0
        %v1869 = vrot.slane %v1868, 4
        %v1870 = vadd.f32 %v1868, %v1869
        %v1871 = vrot.slane %v1870, 2
        %v1872 = vadd.f32 %v1870, %v1871
        %v1873 = vrot.slane %v1872, 1
        %v1874 = vadd.f32 %v1872, %v1873
        %v1875 = vsel %vm437, %v1865, 0.0
        %v1876 = vrot.slane %v1875, 4
        %v1877 = vadd.f32 %v1875, %v1876
        %v1878 = vrot.slane %v1877, 2
        %v1879 = vadd.f32 %v1877, %v1878
        %v1880 = vrot.slane %v1879, 1
        %v1881 = vadd.f32 %v1879, %v1880
        %v1882 = vsel %vm437, %v1860, 0.0
        %v1883 = vrot.slane %v1882, 4
        %v1884 = vadd.f32 %v1882, %v1883
        %v1885 = vrot.slane %v1884, 2
        %v1886 = vadd.f32 %v1884, %v1885
        %v1887 = vrot.slane %v1886, 1
        %v1888 = vadd.f32 %v1886, %v1887
        %v1889 = vsel %vm437, %v1861, 0.0
        %v1890 = vrot.slane %v1889, 4
        %v1891 = vadd.f32 %v1889, %v1890
        %v1892 = vrot.slane %v1891, 2
        %v1893 = vadd.f32 %v1891, %v1892
        %v1894 = vrot.slane %v1893, 1
        %v1895 = vadd.f32 %v1893, %v1894
        %s1896 = sld [smem:[#allocation9 + $0xb]]
        %v1897 = vstv %s1896
        %v1898 = vmul.f32 %v1897, %v1852
        %v1899 = vmul.f32 %v1897, %v1859
        %v1900 = vadd.f32 %v1772, %v1898
        %v1901 = vadd.f32 %v1773, %v1899
        %v1902 = vmul.f32 %v1874, %v1888
        %v1903 = vmul.f32 %v1881, %v1895
        %v1904 = vadd.f32 %v1776, %v1902
        %v1905 = vadd.f32 %v1777, %v1903
        %s1906 = scalar_lea.vmem %s299, 96 [#allocation6]
        %v1907 = vld [vmem:[%s1906] sm:$0xff]
        %v1909 = vunpack.c.l.b16 %v1907
        %v1910 = vunpack.c.h.b16 %v1907
        %v1911 = vpack.c.b16 %v1909, %v1909
        %v1912 = vpack.c.b16 %v1910, %v1910
        %v1914 = vsel %vm375, %v1911, 0
        %v1917 = vsel %vm375, %v1912, 0
        %1919 = vmatprep.subr.bf16.mxu0 %v1917
        %1920 = vmatpush1.bf16.msra.mxu0 %v1914
        %1921 = vmatprep.subr.bf16.mxu0 0
        %1922 = vmatpush1.bf16.msra.mxu0 0
        %1923 = vmatprep.subr.bf16.mxu0 0
        %1924 = vmatpush1.bf16.msra.mxu0 0
        %1925 = vmatprep.subr.bf16.mxu0 0
        %1926 = vmatpush1.bf16.msra.mxu0 0
        %1927 = vmatprep.subr.bf16.mxu0 0
        %1928 = vmatpush1.bf16.msra.mxu0 0
        %1929 = vmatprep.subr.bf16.mxu0 0
        %1930 = vmatpush1.bf16.msra.mxu0 0
        %1931 = vmatprep.subr.bf16.mxu0 0
        %1932 = vmatpush1.bf16.msra.mxu0 0
        %1933 = vmatprep.subr.bf16.mxu0 0
        %1934 = vmatpush1.bf16.msra.mxu0 0
        %1935 = vmatprep.subr.bf16.mxu0 0
        %1936 = vmatpush1.bf16.msra.mxu0 0
        %1937 = vmatprep.subr.bf16.mxu0 0
        %1938 = vmatpush1.bf16.msra.mxu0 0
        %1939 = vmatprep.subr.bf16.mxu0 0
        %1940 = vmatpush1.bf16.msra.mxu0 0
        %1941 = vmatprep.subr.bf16.mxu0 0
        %1942 = vmatpush1.bf16.msra.mxu0 0
        %1943 = vmatprep.subr.bf16.mxu0 0
        %1944 = vmatpush1.bf16.msra.mxu0 0
        %1945 = vmatprep.subr.bf16.mxu0 0
        %1946 = vmatpush1.bf16.msra.mxu0 0
        %1947 = vmatprep.subr.bf16.mxu0 0
        %1948 = vmatpush1.bf16.msra.mxu0 0
        %1949 = vmatprep.subr.bf16.mxu0 0
        %1950 = vmatpush1.bf16.msra.mxu0 0
        %1951 = vmatprep.mubr.bf16.mxu0 0
        %1952 = vmatmul.mubr.bf16.gmra.mrb[0].mxu0 %v373
        %v1953 = vpop.f32.mrb[0].mxu0
        %v1954 = vadd.f32 0.0, %v1953
        %v1955 = vpop.f32.mrb[0].mxu0
        %v1956 = vadd.f32 0.0, %v1955
        %v1957 = vpop.f32.mrb[0].mxu0
        %v1958 = vpop.f32.mrb[0].mxu0
        %1959 = vdwg.mxu0
        %v1962 = vrot.slane %v1954, 3
        %v1963 = vrot.slane %v1956, 3
        %v1966 = vmul.f32 %v1954, %v1962
        %v1967 = vmul.f32 %v1956, %v1963
        %v1970 = vrot.slane %v1966, 1
        %v1971 = vrot.slane %v1967, 1
        %v1974 = vsel %vm437, %v1970, 0.0
        %v1975 = vrot.slane %v1974, 4
        %v1976 = vadd.f32 %v1974, %v1975
        %v1977 = vrot.slane %v1976, 2
        %v1978 = vadd.f32 %v1976, %v1977
        %v1979 = vrot.slane %v1978, 1
        %v1980 = vadd.f32 %v1978, %v1979
        %v1981 = vsel %vm437, %v1971, 0.0
        %v1982 = vrot.slane %v1981, 4
        %v1983 = vadd.f32 %v1981, %v1982
        %v1984 = vrot.slane %v1983, 2
        %v1985 = vadd.f32 %v1983, %v1984
        %v1986 = vrot.slane %v1985, 1
        %v1987 = vadd.f32 %v1985, %v1986
        %v1988 = vmul.f32 %v1954, %v1954
        %v1989 = vmul.f32 %v1956, %v1956
        %v1992 = vrot.slane %v1988, 1
        %v1993 = vrot.slane %v1989, 1
        %v1996 = vsel %vm437, %v1992, 0.0
        %v1997 = vrot.slane %v1996, 4
        %v1998 = vadd.f32 %v1996, %v1997
        %v1999 = vrot.slane %v1998, 2
        %v2000 = vadd.f32 %v1998, %v1999
        %v2001 = vrot.slane %v2000, 1
        %v2002 = vadd.f32 %v2000, %v2001
        %v2003 = vsel %vm437, %v1993, 0.0
        %v2004 = vrot.slane %v2003, 4
        %v2005 = vadd.f32 %v2003, %v2004
        %v2006 = vrot.slane %v2005, 2
        %v2007 = vadd.f32 %v2005, %v2006
        %v2008 = vrot.slane %v2007, 1
        %v2009 = vadd.f32 %v2007, %v2008
        %v2010 = vsel %vm437, %v1988, 0.0
        %v2011 = vrot.slane %v2010, 4
        %v2012 = vadd.f32 %v2010, %v2011
        %v2013 = vrot.slane %v2012, 2
        %v2014 = vadd.f32 %v2012, %v2013
        %v2015 = vrot.slane %v2014, 1
        %v2016 = vadd.f32 %v2014, %v2015
        %v2017 = vsel %vm437, %v1989, 0.0
        %v2018 = vrot.slane %v2017, 4
        %v2019 = vadd.f32 %v2017, %v2018
        %v2020 = vrot.slane %v2019, 2
        %v2021 = vadd.f32 %v2019, %v2020
        %v2022 = vrot.slane %v2021, 1
        %v2023 = vadd.f32 %v2021, %v2022
        %s2024 = sld [smem:[#allocation9 + $0xc]]
        %v2025 = vstv %s2024
        %v2026 = vmul.f32 %v2025, %v1980
        %v2027 = vmul.f32 %v2025, %v1987
        %v2028 = vadd.f32 %v1900, %v2026
        %v2029 = vadd.f32 %v1901, %v2027
        %v2030 = vmul.f32 %v2002, %v2016
        %v2031 = vmul.f32 %v2009, %v2023
        %v2032 = vadd.f32 %v1904, %v2030
        %v2033 = vadd.f32 %v1905, %v2031
        %s2034 = scalar_lea.vmem %s299, 104 [#allocation6]
        %v2035 = vld [vmem:[%s2034] sm:$0xff]
        %v2037 = vunpack.c.l.b16 %v2035
        %v2038 = vunpack.c.h.b16 %v2035
        %v2039 = vpack.c.b16 %v2037, %v2037
        %v2040 = vpack.c.b16 %v2038, %v2038
        %v2042 = vsel %vm375, %v2039, 0
        %v2045 = vsel %vm375, %v2040, 0
        %2047 = vmatprep.subr.bf16.mxu0 %v2045
        %2048 = vmatpush1.bf16.msra.mxu0 %v2042
        %2049 = vmatprep.subr.bf16.mxu0 0
        %2050 = vmatpush1.bf16.msra.mxu0 0
        %2051 = vmatprep.subr.bf16.mxu0 0
        %2052 = vmatpush1.bf16.msra.mxu0 0
        %2053 = vmatprep.subr.bf16.mxu0 0
        %2054 = vmatpush1.bf16.msra.mxu0 0
        %2055 = vmatprep.subr.bf16.mxu0 0
        %2056 = vmatpush1.bf16.msra.mxu0 0
        %2057 = vmatprep.subr.bf16.mxu0 0
        %2058 = vmatpush1.bf16.msra.mxu0 0
        %2059 = vmatprep.subr.bf16.mxu0 0
        %2060 = vmatpush1.bf16.msra.mxu0 0
        %2061 = vmatprep.subr.bf16.mxu0 0
        %2062 = vmatpush1.bf16.msra.mxu0 0
        %2063 = vmatprep.subr.bf16.mxu0 0
        %2064 = vmatpush1.bf16.msra.mxu0 0
        %2065 = vmatprep.subr.bf16.mxu0 0
        %2066 = vmatpush1.bf16.msra.mxu0 0
        %2067 = vmatprep.subr.bf16.mxu0 0
        %2068 = vmatpush1.bf16.msra.mxu0 0
        %2069 = vmatprep.subr.bf16.mxu0 0
        %2070 = vmatpush1.bf16.msra.mxu0 0
        %2071 = vmatprep.subr.bf16.mxu0 0
        %2072 = vmatpush1.bf16.msra.mxu0 0
        %2073 = vmatprep.subr.bf16.mxu0 0
        %2074 = vmatpush1.bf16.msra.mxu0 0
        %2075 = vmatprep.subr.bf16.mxu0 0
        %2076 = vmatpush1.bf16.msra.mxu0 0
        %2077 = vmatprep.subr.bf16.mxu0 0
        %2078 = vmatpush1.bf16.msra.mxu0 0
        %2079 = vmatprep.mubr.bf16.mxu0 0
        %2080 = vmatmul.mubr.bf16.gmra.mrb[0].mxu0 %v373
        %v2081 = vpop.f32.mrb[0].mxu0
        %v2082 = vadd.f32 0.0, %v2081
        %v2083 = vpop.f32.mrb[0].mxu0
        %v2084 = vadd.f32 0.0, %v2083
        %v2085 = vpop.f32.mrb[0].mxu0
        %v2086 = vpop.f32.mrb[0].mxu0
        %2087 = vdwg.mxu0
        %v2090 = vrot.slane %v2082, 3
        %v2091 = vrot.slane %v2084, 3
        %v2094 = vmul.f32 %v2082, %v2090
        %v2095 = vmul.f32 %v2084, %v2091
        %v2098 = vrot.slane %v2094, 1
        %v2099 = vrot.slane %v2095, 1
        %v2102 = vsel %vm437, %v2098, 0.0
        %v2103 = vrot.slane %v2102, 4
        %v2104 = vadd.f32 %v2102, %v2103
        %v2105 = vrot.slane %v2104, 2
        %v2106 = vadd.f32 %v2104, %v2105
        %v2107 = vrot.slane %v2106, 1
        %v2108 = vadd.f32 %v2106, %v2107
        %v2109 = vsel %vm437, %v2099, 0.0
        %v2110 = vrot.slane %v2109, 4
        %v2111 = vadd.f32 %v2109, %v2110
        %v2112 = vrot.slane %v2111, 2
        %v2113 = vadd.f32 %v2111, %v2112
        %v2114 = vrot.slane %v2113, 1
        %v2115 = vadd.f32 %v2113, %v2114
        %v2116 = vmul.f32 %v2082, %v2082
        %v2117 = vmul.f32 %v2084, %v2084
        %v2120 = vrot.slane %v2116, 1
        %v2121 = vrot.slane %v2117, 1
        %v2124 = vsel %vm437, %v2120, 0.0
        %v2125 = vrot.slane %v2124, 4
        %v2126 = vadd.f32 %v2124, %v2125
        %v2127 = vrot.slane %v2126, 2
        %v2128 = vadd.f32 %v2126, %v2127
        %v2129 = vrot.slane %v2128, 1
        %v2130 = vadd.f32 %v2128, %v2129
        %v2131 = vsel %vm437, %v2121, 0.0
        %v2132 = vrot.slane %v2131, 4
        %v2133 = vadd.f32 %v2131, %v2132
        %v2134 = vrot.slane %v2133, 2
        %v2135 = vadd.f32 %v2133, %v2134
        %v2136 = vrot.slane %v2135, 1
        %v2137 = vadd.f32 %v2135, %v2136
        %v2138 = vsel %vm437, %v2116, 0.0
        %v2139 = vrot.slane %v2138, 4
        %v2140 = vadd.f32 %v2138, %v2139
        %v2141 = vrot.slane %v2140, 2
        %v2142 = vadd.f32 %v2140, %v2141
        %v2143 = vrot.slane %v2142, 1
        %v2144 = vadd.f32 %v2142, %v2143
        %v2145 = vsel %vm437, %v2117, 0.0
        %v2146 = vrot.slane %v2145, 4
        %v2147 = vadd.f32 %v2145, %v2146
        %v2148 = vrot.slane %v2147, 2
        %v2149 = vadd.f32 %v2147, %v2148
        %v2150 = vrot.slane %v2149, 1
        %v2151 = vadd.f32 %v2149, %v2150
        %s2152 = sld [smem:[#allocation9 + $0xd]]
        %v2153 = vstv %s2152
        %v2154 = vmul.f32 %v2153, %v2108
        %v2155 = vmul.f32 %v2153, %v2115
        %v2156 = vadd.f32 %v2028, %v2154
        %v2157 = vadd.f32 %v2029, %v2155
        %v2158 = vmul.f32 %v2130, %v2144
        %v2159 = vmul.f32 %v2137, %v2151
        %v2160 = vadd.f32 %v2032, %v2158
        %v2161 = vadd.f32 %v2033, %v2159
        %s2162 = scalar_lea.vmem %s299, 112 [#allocation6]
        %v2163 = vld [vmem:[%s2162] sm:$0xff]
        %v2165 = vunpack.c.l.b16 %v2163
        %v2166 = vunpack.c.h.b16 %v2163
        %v2167 = vpack.c.b16 %v2165, %v2165
        %v2168 = vpack.c.b16 %v2166, %v2166
        %v2170 = vsel %vm375, %v2167, 0
        %v2173 = vsel %vm375, %v2168, 0
        %2175 = vmatprep.subr.bf16.mxu0 %v2173
        %2176 = vmatpush1.bf16.msra.mxu0 %v2170
        %2177 = vmatprep.subr.bf16.mxu0 0
        %2178 = vmatpush1.bf16.msra.mxu0 0
        %2179 = vmatprep.subr.bf16.mxu0 0
        %2180 = vmatpush1.bf16.msra.mxu0 0
        %2181 = vmatprep.subr.bf16.mxu0 0
        %2182 = vmatpush1.bf16.msra.mxu0 0
        %2183 = vmatprep.subr.bf16.mxu0 0
        %2184 = vmatpush1.bf16.msra.mxu0 0
        %2185 = vmatprep.subr.bf16.mxu0 0
        %2186 = vmatpush1.bf16.msra.mxu0 0
        %2187 = vmatprep.subr.bf16.mxu0 0
        %2188 = vmatpush1.bf16.msra.mxu0 0
        %2189 = vmatprep.subr.bf16.mxu0 0
        %2190 = vmatpush1.bf16.msra.mxu0 0
        %2191 = vmatprep.subr.bf16.mxu0 0
        %2192 = vmatpush1.bf16.msra.mxu0 0
        %2193 = vmatprep.subr.bf16.mxu0 0
        %2194 = vmatpush1.bf16.msra.mxu0 0
        %2195 = vmatprep.subr.bf16.mxu0 0
        %2196 = vmatpush1.bf16.msra.mxu0 0
        %2197 = vmatprep.subr.bf16.mxu0 0
        %2198 = vmatpush1.bf16.msra.mxu0 0
        %2199 = vmatprep.subr.bf16.mxu0 0
        %2200 = vmatpush1.bf16.msra.mxu0 0
        %2201 = vmatprep.subr.bf16.mxu0 0
        %2202 = vmatpush1.bf16.msra.mxu0 0
        %2203 = vmatprep.subr.bf16.mxu0 0
        %2204 = vmatpush1.bf16.msra.mxu0 0
        %2205 = vmatprep.subr.bf16.mxu0 0
        %2206 = vmatpush1.bf16.msra.mxu0 0
        %2207 = vmatprep.mubr.bf16.mxu0 0
        %2208 = vmatmul.mubr.bf16.gmra.mrb[0].mxu0 %v373
        %v2209 = vpop.f32.mrb[0].mxu0
        %v2210 = vadd.f32 0.0, %v2209
        %v2211 = vpop.f32.mrb[0].mxu0
        %v2212 = vadd.f32 0.0, %v2211
        %v2213 = vpop.f32.mrb[0].mxu0
        %v2214 = vpop.f32.mrb[0].mxu0
        %2215 = vdwg.mxu0
        %v2218 = vrot.slane %v2210, 3
        %v2219 = vrot.slane %v2212, 3
        %v2222 = vmul.f32 %v2210, %v2218
        %v2223 = vmul.f32 %v2212, %v2219
        %v2226 = vrot.slane %v2222, 1
        %v2227 = vrot.slane %v2223, 1
        %v2230 = vsel %vm437, %v2226, 0.0
        %v2231 = vrot.slane %v2230, 4
        %v2232 = vadd.f32 %v2230, %v2231
        %v2233 = vrot.slane %v2232, 2
        %v2234 = vadd.f32 %v2232, %v2233
        %v2235 = vrot.slane %v2234, 1
        %v2236 = vadd.f32 %v2234, %v2235
        %v2237 = vsel %vm437, %v2227, 0.0
        %v2238 = vrot.slane %v2237, 4
        %v2239 = vadd.f32 %v2237, %v2238
        %v2240 = vrot.slane %v2239, 2
        %v2241 = vadd.f32 %v2239, %v2240
        %v2242 = vrot.slane %v2241, 1
        %v2243 = vadd.f32 %v2241, %v2242
        %v2244 = vmul.f32 %v2210, %v2210
        %v2245 = vmul.f32 %v2212, %v2212
        %v2248 = vrot.slane %v2244, 1
        %v2249 = vrot.slane %v2245, 1
        %v2252 = vsel %vm437, %v2248, 0.0
        %v2253 = vrot.slane %v2252, 4
        %v2254 = vadd.f32 %v2252, %v2253
        %v2255 = vrot.slane %v2254, 2
        %v2256 = vadd.f32 %v2254, %v2255
        %v2257 = vrot.slane %v2256, 1
        %v2258 = vadd.f32 %v2256, %v2257
        %v2259 = vsel %vm437, %v2249, 0.0
        %v2260 = vrot.slane %v2259, 4
        %v2261 = vadd.f32 %v2259, %v2260
        %v2262 = vrot.slane %v2261, 2
        %v2263 = vadd.f32 %v2261, %v2262
        %v2264 = vrot.slane %v2263, 1
        %v2265 = vadd.f32 %v2263, %v2264
        %v2266 = vsel %vm437, %v2244, 0.0
        %v2267 = vrot.slane %v2266, 4
        %v2268 = vadd.f32 %v2266, %v2267
        %v2269 = vrot.slane %v2268, 2
        %v2270 = vadd.f32 %v2268, %v2269
        %v2271 = vrot.slane %v2270, 1
        %v2272 = vadd.f32 %v2270, %v2271
        %v2273 = vsel %vm437, %v2245, 0.0
        %v2274 = vrot.slane %v2273, 4
        %v2275 = vadd.f32 %v2273, %v2274
        %v2276 = vrot.slane %v2275, 2
        %v2277 = vadd.f32 %v2275, %v2276
        %v2278 = vrot.slane %v2277, 1
        %v2279 = vadd.f32 %v2277, %v2278
        %s2280 = sld [smem:[#allocation9 + $0xe]]
        %v2281 = vstv %s2280
        %v2282 = vmul.f32 %v2281, %v2236
        %v2283 = vmul.f32 %v2281, %v2243
        %v2284 = vadd.f32 %v2156, %v2282
        %v2285 = vadd.f32 %v2157, %v2283
        %v2286 = vmul.f32 %v2258, %v2272
        %v2287 = vmul.f32 %v2265, %v2279
        %v2288 = vadd.f32 %v2160, %v2286
        %v2289 = vadd.f32 %v2161, %v2287
        %s2290 = scalar_lea.vmem %s299, 120 [#allocation6]
        %v2291 = vld [vmem:[%s2290] sm:$0xff]
        %v2293 = vunpack.c.l.b16 %v2291
        %v2294 = vunpack.c.h.b16 %v2291
        %v2295 = vpack.c.b16 %v2293, %v2293
        %v2296 = vpack.c.b16 %v2294, %v2294
        %v2298 = vsel %vm375, %v2295, 0
        %v2301 = vsel %vm375, %v2296, 0
        %2303 = vmatprep.subr.bf16.mxu0 %v2301
        %2304 = vmatpush1.bf16.msra.mxu0 %v2298
        %2305 = vmatprep.subr.bf16.mxu0 0
        %2306 = vmatpush1.bf16.msra.mxu0 0
        %2307 = vmatprep.subr.bf16.mxu0 0
        %2308 = vmatpush1.bf16.msra.mxu0 0
        %2309 = vmatprep.subr.bf16.mxu0 0
        %2310 = vmatpush1.bf16.msra.mxu0 0
        %2311 = vmatprep.subr.bf16.mxu0 0
        %2312 = vmatpush1.bf16.msra.mxu0 0
        %2313 = vmatprep.subr.bf16.mxu0 0
        %2314 = vmatpush1.bf16.msra.mxu0 0
        %2315 = vmatprep.subr.bf16.mxu0 0
        %2316 = vmatpush1.bf16.msra.mxu0 0
        %2317 = vmatprep.subr.bf16.mxu0 0
        %2318 = vmatpush1.bf16.msra.mxu0 0
        %2319 = vmatprep.subr.bf16.mxu0 0
        %2320 = vmatpush1.bf16.msra.mxu0 0
        %2321 = vmatprep.subr.bf16.mxu0 0
        %2322 = vmatpush1.bf16.msra.mxu0 0
        %2323 = vmatprep.subr.bf16.mxu0 0
        %2324 = vmatpush1.bf16.msra.mxu0 0
        %2325 = vmatprep.subr.bf16.mxu0 0
        %2326 = vmatpush1.bf16.msra.mxu0 0
        %2327 = vmatprep.subr.bf16.mxu0 0
        %2328 = vmatpush1.bf16.msra.mxu0 0
        %2329 = vmatprep.subr.bf16.mxu0 0
        %2330 = vmatpush1.bf16.msra.mxu0 0
        %2331 = vmatprep.subr.bf16.mxu0 0
        %2332 = vmatpush1.bf16.msra.mxu0 0
        %2333 = vmatprep.subr.bf16.mxu0 0
        %2334 = vmatpush1.bf16.msra.mxu0 0
        %2335 = vmatprep.mubr.bf16.mxu0 0
        %2336 = vmatmul.mubr.bf16.gmra.mrb[0].mxu0 %v373
        %v2337 = vpop.f32.mrb[0].mxu0
        %v2338 = vadd.f32 0.0, %v2337
        %v2339 = vpop.f32.mrb[0].mxu0
        %v2340 = vadd.f32 0.0, %v2339
        %v2341 = vpop.f32.mrb[0].mxu0
        %v2342 = vpop.f32.mrb[0].mxu0
        %2343 = vdwg.mxu0
        %v2346 = vrot.slane %v2338, 3
        %v2347 = vrot.slane %v2340, 3
        %v2350 = vmul.f32 %v2338, %v2346
        %v2351 = vmul.f32 %v2340, %v2347
        %v2354 = vrot.slane %v2350, 1
        %v2355 = vrot.slane %v2351, 1
        %v2358 = vsel %vm437, %v2354, 0.0
        %v2359 = vrot.slane %v2358, 4
        %v2360 = vadd.f32 %v2358, %v2359
        %v2361 = vrot.slane %v2360, 2
        %v2362 = vadd.f32 %v2360, %v2361
        %v2363 = vrot.slane %v2362, 1
        %v2364 = vadd.f32 %v2362, %v2363
        %v2365 = vsel %vm437, %v2355, 0.0
        %v2366 = vrot.slane %v2365, 4
        %v2367 = vadd.f32 %v2365, %v2366
        %v2368 = vrot.slane %v2367, 2
        %v2369 = vadd.f32 %v2367, %v2368
        %v2370 = vrot.slane %v2369, 1
        %v2371 = vadd.f32 %v2369, %v2370
        %v2372 = vmul.f32 %v2338, %v2338
        %v2373 = vmul.f32 %v2340, %v2340
        %v2376 = vrot.slane %v2372, 1
        %v2377 = vrot.slane %v2373, 1
        %v2380 = vsel %vm437, %v2376, 0.0
        %v2381 = vrot.slane %v2380, 4
        %v2382 = vadd.f32 %v2380, %v2381
        %v2383 = vrot.slane %v2382, 2
        %v2384 = vadd.f32 %v2382, %v2383
        %v2385 = vrot.slane %v2384, 1
        %v2386 = vadd.f32 %v2384, %v2385
        %v2387 = vsel %vm437, %v2377, 0.0
        %v2388 = vrot.slane %v2387, 4
        %v2389 = vadd.f32 %v2387, %v2388
        %v2390 = vrot.slane %v2389, 2
        %v2391 = vadd.f32 %v2389, %v2390
        %v2392 = vrot.slane %v2391, 1
        %v2393 = vadd.f32 %v2391, %v2392
        %v2394 = vsel %vm437, %v2372, 0.0
        %v2395 = vrot.slane %v2394, 4
        %v2396 = vadd.f32 %v2394, %v2395
        %v2397 = vrot.slane %v2396, 2
        %v2398 = vadd.f32 %v2396, %v2397
        %v2399 = vrot.slane %v2398, 1
        %v2400 = vadd.f32 %v2398, %v2399
        %v2401 = vsel %vm437, %v2373, 0.0
        %v2402 = vrot.slane %v2401, 4
        %v2403 = vadd.f32 %v2401, %v2402
        %v2404 = vrot.slane %v2403, 2
        %v2405 = vadd.f32 %v2403, %v2404
        %v2406 = vrot.slane %v2405, 1
        %v2407 = vadd.f32 %v2405, %v2406
        %s2408 = sld [smem:[#allocation9 + $0xf]]
        %v2409 = vstv %s2408
        %v2410 = vmul.f32 %v2409, %v2364
        %v2411 = vmul.f32 %v2409, %v2371
        %v2412 = vadd.f32 %v2284, %v2410
        %v2413 = vadd.f32 %v2285, %v2411
        %v2414 = vmul.f32 %v2386, %v2400
        %v2415 = vmul.f32 %v2393, %v2407
        %v2416 = vadd.f32 %v2288, %v2414
        %v2417 = vadd.f32 %v2289, %v2415
        %s2418 = scalar_lea.vmem %s299, 128 [#allocation6]
        %v2419 = vld [vmem:[%s2418] sm:$0xff]
        %v2421 = vunpack.c.l.b16 %v2419
        %v2422 = vunpack.c.h.b16 %v2419
        %v2423 = vpack.c.b16 %v2421, %v2421
        %v2424 = vpack.c.b16 %v2422, %v2422
        %v2426 = vsel %vm375, %v2423, 0
        %v2429 = vsel %vm375, %v2424, 0
        %2431 = vmatprep.subr.bf16.mxu0 %v2429
        %2432 = vmatpush1.bf16.msra.mxu0 %v2426
        %2433 = vmatprep.subr.bf16.mxu0 0
        %2434 = vmatpush1.bf16.msra.mxu0 0
        %2435 = vmatprep.subr.bf16.mxu0 0
        %2436 = vmatpush1.bf16.msra.mxu0 0
        %2437 = vmatprep.subr.bf16.mxu0 0
        %2438 = vmatpush1.bf16.msra.mxu0 0
        %2439 = vmatprep.subr.bf16.mxu0 0
        %2440 = vmatpush1.bf16.msra.mxu0 0
        %2441 = vmatprep.subr.bf16.mxu0 0
        %2442 = vmatpush1.bf16.msra.mxu0 0
        %2443 = vmatprep.subr.bf16.mxu0 0
        %2444 = vmatpush1.bf16.msra.mxu0 0
        %2445 = vmatprep.subr.bf16.mxu0 0
        %2446 = vmatpush1.bf16.msra.mxu0 0
        %2447 = vmatprep.subr.bf16.mxu0 0
        %2448 = vmatpush1.bf16.msra.mxu0 0
        %2449 = vmatprep.subr.bf16.mxu0 0
        %2450 = vmatpush1.bf16.msra.mxu0 0
        %2451 = vmatprep.subr.bf16.mxu0 0
        %2452 = vmatpush1.bf16.msra.mxu0 0
        %2453 = vmatprep.subr.bf16.mxu0 0
        %2454 = vmatpush1.bf16.msra.mxu0 0
        %2455 = vmatprep.subr.bf16.mxu0 0
        %2456 = vmatpush1.bf16.msra.mxu0 0
        %2457 = vmatprep.subr.bf16.mxu0 0
        %2458 = vmatpush1.bf16.msra.mxu0 0
        %2459 = vmatprep.subr.bf16.mxu0 0
        %2460 = vmatpush1.bf16.msra.mxu0 0
        %2461 = vmatprep.subr.bf16.mxu0 0
        %2462 = vmatpush1.bf16.msra.mxu0 0
        %2463 = vmatprep.mubr.bf16.mxu0 0
        %2464 = vmatmul.mubr.bf16.gmra.mrb[0].mxu0 %v373
        %v2465 = vpop.f32.mrb[0].mxu0
        %v2466 = vadd.f32 0.0, %v2465
        %v2467 = vpop.f32.mrb[0].mxu0
        %v2468 = vadd.f32 0.0, %v2467
        %v2469 = vpop.f32.mrb[0].mxu0
        %v2470 = vpop.f32.mrb[0].mxu0
        %2471 = vdwg.mxu0
        %v2474 = vrot.slane %v2466, 3
        %v2475 = vrot.slane %v2468, 3
        %v2478 = vmul.f32 %v2466, %v2474
        %v2479 = vmul.f32 %v2468, %v2475
        %v2482 = vrot.slane %v2478, 1
        %v2483 = vrot.slane %v2479, 1
        %v2486 = vsel %vm437, %v2482, 0.0
        %v2487 = vrot.slane %v2486, 4
        %v2488 = vadd.f32 %v2486, %v2487
        %v2489 = vrot.slane %v2488, 2
        %v2490 = vadd.f32 %v2488, %v2489
        %v2491 = vrot.slane %v2490, 1
        %v2492 = vadd.f32 %v2490, %v2491
        %v2493 = vsel %vm437, %v2483, 0.0
        %v2494 = vrot.slane %v2493, 4
        %v2495 = vadd.f32 %v2493, %v2494
        %v2496 = vrot.slane %v2495, 2
        %v2497 = vadd.f32 %v2495, %v2496
        %v2498 = vrot.slane %v2497, 1
        %v2499 = vadd.f32 %v2497, %v2498
        %v2500 = vmul.f32 %v2466, %v2466
        %v2501 = vmul.f32 %v2468, %v2468
        %v2504 = vrot.slane %v2500, 1
        %v2505 = vrot.slane %v2501, 1
        %v2508 = vsel %vm437, %v2504, 0.0
        %v2509 = vrot.slane %v2508, 4
        %v2510 = vadd.f32 %v2508, %v2509
        %v2511 = vrot.slane %v2510, 2
        %v2512 = vadd.f32 %v2510, %v2511
        %v2513 = vrot.slane %v2512, 1
        %v2514 = vadd.f32 %v2512, %v2513
        %v2515 = vsel %vm437, %v2505, 0.0
        %v2516 = vrot.slane %v2515, 4
        %v2517 = vadd.f32 %v2515, %v2516
        %v2518 = vrot.slane %v2517, 2
        %v2519 = vadd.f32 %v2517, %v2518
        %v2520 = vrot.slane %v2519, 1
        %v2521 = vadd.f32 %v2519, %v2520
        %v2522 = vsel %vm437, %v2500, 0.0
        %v2523 = vrot.slane %v2522, 4
        %v2524 = vadd.f32 %v2522, %v2523
        %v2525 = vrot.slane %v2524, 2
        %v2526 = vadd.f32 %v2524, %v2525
        %v2527 = vrot.slane %v2526, 1
        %v2528 = vadd.f32 %v2526, %v2527
        %v2529 = vsel %vm437, %v2501, 0.0
        %v2530 = vrot.slane %v2529, 4
        %v2531 = vadd.f32 %v2529, %v2530
        %v2532 = vrot.slane %v2531, 2
        %v2533 = vadd.f32 %v2531, %v2532
        %v2534 = vrot.slane %v2533, 1
        %v2535 = vadd.f32 %v2533, %v2534
        %s2536 = sld [smem:[#allocation9 + $0x10]]
        %v2537 = vstv %s2536
        %v2538 = vmul.f32 %v2537, %v2492
        %v2539 = vmul.f32 %v2537, %v2499
        %v2540 = vadd.f32 %v2412, %v2538
        %v2541 = vadd.f32 %v2413, %v2539
        %v2542 = vmul.f32 %v2514, %v2528
        %v2543 = vmul.f32 %v2521, %v2535
        %v2544 = vadd.f32 %v2416, %v2542
        %v2545 = vadd.f32 %v2417, %v2543
        %s2546 = scalar_lea.vmem %s299, 136 [#allocation6]
        %v2547 = vld [vmem:[%s2546] sm:$0xff]
        %v2549 = vunpack.c.l.b16 %v2547
        %v2550 = vunpack.c.h.b16 %v2547
        %v2551 = vpack.c.b16 %v2549, %v2549
        %v2552 = vpack.c.b16 %v2550, %v2550
        %v2554 = vsel %vm375, %v2551, 0
        %v2557 = vsel %vm375, %v2552, 0
        %2559 = vmatprep.subr.bf16.mxu0 %v2557
        %2560 = vmatpush1.bf16.msra.mxu0 %v2554
        %2561 = vmatprep.subr.bf16.mxu0 0
        %2562 = vmatpush1.bf16.msra.mxu0 0
        %2563 = vmatprep.subr.bf16.mxu0 0
        %2564 = vmatpush1.bf16.msra.mxu0 0
        %2565 = vmatprep.subr.bf16.mxu0 0
        %2566 = vmatpush1.bf16.msra.mxu0 0
        %2567 = vmatprep.subr.bf16.mxu0 0
        %2568 = vmatpush1.bf16.msra.mxu0 0
        %2569 = vmatprep.subr.bf16.mxu0 0
        %2570 = vmatpush1.bf16.msra.mxu0 0
        %2571 = vmatprep.subr.bf16.mxu0 0
        %2572 = vmatpush1.bf16.msra.mxu0 0
        %2573 = vmatprep.subr.bf16.mxu0 0
        %2574 = vmatpush1.bf16.msra.mxu0 0
        %2575 = vmatprep.subr.bf16.mxu0 0
        %2576 = vmatpush1.bf16.msra.mxu0 0
        %2577 = vmatprep.subr.bf16.mxu0 0
        %2578 = vmatpush1.bf16.msra.mxu0 0
        %2579 = vmatprep.subr.bf16.mxu0 0
        %2580 = vmatpush1.bf16.msra.mxu0 0
        %2581 = vmatprep.subr.bf16.mxu0 0
        %2582 = vmatpush1.bf16.msra.mxu0 0
        %2583 = vmatprep.subr.bf16.mxu0 0
        %2584 = vmatpush1.bf16.msra.mxu0 0
        %2585 = vmatprep.subr.bf16.mxu0 0
        %2586 = vmatpush1.bf16.msra.mxu0 0
        %2587 = vmatprep.subr.bf16.mxu0 0
        %2588 = vmatpush1.bf16.msra.mxu0 0
        %2589 = vmatprep.subr.bf16.mxu0 0
        %2590 = vmatpush1.bf16.msra.mxu0 0
        %2591 = vmatprep.mubr.bf16.mxu0 0
        %2592 = vmatmul.mubr.bf16.gmra.mrb[0].mxu0 %v373
        %v2593 = vpop.f32.mrb[0].mxu0
        %v2594 = vadd.f32 0.0, %v2593
        %v2595 = vpop.f32.mrb[0].mxu0
        %v2596 = vadd.f32 0.0, %v2595
        %v2597 = vpop.f32.mrb[0].mxu0
        %v2598 = vpop.f32.mrb[0].mxu0
        %2599 = vdwg.mxu0
        %v2602 = vrot.slane %v2594, 3
        %v2603 = vrot.slane %v2596, 3
        %v2606 = vmul.f32 %v2594, %v2602
        %v2607 = vmul.f32 %v2596, %v2603
        %v2610 = vrot.slane %v2606, 1
        %v2611 = vrot.slane %v2607, 1
        %v2614 = vsel %vm437, %v2610, 0.0
        %v2615 = vrot.slane %v2614, 4
        %v2616 = vadd.f32 %v2614, %v2615
        %v2617 = vrot.slane %v2616, 2
        %v2618 = vadd.f32 %v2616, %v2617
        %v2619 = vrot.slane %v2618, 1
        %v2620 = vadd.f32 %v2618, %v2619
        %v2621 = vsel %vm437, %v2611, 0.0
        %v2622 = vrot.slane %v2621, 4
        %v2623 = vadd.f32 %v2621, %v2622
        %v2624 = vrot.slane %v2623, 2
        %v2625 = vadd.f32 %v2623, %v2624
        %v2626 = vrot.slane %v2625, 1
        %v2627 = vadd.f32 %v2625, %v2626
        %v2628 = vmul.f32 %v2594, %v2594
        %v2629 = vmul.f32 %v2596, %v2596
        %v2632 = vrot.slane %v2628, 1
        %v2633 = vrot.slane %v2629, 1
        %v2636 = vsel %vm437, %v2632, 0.0
        %v2637 = vrot.slane %v2636, 4
        %v2638 = vadd.f32 %v2636, %v2637
        %v2639 = vrot.slane %v2638, 2
        %v2640 = vadd.f32 %v2638, %v2639
        %v2641 = vrot.slane %v2640, 1
        %v2642 = vadd.f32 %v2640, %v2641
        %v2643 = vsel %vm437, %v2633, 0.0
        %v2644 = vrot.slane %v2643, 4
        %v2645 = vadd.f32 %v2643, %v2644
        %v2646 = vrot.slane %v2645, 2
        %v2647 = vadd.f32 %v2645, %v2646
        %v2648 = vrot.slane %v2647, 1
        %v2649 = vadd.f32 %v2647, %v2648
        %v2650 = vsel %vm437, %v2628, 0.0
        %v2651 = vrot.slane %v2650, 4
        %v2652 = vadd.f32 %v2650, %v2651
        %v2653 = vrot.slane %v2652, 2
        %v2654 = vadd.f32 %v2652, %v2653
        %v2655 = vrot.slane %v2654, 1
        %v2656 = vadd.f32 %v2654, %v2655
        %v2657 = vsel %vm437, %v2629, 0.0
        %v2658 = vrot.slane %v2657, 4
        %v2659 = vadd.f32 %v2657, %v2658
        %v2660 = vrot.slane %v2659, 2
        %v2661 = vadd.f32 %v2659, %v2660
        %v2662 = vrot.slane %v2661, 1
        %v2663 = vadd.f32 %v2661, %v2662
        %s2664 = sld [smem:[#allocation9 + $0x11]]
        %v2665 = vstv %s2664
        %v2666 = vmul.f32 %v2665, %v2620
        %v2667 = vmul.f32 %v2665, %v2627
        %v2668 = vadd.f32 %v2540, %v2666
        %v2669 = vadd.f32 %v2541, %v2667
        %v2670 = vmul.f32 %v2642, %v2656
        %v2671 = vmul.f32 %v2649, %v2663
        %v2672 = vadd.f32 %v2544, %v2670
        %v2673 = vadd.f32 %v2545, %v2671
        %s2674 = scalar_lea.vmem %s299, 144 [#allocation6]
        %v2675 = vld [vmem:[%s2674] sm:$0xff]
        %v2677 = vunpack.c.l.b16 %v2675
        %v2678 = vunpack.c.h.b16 %v2675
        %v2679 = vpack.c.b16 %v2677, %v2677
        %v2680 = vpack.c.b16 %v2678, %v2678
        %v2682 = vsel %vm375, %v2679, 0
        %v2685 = vsel %vm375, %v2680, 0
        %2687 = vmatprep.subr.bf16.mxu0 %v2685
        %2688 = vmatpush1.bf16.msra.mxu0 %v2682
        %2689 = vmatprep.subr.bf16.mxu0 0
        %2690 = vmatpush1.bf16.msra.mxu0 0
        %2691 = vmatprep.subr.bf16.mxu0 0
        %2692 = vmatpush1.bf16.msra.mxu0 0
        %2693 = vmatprep.subr.bf16.mxu0 0
        %2694 = vmatpush1.bf16.msra.mxu0 0
        %2695 = vmatprep.subr.bf16.mxu0 0
        %2696 = vmatpush1.bf16.msra.mxu0 0
        %2697 = vmatprep.subr.bf16.mxu0 0
        %2698 = vmatpush1.bf16.msra.mxu0 0
        %2699 = vmatprep.subr.bf16.mxu0 0
        %2700 = vmatpush1.bf16.msra.mxu0 0
        %2701 = vmatprep.subr.bf16.mxu0 0
        %2702 = vmatpush1.bf16.msra.mxu0 0
        %2703 = vmatprep.subr.bf16.mxu0 0
        %2704 = vmatpush1.bf16.msra.mxu0 0
        %2705 = vmatprep.subr.bf16.mxu0 0
        %2706 = vmatpush1.bf16.msra.mxu0 0
        %2707 = vmatprep.subr.bf16.mxu0 0
        %2708 = vmatpush1.bf16.msra.mxu0 0
        %2709 = vmatprep.subr.bf16.mxu0 0
        %2710 = vmatpush1.bf16.msra.mxu0 0
        %2711 = vmatprep.subr.bf16.mxu0 0
        %2712 = vmatpush1.bf16.msra.mxu0 0
        %2713 = vmatprep.subr.bf16.mxu0 0
        %2714 = vmatpush1.bf16.msra.mxu0 0
        %2715 = vmatprep.subr.bf16.mxu0 0
        %2716 = vmatpush1.bf16.msra.mxu0 0
        %2717 = vmatprep.subr.bf16.mxu0 0
        %2718 = vmatpush1.bf16.msra.mxu0 0
        %2719 = vmatprep.mubr.bf16.mxu0 0
        %2720 = vmatmul.mubr.bf16.gmra.mrb[0].mxu0 %v373
        %v2721 = vpop.f32.mrb[0].mxu0
        %v2722 = vadd.f32 0.0, %v2721
        %v2723 = vpop.f32.mrb[0].mxu0
        %v2724 = vadd.f32 0.0, %v2723
        %v2725 = vpop.f32.mrb[0].mxu0
        %v2726 = vpop.f32.mrb[0].mxu0
        %2727 = vdwg.mxu0
        %v2730 = vrot.slane %v2722, 3
        %v2731 = vrot.slane %v2724, 3
        %v2734 = vmul.f32 %v2722, %v2730
        %v2735 = vmul.f32 %v2724, %v2731
        %v2738 = vrot.slane %v2734, 1
        %v2739 = vrot.slane %v2735, 1
        %v2742 = vsel %vm437, %v2738, 0.0
        %v2743 = vrot.slane %v2742, 4
        %v2744 = vadd.f32 %v2742, %v2743
        %v2745 = vrot.slane %v2744, 2
        %v2746 = vadd.f32 %v2744, %v2745
        %v2747 = vrot.slane %v2746, 1
        %v2748 = vadd.f32 %v2746, %v2747
        %v2749 = vsel %vm437, %v2739, 0.0
        %v2750 = vrot.slane %v2749, 4
        %v2751 = vadd.f32 %v2749, %v2750
        %v2752 = vrot.slane %v2751, 2
        %v2753 = vadd.f32 %v2751, %v2752
        %v2754 = vrot.slane %v2753, 1
        %v2755 = vadd.f32 %v2753, %v2754
        %v2756 = vmul.f32 %v2722, %v2722
        %v2757 = vmul.f32 %v2724, %v2724
        %v2760 = vrot.slane %v2756, 1
        %v2761 = vrot.slane %v2757, 1
        %v2764 = vsel %vm437, %v2760, 0.0
        %v2765 = vrot.slane %v2764, 4
        %v2766 = vadd.f32 %v2764, %v2765
        %v2767 = vrot.slane %v2766, 2
        %v2768 = vadd.f32 %v2766, %v2767
        %v2769 = vrot.slane %v2768, 1
        %v2770 = vadd.f32 %v2768, %v2769
        %v2771 = vsel %vm437, %v2761, 0.0
        %v2772 = vrot.slane %v2771, 4
        %v2773 = vadd.f32 %v2771, %v2772
        %v2774 = vrot.slane %v2773, 2
        %v2775 = vadd.f32 %v2773, %v2774
        %v2776 = vrot.slane %v2775, 1
        %v2777 = vadd.f32 %v2775, %v2776
        %v2778 = vsel %vm437, %v2756, 0.0
        %v2779 = vrot.slane %v2778, 4
        %v2780 = vadd.f32 %v2778, %v2779
        %v2781 = vrot.slane %v2780, 2
        %v2782 = vadd.f32 %v2780, %v2781
        %v2783 = vrot.slane %v2782, 1
        %v2784 = vadd.f32 %v2782, %v2783
        %v2785 = vsel %vm437, %v2757, 0.0
        %v2786 = vrot.slane %v2785, 4
        %v2787 = vadd.f32 %v2785, %v2786
        %v2788 = vrot.slane %v2787, 2
        %v2789 = vadd.f32 %v2787, %v2788
        %v2790 = vrot.slane %v2789, 1
        %v2791 = vadd.f32 %v2789, %v2790
        %s2792 = sld [smem:[#allocation9 + $0x12]]
        %v2793 = vstv %s2792
        %v2794 = vmul.f32 %v2793, %v2748
        %v2795 = vmul.f32 %v2793, %v2755
        %v2796 = vadd.f32 %v2668, %v2794
        %v2797 = vadd.f32 %v2669, %v2795
        %v2798 = vmul.f32 %v2770, %v2784
        %v2799 = vmul.f32 %v2777, %v2791
        %v2800 = vadd.f32 %v2672, %v2798
        %v2801 = vadd.f32 %v2673, %v2799
        %s2802 = scalar_lea.vmem %s299, 152 [#allocation6]
        %v2803 = vld [vmem:[%s2802] sm:$0xff]
        %v2805 = vunpack.c.l.b16 %v2803
        %v2806 = vunpack.c.h.b16 %v2803
        %v2807 = vpack.c.b16 %v2805, %v2805
        %v2808 = vpack.c.b16 %v2806, %v2806
        %v2810 = vsel %vm375, %v2807, 0
        %v2813 = vsel %vm375, %v2808, 0
        %2815 = vmatprep.subr.bf16.mxu0 %v2813
        %2816 = vmatpush1.bf16.msra.mxu0 %v2810
        %2817 = vmatprep.subr.bf16.mxu0 0
        %2818 = vmatpush1.bf16.msra.mxu0 0
        %2819 = vmatprep.subr.bf16.mxu0 0
        %2820 = vmatpush1.bf16.msra.mxu0 0
        %2821 = vmatprep.subr.bf16.mxu0 0
        %2822 = vmatpush1.bf16.msra.mxu0 0
        %2823 = vmatprep.subr.bf16.mxu0 0
        %2824 = vmatpush1.bf16.msra.mxu0 0
        %2825 = vmatprep.subr.bf16.mxu0 0
        %2826 = vmatpush1.bf16.msra.mxu0 0
        %2827 = vmatprep.subr.bf16.mxu0 0
        %2828 = vmatpush1.bf16.msra.mxu0 0
        %2829 = vmatprep.subr.bf16.mxu0 0
        %2830 = vmatpush1.bf16.msra.mxu0 0
        %2831 = vmatprep.subr.bf16.mxu0 0
        %2832 = vmatpush1.bf16.msra.mxu0 0
        %2833 = vmatprep.subr.bf16.mxu0 0
        %2834 = vmatpush1.bf16.msra.mxu0 0
        %2835 = vmatprep.subr.bf16.mxu0 0
        %2836 = vmatpush1.bf16.msra.mxu0 0
        %2837 = vmatprep.subr.bf16.mxu0 0
        %2838 = vmatpush1.bf16.msra.mxu0 0
        %2839 = vmatprep.subr.bf16.mxu0 0
        %2840 = vmatpush1.bf16.msra.mxu0 0
        %2841 = vmatprep.subr.bf16.mxu0 0
        %2842 = vmatpush1.bf16.msra.mxu0 0
        %2843 = vmatprep.subr.bf16.mxu0 0
        %2844 = vmatpush1.bf16.msra.mxu0 0
        %2845 = vmatprep.subr.bf16.mxu0 0
        %2846 = vmatpush1.bf16.msra.mxu0 0
        %2847 = vmatprep.mubr.bf16.mxu0 0
        %2848 = vmatmul.mubr.bf16.gmra.mrb[0].mxu0 %v373
        %v2849 = vpop.f32.mrb[0].mxu0
        %v2850 = vadd.f32 0.0, %v2849
        %v2851 = vpop.f32.mrb[0].mxu0
        %v2852 = vadd.f32 0.0, %v2851
        %v2853 = vpop.f32.mrb[0].mxu0
        %v2854 = vpop.f32.mrb[0].mxu0
        %2855 = vdwg.mxu0
        %v2858 = vrot.slane %v2850, 3
        %v2859 = vrot.slane %v2852, 3
        %v2862 = vmul.f32 %v2850, %v2858
        %v2863 = vmul.f32 %v2852, %v2859
        %v2866 = vrot.slane %v2862, 1
        %v2867 = vrot.slane %v2863, 1
        %v2870 = vsel %vm437, %v2866, 0.0
        %v2871 = vrot.slane %v2870, 4
        %v2872 = vadd.f32 %v2870, %v2871
        %v2873 = vrot.slane %v2872, 2
        %v2874 = vadd.f32 %v2872, %v2873
        %v2875 = vrot.slane %v2874, 1
        %v2876 = vadd.f32 %v2874, %v2875
        %v2877 = vsel %vm437, %v2867, 0.0
        %v2878 = vrot.slane %v2877, 4
        %v2879 = vadd.f32 %v2877, %v2878
        %v2880 = vrot.slane %v2879, 2
        %v2881 = vadd.f32 %v2879, %v2880
        %v2882 = vrot.slane %v2881, 1
        %v2883 = vadd.f32 %v2881, %v2882
        %v2884 = vmul.f32 %v2850, %v2850
        %v2885 = vmul.f32 %v2852, %v2852
        %v2888 = vrot.slane %v2884, 1
        %v2889 = vrot.slane %v2885, 1
        %v2892 = vsel %vm437, %v2888, 0.0
        %v2893 = vrot.slane %v2892, 4
        %v2894 = vadd.f32 %v2892, %v2893
        %v2895 = vrot.slane %v2894, 2
        %v2896 = vadd.f32 %v2894, %v2895
        %v2897 = vrot.slane %v2896, 1
        %v2898 = vadd.f32 %v2896, %v2897
        %v2899 = vsel %vm437, %v2889, 0.0
        %v2900 = vrot.slane %v2899, 4
        %v2901 = vadd.f32 %v2899, %v2900
        %v2902 = vrot.slane %v2901, 2
        %v2903 = vadd.f32 %v2901, %v2902
        %v2904 = vrot.slane %v2903, 1
        %v2905 = vadd.f32 %v2903, %v2904
        %v2906 = vsel %vm437, %v2884, 0.0
        %v2907 = vrot.slane %v2906, 4
        %v2908 = vadd.f32 %v2906, %v2907
        %v2909 = vrot.slane %v2908, 2
        %v2910 = vadd.f32 %v2908, %v2909
        %v2911 = vrot.slane %v2910, 1
        %v2912 = vadd.f32 %v2910, %v2911
        %v2913 = vsel %vm437, %v2885, 0.0
        %v2914 = vrot.slane %v2913, 4
        %v2915 = vadd.f32 %v2913, %v2914
        %v2916 = vrot.slane %v2915, 2
        %v2917 = vadd.f32 %v2915, %v2916
        %v2918 = vrot.slane %v2917, 1
        %v2919 = vadd.f32 %v2917, %v2918
        %s2920 = sld [smem:[#allocation9 + $0x13]]
        %v2921 = vstv %s2920
        %v2922 = vmul.f32 %v2921, %v2876
        %v2923 = vmul.f32 %v2921, %v2883
        %v2924 = vadd.f32 %v2796, %v2922
        %v2925 = vadd.f32 %v2797, %v2923
        %v2926 = vmul.f32 %v2898, %v2912
        %v2927 = vmul.f32 %v2905, %v2919
        %v2928 = vadd.f32 %v2800, %v2926
        %v2929 = vadd.f32 %v2801, %v2927
        %s2930 = scalar_lea.vmem %s299, 160 [#allocation6]
        %v2931 = vld [vmem:[%s2930] sm:$0xff]
        %v2933 = vunpack.c.l.b16 %v2931
        %v2934 = vunpack.c.h.b16 %v2931
        %v2935 = vpack.c.b16 %v2933, %v2933
        %v2936 = vpack.c.b16 %v2934, %v2934
        %v2938 = vsel %vm375, %v2935, 0
        %v2941 = vsel %vm375, %v2936, 0
        %2943 = vmatprep.subr.bf16.mxu0 %v2941
        %2944 = vmatpush1.bf16.msra.mxu0 %v2938
        %2945 = vmatprep.subr.bf16.mxu0 0
        %2946 = vmatpush1.bf16.msra.mxu0 0
        %2947 = vmatprep.subr.bf16.mxu0 0
        %2948 = vmatpush1.bf16.msra.mxu0 0
        %2949 = vmatprep.subr.bf16.mxu0 0
        %2950 = vmatpush1.bf16.msra.mxu0 0
        %2951 = vmatprep.subr.bf16.mxu0 0
        %2952 = vmatpush1.bf16.msra.mxu0 0
        %2953 = vmatprep.subr.bf16.mxu0 0
        %2954 = vmatpush1.bf16.msra.mxu0 0
        %2955 = vmatprep.subr.bf16.mxu0 0
        %2956 = vmatpush1.bf16.msra.mxu0 0
        %2957 = vmatprep.subr.bf16.mxu0 0
        %2958 = vmatpush1.bf16.msra.mxu0 0
        %2959 = vmatprep.subr.bf16.mxu0 0
        %2960 = vmatpush1.bf16.msra.mxu0 0
        %2961 = vmatprep.subr.bf16.mxu0 0
        %2962 = vmatpush1.bf16.msra.mxu0 0
        %2963 = vmatprep.subr.bf16.mxu0 0
        %2964 = vmatpush1.bf16.msra.mxu0 0
        %2965 = vmatprep.subr.bf16.mxu0 0
        %2966 = vmatpush1.bf16.msra.mxu0 0
        %2967 = vmatprep.subr.bf16.mxu0 0
        %2968 = vmatpush1.bf16.msra.mxu0 0
        %2969 = vmatprep.subr.bf16.mxu0 0
        %2970 = vmatpush1.bf16.msra.mxu0 0
        %2971 = vmatprep.subr.bf16.mxu0 0
        %2972 = vmatpush1.bf16.msra.mxu0 0
        %2973 = vmatprep.subr.bf16.mxu0 0
        %2974 = vmatpush1.bf16.msra.mxu0 0
        %2975 = vmatprep.mubr.bf16.mxu0 0
        %2976 = vmatmul.mubr.bf16.gmra.mrb[0].mxu0 %v373
        %v2977 = vpop.f32.mrb[0].mxu0
        %v2978 = vadd.f32 0.0, %v2977
        %v2979 = vpop.f32.mrb[0].mxu0
        %v2980 = vadd.f32 0.0, %v2979
        %v2981 = vpop.f32.mrb[0].mxu0
        %v2982 = vpop.f32.mrb[0].mxu0
        %2983 = vdwg.mxu0
        %v2986 = vrot.slane %v2978, 3
        %v2987 = vrot.slane %v2980, 3
        %v2990 = vmul.f32 %v2978, %v2986
        %v2991 = vmul.f32 %v2980, %v2987
        %v2994 = vrot.slane %v2990, 1
        %v2995 = vrot.slane %v2991, 1
        %v2998 = vsel %vm437, %v2994, 0.0
        %v2999 = vrot.slane %v2998, 4
        %v3000 = vadd.f32 %v2998, %v2999
        %v3001 = vrot.slane %v3000, 2
        %v3002 = vadd.f32 %v3000, %v3001
        %v3003 = vrot.slane %v3002, 1
        %v3004 = vadd.f32 %v3002, %v3003
        %v3005 = vsel %vm437, %v2995, 0.0
        %v3006 = vrot.slane %v3005, 4
        %v3007 = vadd.f32 %v3005, %v3006
        %v3008 = vrot.slane %v3007, 2
        %v3009 = vadd.f32 %v3007, %v3008
        %v3010 = vrot.slane %v3009, 1
        %v3011 = vadd.f32 %v3009, %v3010
        %v3012 = vmul.f32 %v2978, %v2978
        %v3013 = vmul.f32 %v2980, %v2980
        %v3016 = vrot.slane %v3012, 1
        %v3017 = vrot.slane %v3013, 1
        %v3020 = vsel %vm437, %v3016, 0.0
        %v3021 = vrot.slane %v3020, 4
        %v3022 = vadd.f32 %v3020, %v3021
        %v3023 = vrot.slane %v3022, 2
        %v3024 = vadd.f32 %v3022, %v3023
        %v3025 = vrot.slane %v3024, 1
        %v3026 = vadd.f32 %v3024, %v3025
        %v3027 = vsel %vm437, %v3017, 0.0
        %v3028 = vrot.slane %v3027, 4
        %v3029 = vadd.f32 %v3027, %v3028
        %v3030 = vrot.slane %v3029, 2
        %v3031 = vadd.f32 %v3029, %v3030
        %v3032 = vrot.slane %v3031, 1
        %v3033 = vadd.f32 %v3031, %v3032
        %v3034 = vsel %vm437, %v3012, 0.0
        %v3035 = vrot.slane %v3034, 4
        %v3036 = vadd.f32 %v3034, %v3035
        %v3037 = vrot.slane %v3036, 2
        %v3038 = vadd.f32 %v3036, %v3037
        %v3039 = vrot.slane %v3038, 1
        %v3040 = vadd.f32 %v3038, %v3039
        %v3041 = vsel %vm437, %v3013, 0.0
        %v3042 = vrot.slane %v3041, 4
        %v3043 = vadd.f32 %v3041, %v3042
        %v3044 = vrot.slane %v3043, 2
        %v3045 = vadd.f32 %v3043, %v3044
        %v3046 = vrot.slane %v3045, 1
        %v3047 = vadd.f32 %v3045, %v3046
        %s3048 = sld [smem:[#allocation9 + $0x14]]
        %v3049 = vstv %s3048
        %v3050 = vmul.f32 %v3049, %v3004
        %v3051 = vmul.f32 %v3049, %v3011
        %v3052 = vadd.f32 %v2924, %v3050
        %v3053 = vadd.f32 %v2925, %v3051
        %v3054 = vmul.f32 %v3026, %v3040
        %v3055 = vmul.f32 %v3033, %v3047
        %v3056 = vadd.f32 %v2928, %v3054
        %v3057 = vadd.f32 %v2929, %v3055
        %s3058 = scalar_lea.vmem %s299, 168 [#allocation6]
        %v3059 = vld [vmem:[%s3058] sm:$0xff]
        %v3061 = vunpack.c.l.b16 %v3059
        %v3062 = vunpack.c.h.b16 %v3059
        %v3063 = vpack.c.b16 %v3061, %v3061
        %v3064 = vpack.c.b16 %v3062, %v3062
        %v3066 = vsel %vm375, %v3063, 0
        %v3069 = vsel %vm375, %v3064, 0
        %3071 = vmatprep.subr.bf16.mxu0 %v3069
        %3072 = vmatpush1.bf16.msra.mxu0 %v3066
        %3073 = vmatprep.subr.bf16.mxu0 0
        %3074 = vmatpush1.bf16.msra.mxu0 0
        %3075 = vmatprep.subr.bf16.mxu0 0
        %3076 = vmatpush1.bf16.msra.mxu0 0
        %3077 = vmatprep.subr.bf16.mxu0 0
        %3078 = vmatpush1.bf16.msra.mxu0 0
        %3079 = vmatprep.subr.bf16.mxu0 0
        %3080 = vmatpush1.bf16.msra.mxu0 0
        %3081 = vmatprep.subr.bf16.mxu0 0
        %3082 = vmatpush1.bf16.msra.mxu0 0
        %3083 = vmatprep.subr.bf16.mxu0 0
        %3084 = vmatpush1.bf16.msra.mxu0 0
        %3085 = vmatprep.subr.bf16.mxu0 0
        %3086 = vmatpush1.bf16.msra.mxu0 0
        %3087 = vmatprep.subr.bf16.mxu0 0
        %3088 = vmatpush1.bf16.msra.mxu0 0
        %3089 = vmatprep.subr.bf16.mxu0 0
        %3090 = vmatpush1.bf16.msra.mxu0 0
        %3091 = vmatprep.subr.bf16.mxu0 0
        %3092 = vmatpush1.bf16.msra.mxu0 0
        %3093 = vmatprep.subr.bf16.mxu0 0
        %3094 = vmatpush1.bf16.msra.mxu0 0
        %3095 = vmatprep.subr.bf16.mxu0 0
        %3096 = vmatpush1.bf16.msra.mxu0 0
        %3097 = vmatprep.subr.bf16.mxu0 0
        %3098 = vmatpush1.bf16.msra.mxu0 0
        %3099 = vmatprep.subr.bf16.mxu0 0
        %3100 = vmatpush1.bf16.msra.mxu0 0
        %3101 = vmatprep.subr.bf16.mxu0 0
        %3102 = vmatpush1.bf16.msra.mxu0 0
        %3103 = vmatprep.mubr.bf16.mxu0 0
        %3104 = vmatmul.mubr.bf16.gmra.mrb[0].mxu0 %v373
        %v3105 = vpop.f32.mrb[0].mxu0
        %v3106 = vadd.f32 0.0, %v3105
        %v3107 = vpop.f32.mrb[0].mxu0
        %v3108 = vadd.f32 0.0, %v3107
        %v3109 = vpop.f32.mrb[0].mxu0
        %v3110 = vpop.f32.mrb[0].mxu0
        %3111 = vdwg.mxu0
        %v3114 = vrot.slane %v3106, 3
        %v3115 = vrot.slane %v3108, 3
        %v3118 = vmul.f32 %v3106, %v3114
        %v3119 = vmul.f32 %v3108, %v3115
        %v3122 = vrot.slane %v3118, 1
        %v3123 = vrot.slane %v3119, 1
        %v3126 = vsel %vm437, %v3122, 0.0
        %v3127 = vrot.slane %v3126, 4
        %v3128 = vadd.f32 %v3126, %v3127
        %v3129 = vrot.slane %v3128, 2
        %v3130 = vadd.f32 %v3128, %v3129
        %v3131 = vrot.slane %v3130, 1
        %v3132 = vadd.f32 %v3130, %v3131
        %v3133 = vsel %vm437, %v3123, 0.0
        %v3134 = vrot.slane %v3133, 4
        %v3135 = vadd.f32 %v3133, %v3134
        %v3136 = vrot.slane %v3135, 2
        %v3137 = vadd.f32 %v3135, %v3136
        %v3138 = vrot.slane %v3137, 1
        %v3139 = vadd.f32 %v3137, %v3138
        %v3140 = vmul.f32 %v3106, %v3106
        %v3141 = vmul.f32 %v3108, %v3108
        %v3144 = vrot.slane %v3140, 1
        %v3145 = vrot.slane %v3141, 1
        %v3148 = vsel %vm437, %v3144, 0.0
        %v3149 = vrot.slane %v3148, 4
        %v3150 = vadd.f32 %v3148, %v3149
        %v3151 = vrot.slane %v3150, 2
        %v3152 = vadd.f32 %v3150, %v3151
        %v3153 = vrot.slane %v3152, 1
        %v3154 = vadd.f32 %v3152, %v3153
        %v3155 = vsel %vm437, %v3145, 0.0
        %v3156 = vrot.slane %v3155, 4
        %v3157 = vadd.f32 %v3155, %v3156
        %v3158 = vrot.slane %v3157, 2
        %v3159 = vadd.f32 %v3157, %v3158
        %v3160 = vrot.slane %v3159, 1
        %v3161 = vadd.f32 %v3159, %v3160
        %v3162 = vsel %vm437, %v3140, 0.0
        %v3163 = vrot.slane %v3162, 4
        %v3164 = vadd.f32 %v3162, %v3163
        %v3165 = vrot.slane %v3164, 2
        %v3166 = vadd.f32 %v3164, %v3165
        %v3167 = vrot.slane %v3166, 1
        %v3168 = vadd.f32 %v3166, %v3167
        %v3169 = vsel %vm437, %v3141, 0.0
        %v3170 = vrot.slane %v3169, 4
        %v3171 = vadd.f32 %v3169, %v3170
        %v3172 = vrot.slane %v3171, 2
        %v3173 = vadd.f32 %v3171, %v3172
        %v3174 = vrot.slane %v3173, 1
        %v3175 = vadd.f32 %v3173, %v3174
        %s3176 = sld [smem:[#allocation9 + $0x15]]
        %v3177 = vstv %s3176
        %v3178 = vmul.f32 %v3177, %v3132
        %v3179 = vmul.f32 %v3177, %v3139
        %v3180 = vadd.f32 %v3052, %v3178
        %v3181 = vadd.f32 %v3053, %v3179
        %v3182 = vmul.f32 %v3154, %v3168
        %v3183 = vmul.f32 %v3161, %v3175
        %v3184 = vadd.f32 %v3056, %v3182
        %v3185 = vadd.f32 %v3057, %v3183
        %s3186 = scalar_lea.vmem %s299, 176 [#allocation6]
        %v3187 = vld [vmem:[%s3186] sm:$0xff]
        %v3189 = vunpack.c.l.b16 %v3187
        %v3190 = vunpack.c.h.b16 %v3187
        %v3191 = vpack.c.b16 %v3189, %v3189
        %v3192 = vpack.c.b16 %v3190, %v3190
        %v3194 = vsel %vm375, %v3191, 0
        %v3197 = vsel %vm375, %v3192, 0
        %3199 = vmatprep.subr.bf16.mxu0 %v3197
        %3200 = vmatpush1.bf16.msra.mxu0 %v3194
        %3201 = vmatprep.subr.bf16.mxu0 0
        %3202 = vmatpush1.bf16.msra.mxu0 0
        %3203 = vmatprep.subr.bf16.mxu0 0
        %3204 = vmatpush1.bf16.msra.mxu0 0
        %3205 = vmatprep.subr.bf16.mxu0 0
        %3206 = vmatpush1.bf16.msra.mxu0 0
        %3207 = vmatprep.subr.bf16.mxu0 0
        %3208 = vmatpush1.bf16.msra.mxu0 0
        %3209 = vmatprep.subr.bf16.mxu0 0
        %3210 = vmatpush1.bf16.msra.mxu0 0
        %3211 = vmatprep.subr.bf16.mxu0 0
        %3212 = vmatpush1.bf16.msra.mxu0 0
        %3213 = vmatprep.subr.bf16.mxu0 0
        %3214 = vmatpush1.bf16.msra.mxu0 0
        %3215 = vmatprep.subr.bf16.mxu0 0
        %3216 = vmatpush1.bf16.msra.mxu0 0
        %3217 = vmatprep.subr.bf16.mxu0 0
        %3218 = vmatpush1.bf16.msra.mxu0 0
        %3219 = vmatprep.subr.bf16.mxu0 0
        %3220 = vmatpush1.bf16.msra.mxu0 0
        %3221 = vmatprep.subr.bf16.mxu0 0
        %3222 = vmatpush1.bf16.msra.mxu0 0
        %3223 = vmatprep.subr.bf16.mxu0 0
        %3224 = vmatpush1.bf16.msra.mxu0 0
        %3225 = vmatprep.subr.bf16.mxu0 0
        %3226 = vmatpush1.bf16.msra.mxu0 0
        %3227 = vmatprep.subr.bf16.mxu0 0
        %3228 = vmatpush1.bf16.msra.mxu0 0
        %3229 = vmatprep.subr.bf16.mxu0 0
        %3230 = vmatpush1.bf16.msra.mxu0 0
        %3231 = vmatprep.mubr.bf16.mxu0 0
        %3232 = vmatmul.mubr.bf16.gmra.mrb[0].mxu0 %v373
        %v3233 = vpop.f32.mrb[0].mxu0
        %v3234 = vadd.f32 0.0, %v3233
        %v3235 = vpop.f32.mrb[0].mxu0
        %v3236 = vadd.f32 0.0, %v3235
        %v3237 = vpop.f32.mrb[0].mxu0
        %v3238 = vpop.f32.mrb[0].mxu0
        %3239 = vdwg.mxu0
        %v3242 = vrot.slane %v3234, 3
        %v3243 = vrot.slane %v3236, 3
        %v3246 = vmul.f32 %v3234, %v3242
        %v3247 = vmul.f32 %v3236, %v3243
        %v3250 = vrot.slane %v3246, 1
        %v3251 = vrot.slane %v3247, 1
        %v3254 = vsel %vm437, %v3250, 0.0
        %v3255 = vrot.slane %v3254, 4
        %v3256 = vadd.f32 %v3254, %v3255
        %v3257 = vrot.slane %v3256, 2
        %v3258 = vadd.f32 %v3256, %v3257
        %v3259 = vrot.slane %v3258, 1
        %v3260 = vadd.f32 %v3258, %v3259
        %v3261 = vsel %vm437, %v3251, 0.0
        %v3262 = vrot.slane %v3261, 4
        %v3263 = vadd.f32 %v3261, %v3262
        %v3264 = vrot.slane %v3263, 2
        %v3265 = vadd.f32 %v3263, %v3264
        %v3266 = vrot.slane %v3265, 1
        %v3267 = vadd.f32 %v3265, %v3266
        %v3268 = vmul.f32 %v3234, %v3234
        %v3269 = vmul.f32 %v3236, %v3236
        %v3272 = vrot.slane %v3268, 1
        %v3273 = vrot.slane %v3269, 1
        %v3276 = vsel %vm437, %v3272, 0.0
        %v3277 = vrot.slane %v3276, 4
        %v3278 = vadd.f32 %v3276, %v3277
        %v3279 = vrot.slane %v3278, 2
        %v3280 = vadd.f32 %v3278, %v3279
        %v3281 = vrot.slane %v3280, 1
        %v3282 = vadd.f32 %v3280, %v3281
        %v3283 = vsel %vm437, %v3273, 0.0
        %v3284 = vrot.slane %v3283, 4
        %v3285 = vadd.f32 %v3283, %v3284
        %v3286 = vrot.slane %v3285, 2
        %v3287 = vadd.f32 %v3285, %v3286
        %v3288 = vrot.slane %v3287, 1
        %v3289 = vadd.f32 %v3287, %v3288
        %v3290 = vsel %vm437, %v3268, 0.0
        %v3291 = vrot.slane %v3290, 4
        %v3292 = vadd.f32 %v3290, %v3291
        %v3293 = vrot.slane %v3292, 2
        %v3294 = vadd.f32 %v3292, %v3293
        %v3295 = vrot.slane %v3294, 1
        %v3296 = vadd.f32 %v3294, %v3295
        %v3297 = vsel %vm437, %v3269, 0.0
        %v3298 = vrot.slane %v3297, 4
        %v3299 = vadd.f32 %v3297, %v3298
        %v3300 = vrot.slane %v3299, 2
        %v3301 = vadd.f32 %v3299, %v3300
        %v3302 = vrot.slane %v3301, 1
        %v3303 = vadd.f32 %v3301, %v3302
        %s3304 = sld [smem:[#allocation9 + $0x16]]
        %v3305 = vstv %s3304
        %v3306 = vmul.f32 %v3305, %v3260
        %v3307 = vmul.f32 %v3305, %v3267
        %v3308 = vadd.f32 %v3180, %v3306
        %v3309 = vadd.f32 %v3181, %v3307
        %v3310 = vmul.f32 %v3282, %v3296
        %v3311 = vmul.f32 %v3289, %v3303
        %v3312 = vadd.f32 %v3184, %v3310
        %v3313 = vadd.f32 %v3185, %v3311
        %s3314 = scalar_lea.vmem %s299, 184 [#allocation6]
        %v3315 = vld [vmem:[%s3314] sm:$0xff]
        %v3317 = vunpack.c.l.b16 %v3315
        %v3318 = vunpack.c.h.b16 %v3315
        %v3319 = vpack.c.b16 %v3317, %v3317
        %v3320 = vpack.c.b16 %v3318, %v3318
        %v3322 = vsel %vm375, %v3319, 0
        %v3325 = vsel %vm375, %v3320, 0
        %3327 = vmatprep.subr.bf16.mxu0 %v3325
        %3328 = vmatpush1.bf16.msra.mxu0 %v3322
        %3329 = vmatprep.subr.bf16.mxu0 0
        %3330 = vmatpush1.bf16.msra.mxu0 0
        %3331 = vmatprep.subr.bf16.mxu0 0
        %3332 = vmatpush1.bf16.msra.mxu0 0
        %3333 = vmatprep.subr.bf16.mxu0 0
        %3334 = vmatpush1.bf16.msra.mxu0 0
        %3335 = vmatprep.subr.bf16.mxu0 0
        %3336 = vmatpush1.bf16.msra.mxu0 0
        %3337 = vmatprep.subr.bf16.mxu0 0
        %3338 = vmatpush1.bf16.msra.mxu0 0
        %3339 = vmatprep.subr.bf16.mxu0 0
        %3340 = vmatpush1.bf16.msra.mxu0 0
        %3341 = vmatprep.subr.bf16.mxu0 0
        %3342 = vmatpush1.bf16.msra.mxu0 0
        %3343 = vmatprep.subr.bf16.mxu0 0
        %3344 = vmatpush1.bf16.msra.mxu0 0
        %3345 = vmatprep.subr.bf16.mxu0 0
        %3346 = vmatpush1.bf16.msra.mxu0 0
        %3347 = vmatprep.subr.bf16.mxu0 0
        %3348 = vmatpush1.bf16.msra.mxu0 0
        %3349 = vmatprep.subr.bf16.mxu0 0
        %3350 = vmatpush1.bf16.msra.mxu0 0
        %3351 = vmatprep.subr.bf16.mxu0 0
        %3352 = vmatpush1.bf16.msra.mxu0 0
        %3353 = vmatprep.subr.bf16.mxu0 0
        %3354 = vmatpush1.bf16.msra.mxu0 0
        %3355 = vmatprep.subr.bf16.mxu0 0
        %3356 = vmatpush1.bf16.msra.mxu0 0
        %3357 = vmatprep.subr.bf16.mxu0 0
        %3358 = vmatpush1.bf16.msra.mxu0 0
        %3359 = vmatprep.mubr.bf16.mxu0 0
        %3360 = vmatmul.mubr.bf16.gmra.mrb[0].mxu0 %v373
        %v3361 = vpop.f32.mrb[0].mxu0
        %v3362 = vadd.f32 0.0, %v3361
        %v3363 = vpop.f32.mrb[0].mxu0
        %v3364 = vadd.f32 0.0, %v3363
        %v3365 = vpop.f32.mrb[0].mxu0
        %v3366 = vpop.f32.mrb[0].mxu0
        %3367 = vdwg.mxu0
        %v3370 = vrot.slane %v3362, 3
        %v3371 = vrot.slane %v3364, 3
        %v3374 = vmul.f32 %v3362, %v3370
        %v3375 = vmul.f32 %v3364, %v3371
        %v3378 = vrot.slane %v3374, 1
        %v3379 = vrot.slane %v3375, 1
        %v3382 = vsel %vm437, %v3378, 0.0
        %v3383 = vrot.slane %v3382, 4
        %v3384 = vadd.f32 %v3382, %v3383
        %v3385 = vrot.slane %v3384, 2
        %v3386 = vadd.f32 %v3384, %v3385
        %v3387 = vrot.slane %v3386, 1
        %v3388 = vadd.f32 %v3386, %v3387
        %v3389 = vsel %vm437, %v3379, 0.0
        %v3390 = vrot.slane %v3389, 4
        %v3391 = vadd.f32 %v3389, %v3390
        %v3392 = vrot.slane %v3391, 2
        %v3393 = vadd.f32 %v3391, %v3392
        %v3394 = vrot.slane %v3393, 1
        %v3395 = vadd.f32 %v3393, %v3394
        %v3396 = vmul.f32 %v3362, %v3362
        %v3397 = vmul.f32 %v3364, %v3364
        %v3400 = vrot.slane %v3396, 1
        %v3401 = vrot.slane %v3397, 1
        %v3404 = vsel %vm437, %v3400, 0.0
        %v3405 = vrot.slane %v3404, 4
        %v3406 = vadd.f32 %v3404, %v3405
        %v3407 = vrot.slane %v3406, 2
        %v3408 = vadd.f32 %v3406, %v3407
        %v3409 = vrot.slane %v3408, 1
        %v3410 = vadd.f32 %v3408, %v3409
        %v3411 = vsel %vm437, %v3401, 0.0
        %v3412 = vrot.slane %v3411, 4
        %v3413 = vadd.f32 %v3411, %v3412
        %v3414 = vrot.slane %v3413, 2
        %v3415 = vadd.f32 %v3413, %v3414
        %v3416 = vrot.slane %v3415, 1
        %v3417 = vadd.f32 %v3415, %v3416
        %v3418 = vsel %vm437, %v3396, 0.0
        %v3419 = vrot.slane %v3418, 4
        %v3420 = vadd.f32 %v3418, %v3419
        %v3421 = vrot.slane %v3420, 2
        %v3422 = vadd.f32 %v3420, %v3421
        %v3423 = vrot.slane %v3422, 1
        %v3424 = vadd.f32 %v3422, %v3423
        %v3425 = vsel %vm437, %v3397, 0.0
        %v3426 = vrot.slane %v3425, 4
        %v3427 = vadd.f32 %v3425, %v3426
        %v3428 = vrot.slane %v3427, 2
        %v3429 = vadd.f32 %v3427, %v3428
        %v3430 = vrot.slane %v3429, 1
        %v3431 = vadd.f32 %v3429, %v3430
        %s3432 = sld [smem:[#allocation9 + $0x17]]
        %v3433 = vstv %s3432
        %v3434 = vmul.f32 %v3433, %v3388
        %v3435 = vmul.f32 %v3433, %v3395
        %v3436 = vadd.f32 %v3308, %v3434
        %v3437 = vadd.f32 %v3309, %v3435
        %v3438 = vmul.f32 %v3410, %v3424
        %v3439 = vmul.f32 %v3417, %v3431
        %v3440 = vadd.f32 %v3312, %v3438
        %v3441 = vadd.f32 %v3313, %v3439
        %s3442 = scalar_lea.vmem %s299, 192 [#allocation6]
        %v3443 = vld [vmem:[%s3442] sm:$0xff]
        %v3445 = vunpack.c.l.b16 %v3443
        %v3446 = vunpack.c.h.b16 %v3443
        %v3447 = vpack.c.b16 %v3445, %v3445
        %v3448 = vpack.c.b16 %v3446, %v3446
        %v3450 = vsel %vm375, %v3447, 0
        %v3453 = vsel %vm375, %v3448, 0
        %3455 = vmatprep.subr.bf16.mxu0 %v3453
        %3456 = vmatpush1.bf16.msra.mxu0 %v3450
        %3457 = vmatprep.subr.bf16.mxu0 0
        %3458 = vmatpush1.bf16.msra.mxu0 0
        %3459 = vmatprep.subr.bf16.mxu0 0
        %3460 = vmatpush1.bf16.msra.mxu0 0
        %3461 = vmatprep.subr.bf16.mxu0 0
        %3462 = vmatpush1.bf16.msra.mxu0 0
        %3463 = vmatprep.subr.bf16.mxu0 0
        %3464 = vmatpush1.bf16.msra.mxu0 0
        %3465 = vmatprep.subr.bf16.mxu0 0
        %3466 = vmatpush1.bf16.msra.mxu0 0
        %3467 = vmatprep.subr.bf16.mxu0 0
        %3468 = vmatpush1.bf16.msra.mxu0 0
        %3469 = vmatprep.subr.bf16.mxu0 0
        %3470 = vmatpush1.bf16.msra.mxu0 0
        %3471 = vmatprep.subr.bf16.mxu0 0
        %3472 = vmatpush1.bf16.msra.mxu0 0
        %3473 = vmatprep.subr.bf16.mxu0 0
        %3474 = vmatpush1.bf16.msra.mxu0 0
        %3475 = vmatprep.subr.bf16.mxu0 0
        %3476 = vmatpush1.bf16.msra.mxu0 0
        %3477 = vmatprep.subr.bf16.mxu0 0
        %3478 = vmatpush1.bf16.msra.mxu0 0
        %3479 = vmatprep.subr.bf16.mxu0 0
        %3480 = vmatpush1.bf16.msra.mxu0 0
        %3481 = vmatprep.subr.bf16.mxu0 0
        %3482 = vmatpush1.bf16.msra.mxu0 0
        %3483 = vmatprep.subr.bf16.mxu0 0
        %3484 = vmatpush1.bf16.msra.mxu0 0
        %3485 = vmatprep.subr.bf16.mxu0 0
        %3486 = vmatpush1.bf16.msra.mxu0 0
        %3487 = vmatprep.mubr.bf16.mxu0 0
        %3488 = vmatmul.mubr.bf16.gmra.mrb[0].mxu0 %v373
        %v3489 = vpop.f32.mrb[0].mxu0
        %v3490 = vadd.f32 0.0, %v3489
        %v3491 = vpop.f32.mrb[0].mxu0
        %v3492 = vadd.f32 0.0, %v3491
        %v3493 = vpop.f32.mrb[0].mxu0
        %v3494 = vpop.f32.mrb[0].mxu0
        %3495 = vdwg.mxu0
        %v3498 = vrot.slane %v3490, 3
        %v3499 = vrot.slane %v3492, 3
        %v3502 = vmul.f32 %v3490, %v3498
        %v3503 = vmul.f32 %v3492, %v3499
        %v3506 = vrot.slane %v3502, 1
        %v3507 = vrot.slane %v3503, 1
        %v3510 = vsel %vm437, %v3506, 0.0
        %v3511 = vrot.slane %v3510, 4
        %v3512 = vadd.f32 %v3510, %v3511
        %v3513 = vrot.slane %v3512, 2
        %v3514 = vadd.f32 %v3512, %v3513
        %v3515 = vrot.slane %v3514, 1
        %v3516 = vadd.f32 %v3514, %v3515
        %v3517 = vsel %vm437, %v3507, 0.0
        %v3518 = vrot.slane %v3517, 4
        %v3519 = vadd.f32 %v3517, %v3518
        %v3520 = vrot.slane %v3519, 2
        %v3521 = vadd.f32 %v3519, %v3520
        %v3522 = vrot.slane %v3521, 1
        %v3523 = vadd.f32 %v3521, %v3522
        %v3524 = vmul.f32 %v3490, %v3490
        %v3525 = vmul.f32 %v3492, %v3492
        %v3528 = vrot.slane %v3524, 1
        %v3529 = vrot.slane %v3525, 1
        %v3532 = vsel %vm437, %v3528, 0.0
        %v3533 = vrot.slane %v3532, 4
        %v3534 = vadd.f32 %v3532, %v3533
        %v3535 = vrot.slane %v3534, 2
        %v3536 = vadd.f32 %v3534, %v3535
        %v3537 = vrot.slane %v3536, 1
        %v3538 = vadd.f32 %v3536, %v3537
        %v3539 = vsel %vm437, %v3529, 0.0
        %v3540 = vrot.slane %v3539, 4
        %v3541 = vadd.f32 %v3539, %v3540
        %v3542 = vrot.slane %v3541, 2
        %v3543 = vadd.f32 %v3541, %v3542
        %v3544 = vrot.slane %v3543, 1
        %v3545 = vadd.f32 %v3543, %v3544
        %v3546 = vsel %vm437, %v3524, 0.0
        %v3547 = vrot.slane %v3546, 4
        %v3548 = vadd.f32 %v3546, %v3547
        %v3549 = vrot.slane %v3548, 2
        %v3550 = vadd.f32 %v3548, %v3549
        %v3551 = vrot.slane %v3550, 1
        %v3552 = vadd.f32 %v3550, %v3551
        %v3553 = vsel %vm437, %v3525, 0.0
        %v3554 = vrot.slane %v3553, 4
        %v3555 = vadd.f32 %v3553, %v3554
        %v3556 = vrot.slane %v3555, 2
        %v3557 = vadd.f32 %v3555, %v3556
        %v3558 = vrot.slane %v3557, 1
        %v3559 = vadd.f32 %v3557, %v3558
        %s3560 = sld [smem:[#allocation9 + $0x18]]
        %v3561 = vstv %s3560
        %v3562 = vmul.f32 %v3561, %v3516
        %v3563 = vmul.f32 %v3561, %v3523
        %v3564 = vadd.f32 %v3436, %v3562
        %v3565 = vadd.f32 %v3437, %v3563
        %v3566 = vmul.f32 %v3538, %v3552
        %v3567 = vmul.f32 %v3545, %v3559
        %v3568 = vadd.f32 %v3440, %v3566
        %v3569 = vadd.f32 %v3441, %v3567
        %s3570 = scalar_lea.vmem %s299, 200 [#allocation6]
        %v3571 = vld [vmem:[%s3570] sm:$0xff]
        %v3573 = vunpack.c.l.b16 %v3571
        %v3574 = vunpack.c.h.b16 %v3571
        %v3575 = vpack.c.b16 %v3573, %v3573
        %v3576 = vpack.c.b16 %v3574, %v3574
        %v3578 = vsel %vm375, %v3575, 0
        %v3581 = vsel %vm375, %v3576, 0
        %3583 = vmatprep.subr.bf16.mxu0 %v3581
        %3584 = vmatpush1.bf16.msra.mxu0 %v3578
        %3585 = vmatprep.subr.bf16.mxu0 0
        %3586 = vmatpush1.bf16.msra.mxu0 0
        %3587 = vmatprep.subr.bf16.mxu0 0
        %3588 = vmatpush1.bf16.msra.mxu0 0
        %3589 = vmatprep.subr.bf16.mxu0 0
        %3590 = vmatpush1.bf16.msra.mxu0 0
        %3591 = vmatprep.subr.bf16.mxu0 0
        %3592 = vmatpush1.bf16.msra.mxu0 0
        %3593 = vmatprep.subr.bf16.mxu0 0
        %3594 = vmatpush1.bf16.msra.mxu0 0
        %3595 = vmatprep.subr.bf16.mxu0 0
        %3596 = vmatpush1.bf16.msra.mxu0 0
        %3597 = vmatprep.subr.bf16.mxu0 0
        %3598 = vmatpush1.bf16.msra.mxu0 0
        %3599 = vmatprep.subr.bf16.mxu0 0
        %3600 = vmatpush1.bf16.msra.mxu0 0
        %3601 = vmatprep.subr.bf16.mxu0 0
        %3602 = vmatpush1.bf16.msra.mxu0 0
        %3603 = vmatprep.subr.bf16.mxu0 0
        %3604 = vmatpush1.bf16.msra.mxu0 0
        %3605 = vmatprep.subr.bf16.mxu0 0
        %3606 = vmatpush1.bf16.msra.mxu0 0
        %3607 = vmatprep.subr.bf16.mxu0 0
        %3608 = vmatpush1.bf16.msra.mxu0 0
        %3609 = vmatprep.subr.bf16.mxu0 0
        %3610 = vmatpush1.bf16.msra.mxu0 0
        %3611 = vmatprep.subr.bf16.mxu0 0
        %3612 = vmatpush1.bf16.msra.mxu0 0
        %3613 = vmatprep.subr.bf16.mxu0 0
        %3614 = vmatpush1.bf16.msra.mxu0 0
        %3615 = vmatprep.mubr.bf16.mxu0 0
        %3616 = vmatmul.mubr.bf16.gmra.mrb[0].mxu0 %v373
        %v3617 = vpop.f32.mrb[0].mxu0
        %v3618 = vadd.f32 0.0, %v3617
        %v3619 = vpop.f32.mrb[0].mxu0
        %v3620 = vadd.f32 0.0, %v3619
        %v3621 = vpop.f32.mrb[0].mxu0
        %v3622 = vpop.f32.mrb[0].mxu0
        %3623 = vdwg.mxu0
        %v3626 = vrot.slane %v3618, 3
        %v3627 = vrot.slane %v3620, 3
        %v3630 = vmul.f32 %v3618, %v3626
        %v3631 = vmul.f32 %v3620, %v3627
        %v3634 = vrot.slane %v3630, 1
        %v3635 = vrot.slane %v3631, 1
        %v3638 = vsel %vm437, %v3634, 0.0
        %v3639 = vrot.slane %v3638, 4
        %v3640 = vadd.f32 %v3638, %v3639
        %v3641 = vrot.slane %v3640, 2
        %v3642 = vadd.f32 %v3640, %v3641
        %v3643 = vrot.slane %v3642, 1
        %v3644 = vadd.f32 %v3642, %v3643
        %v3645 = vsel %vm437, %v3635, 0.0
        %v3646 = vrot.slane %v3645, 4
        %v3647 = vadd.f32 %v3645, %v3646
        %v3648 = vrot.slane %v3647, 2
        %v3649 = vadd.f32 %v3647, %v3648
        %v3650 = vrot.slane %v3649, 1
        %v3651 = vadd.f32 %v3649, %v3650
        %v3652 = vmul.f32 %v3618, %v3618
        %v3653 = vmul.f32 %v3620, %v3620
        %v3656 = vrot.slane %v3652, 1
        %v3657 = vrot.slane %v3653, 1
        %v3660 = vsel %vm437, %v3656, 0.0
        %v3661 = vrot.slane %v3660, 4
        %v3662 = vadd.f32 %v3660, %v3661
        %v3663 = vrot.slane %v3662, 2
        %v3664 = vadd.f32 %v3662, %v3663
        %v3665 = vrot.slane %v3664, 1
        %v3666 = vadd.f32 %v3664, %v3665
        %v3667 = vsel %vm437, %v3657, 0.0
        %v3668 = vrot.slane %v3667, 4
        %v3669 = vadd.f32 %v3667, %v3668
        %v3670 = vrot.slane %v3669, 2
        %v3671 = vadd.f32 %v3669, %v3670
        %v3672 = vrot.slane %v3671, 1
        %v3673 = vadd.f32 %v3671, %v3672
        %v3674 = vsel %vm437, %v3652, 0.0
        %v3675 = vrot.slane %v3674, 4
        %v3676 = vadd.f32 %v3674, %v3675
        %v3677 = vrot.slane %v3676, 2
        %v3678 = vadd.f32 %v3676, %v3677
        %v3679 = vrot.slane %v3678, 1
        %v3680 = vadd.f32 %v3678, %v3679
        %v3681 = vsel %vm437, %v3653, 0.0
        %v3682 = vrot.slane %v3681, 4
        %v3683 = vadd.f32 %v3681, %v3682
        %v3684 = vrot.slane %v3683, 2
        %v3685 = vadd.f32 %v3683, %v3684
        %v3686 = vrot.slane %v3685, 1
        %v3687 = vadd.f32 %v3685, %v3686
        %s3688 = sld [smem:[#allocation9 + $0x19]]
        %v3689 = vstv %s3688
        %v3690 = vmul.f32 %v3689, %v3644
        %v3691 = vmul.f32 %v3689, %v3651
        %v3692 = vadd.f32 %v3564, %v3690
        %v3693 = vadd.f32 %v3565, %v3691
        %v3694 = vmul.f32 %v3666, %v3680
        %v3695 = vmul.f32 %v3673, %v3687
        %v3696 = vadd.f32 %v3568, %v3694
        %v3697 = vadd.f32 %v3569, %v3695
        %s3698 = scalar_lea.vmem %s299, 208 [#allocation6]
        %v3699 = vld [vmem:[%s3698] sm:$0xff]
        %v3701 = vunpack.c.l.b16 %v3699
        %v3702 = vunpack.c.h.b16 %v3699
        %v3703 = vpack.c.b16 %v3701, %v3701
        %v3704 = vpack.c.b16 %v3702, %v3702
        %v3706 = vsel %vm375, %v3703, 0
        %v3709 = vsel %vm375, %v3704, 0
        %3711 = vmatprep.subr.bf16.mxu0 %v3709
        %3712 = vmatpush1.bf16.msra.mxu0 %v3706
        %3713 = vmatprep.subr.bf16.mxu0 0
        %3714 = vmatpush1.bf16.msra.mxu0 0
        %3715 = vmatprep.subr.bf16.mxu0 0
        %3716 = vmatpush1.bf16.msra.mxu0 0
        %3717 = vmatprep.subr.bf16.mxu0 0
        %3718 = vmatpush1.bf16.msra.mxu0 0
        %3719 = vmatprep.subr.bf16.mxu0 0
        %3720 = vmatpush1.bf16.msra.mxu0 0
        %3721 = vmatprep.subr.bf16.mxu0 0
        %3722 = vmatpush1.bf16.msra.mxu0 0
        %3723 = vmatprep.subr.bf16.mxu0 0
        %3724 = vmatpush1.bf16.msra.mxu0 0
        %3725 = vmatprep.subr.bf16.mxu0 0
        %3726 = vmatpush1.bf16.msra.mxu0 0
        %3727 = vmatprep.subr.bf16.mxu0 0
        %3728 = vmatpush1.bf16.msra.mxu0 0
        %3729 = vmatprep.subr.bf16.mxu0 0
        %3730 = vmatpush1.bf16.msra.mxu0 0
        %3731 = vmatprep.subr.bf16.mxu0 0
        %3732 = vmatpush1.bf16.msra.mxu0 0
        %3733 = vmatprep.subr.bf16.mxu0 0
        %3734 = vmatpush1.bf16.msra.mxu0 0
        %3735 = vmatprep.subr.bf16.mxu0 0
        %3736 = vmatpush1.bf16.msra.mxu0 0
        %3737 = vmatprep.subr.bf16.mxu0 0
        %3738 = vmatpush1.bf16.msra.mxu0 0
        %3739 = vmatprep.subr.bf16.mxu0 0
        %3740 = vmatpush1.bf16.msra.mxu0 0
        %3741 = vmatprep.subr.bf16.mxu0 0
        %3742 = vmatpush1.bf16.msra.mxu0 0
        %3743 = vmatprep.mubr.bf16.mxu0 0
        %3744 = vmatmul.mubr.bf16.gmra.mrb[0].mxu0 %v373
        %v3745 = vpop.f32.mrb[0].mxu0
        %v3746 = vadd.f32 0.0, %v3745
        %v3747 = vpop.f32.mrb[0].mxu0
        %v3748 = vadd.f32 0.0, %v3747
        %v3749 = vpop.f32.mrb[0].mxu0
        %v3750 = vpop.f32.mrb[0].mxu0
        %3751 = vdwg.mxu0
        %v3754 = vrot.slane %v3746, 3
        %v3755 = vrot.slane %v3748, 3
        %v3758 = vmul.f32 %v3746, %v3754
        %v3759 = vmul.f32 %v3748, %v3755
        %v3762 = vrot.slane %v3758, 1
        %v3763 = vrot.slane %v3759, 1
        %v3766 = vsel %vm437, %v3762, 0.0
        %v3767 = vrot.slane %v3766, 4
        %v3768 = vadd.f32 %v3766, %v3767
        %v3769 = vrot.slane %v3768, 2
        %v3770 = vadd.f32 %v3768, %v3769
        %v3771 = vrot.slane %v3770, 1
        %v3772 = vadd.f32 %v3770, %v3771
        %v3773 = vsel %vm437, %v3763, 0.0
        %v3774 = vrot.slane %v3773, 4
        %v3775 = vadd.f32 %v3773, %v3774
        %v3776 = vrot.slane %v3775, 2
        %v3777 = vadd.f32 %v3775, %v3776
        %v3778 = vrot.slane %v3777, 1
        %v3779 = vadd.f32 %v3777, %v3778
        %v3780 = vmul.f32 %v3746, %v3746
        %v3781 = vmul.f32 %v3748, %v3748
        %v3784 = vrot.slane %v3780, 1
        %v3785 = vrot.slane %v3781, 1
        %v3788 = vsel %vm437, %v3784, 0.0
        %v3789 = vrot.slane %v3788, 4
        %v3790 = vadd.f32 %v3788, %v3789
        %v3791 = vrot.slane %v3790, 2
        %v3792 = vadd.f32 %v3790, %v3791
        %v3793 = vrot.slane %v3792, 1
        %v3794 = vadd.f32 %v3792, %v3793
        %v3795 = vsel %vm437, %v3785, 0.0
        %v3796 = vrot.slane %v3795, 4
        %v3797 = vadd.f32 %v3795, %v3796
        %v3798 = vrot.slane %v3797, 2
        %v3799 = vadd.f32 %v3797, %v3798
        %v3800 = vrot.slane %v3799, 1
        %v3801 = vadd.f32 %v3799, %v3800
        %v3802 = vsel %vm437, %v3780, 0.0
        %v3803 = vrot.slane %v3802, 4
        %v3804 = vadd.f32 %v3802, %v3803
        %v3805 = vrot.slane %v3804, 2
        %v3806 = vadd.f32 %v3804, %v3805
        %v3807 = vrot.slane %v3806, 1
        %v3808 = vadd.f32 %v3806, %v3807
        %v3809 = vsel %vm437, %v3781, 0.0
        %v3810 = vrot.slane %v3809, 4
        %v3811 = vadd.f32 %v3809, %v3810
        %v3812 = vrot.slane %v3811, 2
        %v3813 = vadd.f32 %v3811, %v3812
        %v3814 = vrot.slane %v3813, 1
        %v3815 = vadd.f32 %v3813, %v3814
        %s3816 = sld [smem:[#allocation9 + $0x1a]]
        %v3817 = vstv %s3816
        %v3818 = vmul.f32 %v3817, %v3772
        %v3819 = vmul.f32 %v3817, %v3779
        %v3820 = vadd.f32 %v3692, %v3818
        %v3821 = vadd.f32 %v3693, %v3819
        %v3822 = vmul.f32 %v3794, %v3808
        %v3823 = vmul.f32 %v3801, %v3815
        %v3824 = vadd.f32 %v3696, %v3822
        %v3825 = vadd.f32 %v3697, %v3823
        %s3826 = scalar_lea.vmem %s299, 216 [#allocation6]
        %v3827 = vld [vmem:[%s3826] sm:$0xff]
        %v3829 = vunpack.c.l.b16 %v3827
        %v3830 = vunpack.c.h.b16 %v3827
        %v3831 = vpack.c.b16 %v3829, %v3829
        %v3832 = vpack.c.b16 %v3830, %v3830
        %v3834 = vsel %vm375, %v3831, 0
        %v3837 = vsel %vm375, %v3832, 0
        %3839 = vmatprep.subr.bf16.mxu0 %v3837
        %3840 = vmatpush1.bf16.msra.mxu0 %v3834
        %3841 = vmatprep.subr.bf16.mxu0 0
        %3842 = vmatpush1.bf16.msra.mxu0 0
        %3843 = vmatprep.subr.bf16.mxu0 0
        %3844 = vmatpush1.bf16.msra.mxu0 0
        %3845 = vmatprep.subr.bf16.mxu0 0
        %3846 = vmatpush1.bf16.msra.mxu0 0
        %3847 = vmatprep.subr.bf16.mxu0 0
        %3848 = vmatpush1.bf16.msra.mxu0 0
        %3849 = vmatprep.subr.bf16.mxu0 0
        %3850 = vmatpush1.bf16.msra.mxu0 0
        %3851 = vmatprep.subr.bf16.mxu0 0
        %3852 = vmatpush1.bf16.msra.mxu0 0
        %3853 = vmatprep.subr.bf16.mxu0 0
        %3854 = vmatpush1.bf16.msra.mxu0 0
        %3855 = vmatprep.subr.bf16.mxu0 0
        %3856 = vmatpush1.bf16.msra.mxu0 0
        %3857 = vmatprep.subr.bf16.mxu0 0
        %3858 = vmatpush1.bf16.msra.mxu0 0
        %3859 = vmatprep.subr.bf16.mxu0 0
        %3860 = vmatpush1.bf16.msra.mxu0 0
        %3861 = vmatprep.subr.bf16.mxu0 0
        %3862 = vmatpush1.bf16.msra.mxu0 0
        %3863 = vmatprep.subr.bf16.mxu0 0
        %3864 = vmatpush1.bf16.msra.mxu0 0
        %3865 = vmatprep.subr.bf16.mxu0 0
        %3866 = vmatpush1.bf16.msra.mxu0 0
        %3867 = vmatprep.subr.bf16.mxu0 0
        %3868 = vmatpush1.bf16.msra.mxu0 0
        %3869 = vmatprep.subr.bf16.mxu0 0
        %3870 = vmatpush1.bf16.msra.mxu0 0
        %3871 = vmatprep.mubr.bf16.mxu0 0
        %3872 = vmatmul.mubr.bf16.gmra.mrb[0].mxu0 %v373
        %v3873 = vpop.f32.mrb[0].mxu0
        %v3874 = vadd.f32 0.0, %v3873
        %v3875 = vpop.f32.mrb[0].mxu0
        %v3876 = vadd.f32 0.0, %v3875
        %v3877 = vpop.f32.mrb[0].mxu0
        %v3878 = vpop.f32.mrb[0].mxu0
        %3879 = vdwg.mxu0
        %v3882 = vrot.slane %v3874, 3
        %v3883 = vrot.slane %v3876, 3
        %v3886 = vmul.f32 %v3874, %v3882
        %v3887 = vmul.f32 %v3876, %v3883
        %v3890 = vrot.slane %v3886, 1
        %v3891 = vrot.slane %v3887, 1
        %v3894 = vsel %vm437, %v3890, 0.0
        %v3895 = vrot.slane %v3894, 4
        %v3896 = vadd.f32 %v3894, %v3895
        %v3897 = vrot.slane %v3896, 2
        %v3898 = vadd.f32 %v3896, %v3897
        %v3899 = vrot.slane %v3898, 1
        %v3900 = vadd.f32 %v3898, %v3899
        %v3901 = vsel %vm437, %v3891, 0.0
        %v3902 = vrot.slane %v3901, 4
        %v3903 = vadd.f32 %v3901, %v3902
        %v3904 = vrot.slane %v3903, 2
        %v3905 = vadd.f32 %v3903, %v3904
        %v3906 = vrot.slane %v3905, 1
        %v3907 = vadd.f32 %v3905, %v3906
        %v3908 = vmul.f32 %v3874, %v3874
        %v3909 = vmul.f32 %v3876, %v3876
        %v3912 = vrot.slane %v3908, 1
        %v3913 = vrot.slane %v3909, 1
        %v3916 = vsel %vm437, %v3912, 0.0
        %v3917 = vrot.slane %v3916, 4
        %v3918 = vadd.f32 %v3916, %v3917
        %v3919 = vrot.slane %v3918, 2
        %v3920 = vadd.f32 %v3918, %v3919
        %v3921 = vrot.slane %v3920, 1
        %v3922 = vadd.f32 %v3920, %v3921
        %v3923 = vsel %vm437, %v3913, 0.0
        %v3924 = vrot.slane %v3923, 4
        %v3925 = vadd.f32 %v3923, %v3924
        %v3926 = vrot.slane %v3925, 2
        %v3927 = vadd.f32 %v3925, %v3926
        %v3928 = vrot.slane %v3927, 1
        %v3929 = vadd.f32 %v3927, %v3928
        %v3930 = vsel %vm437, %v3908, 0.0
        %v3931 = vrot.slane %v3930, 4
        %v3932 = vadd.f32 %v3930, %v3931
        %v3933 = vrot.slane %v3932, 2
        %v3934 = vadd.f32 %v3932, %v3933
        %v3935 = vrot.slane %v3934, 1
        %v3936 = vadd.f32 %v3934, %v3935
        %v3937 = vsel %vm437, %v3909, 0.0
        %v3938 = vrot.slane %v3937, 4
        %v3939 = vadd.f32 %v3937, %v3938
        %v3940 = vrot.slane %v3939, 2
        %v3941 = vadd.f32 %v3939, %v3940
        %v3942 = vrot.slane %v3941, 1
        %v3943 = vadd.f32 %v3941, %v3942
        %s3944 = sld [smem:[#allocation9 + $0x1b]]
        %v3945 = vstv %s3944
        %v3946 = vmul.f32 %v3945, %v3900
        %v3947 = vmul.f32 %v3945, %v3907
        %v3948 = vadd.f32 %v3820, %v3946
        %v3949 = vadd.f32 %v3821, %v3947
        %v3950 = vmul.f32 %v3922, %v3936
        %v3951 = vmul.f32 %v3929, %v3943
        %v3952 = vadd.f32 %v3824, %v3950
        %v3953 = vadd.f32 %v3825, %v3951
        %s3954 = scalar_lea.vmem %s299, 224 [#allocation6]
        %v3955 = vld [vmem:[%s3954] sm:$0xff]
        %v3957 = vunpack.c.l.b16 %v3955
        %v3958 = vunpack.c.h.b16 %v3955
        %v3959 = vpack.c.b16 %v3957, %v3957
        %v3960 = vpack.c.b16 %v3958, %v3958
        %v3962 = vsel %vm375, %v3959, 0
        %v3965 = vsel %vm375, %v3960, 0
        %3967 = vmatprep.subr.bf16.mxu0 %v3965
        %3968 = vmatpush1.bf16.msra.mxu0 %v3962
        %3969 = vmatprep.subr.bf16.mxu0 0
        %3970 = vmatpush1.bf16.msra.mxu0 0
        %3971 = vmatprep.subr.bf16.mxu0 0
        %3972 = vmatpush1.bf16.msra.mxu0 0
        %3973 = vmatprep.subr.bf16.mxu0 0
        %3974 = vmatpush1.bf16.msra.mxu0 0
        %3975 = vmatprep.subr.bf16.mxu0 0
        %3976 = vmatpush1.bf16.msra.mxu0 0
        %3977 = vmatprep.subr.bf16.mxu0 0
        %3978 = vmatpush1.bf16.msra.mxu0 0
        %3979 = vmatprep.subr.bf16.mxu0 0
        %3980 = vmatpush1.bf16.msra.mxu0 0
        %3981 = vmatprep.subr.bf16.mxu0 0
        %3982 = vmatpush1.bf16.msra.mxu0 0
        %3983 = vmatprep.subr.bf16.mxu0 0
        %3984 = vmatpush1.bf16.msra.mxu0 0
        %3985 = vmatprep.subr.bf16.mxu0 0
        %3986 = vmatpush1.bf16.msra.mxu0 0
        %3987 = vmatprep.subr.bf16.mxu0 0
        %3988 = vmatpush1.bf16.msra.mxu0 0
        %3989 = vmatprep.subr.bf16.mxu0 0
        %3990 = vmatpush1.bf16.msra.mxu0 0
        %3991 = vmatprep.subr.bf16.mxu0 0
        %3992 = vmatpush1.bf16.msra.mxu0 0
        %3993 = vmatprep.subr.bf16.mxu0 0
        %3994 = vmatpush1.bf16.msra.mxu0 0
        %3995 = vmatprep.subr.bf16.mxu0 0
        %3996 = vmatpush1.bf16.msra.mxu0 0
        %3997 = vmatprep.subr.bf16.mxu0 0
        %3998 = vmatpush1.bf16.msra.mxu0 0
        %3999 = vmatprep.mubr.bf16.mxu0 0
        %4000 = vmatmul.mubr.bf16.gmra.mrb[0].mxu0 %v373
        %v4001 = vpop.f32.mrb[0].mxu0
        %v4002 = vadd.f32 0.0, %v4001
        %v4003 = vpop.f32.mrb[0].mxu0
        %v4004 = vadd.f32 0.0, %v4003
        %v4005 = vpop.f32.mrb[0].mxu0
        %v4006 = vpop.f32.mrb[0].mxu0
        %4007 = vdwg.mxu0
        %v4010 = vrot.slane %v4002, 3
        %v4011 = vrot.slane %v4004, 3
        %v4014 = vmul.f32 %v4002, %v4010
        %v4015 = vmul.f32 %v4004, %v4011
        %v4018 = vrot.slane %v4014, 1
        %v4019 = vrot.slane %v4015, 1
        %v4022 = vsel %vm437, %v4018, 0.0
        %v4023 = vrot.slane %v4022, 4
        %v4024 = vadd.f32 %v4022, %v4023
        %v4025 = vrot.slane %v4024, 2
        %v4026 = vadd.f32 %v4024, %v4025
        %v4027 = vrot.slane %v4026, 1
        %v4028 = vadd.f32 %v4026, %v4027
        %v4029 = vsel %vm437, %v4019, 0.0
        %v4030 = vrot.slane %v4029, 4
        %v4031 = vadd.f32 %v4029, %v4030
        %v4032 = vrot.slane %v4031, 2
        %v4033 = vadd.f32 %v4031, %v4032
        %v4034 = vrot.slane %v4033, 1
        %v4035 = vadd.f32 %v4033, %v4034
        %v4036 = vmul.f32 %v4002, %v4002
        %v4037 = vmul.f32 %v4004, %v4004
        %v4040 = vrot.slane %v4036, 1
        %v4041 = vrot.slane %v4037, 1
        %v4044 = vsel %vm437, %v4040, 0.0
        %v4045 = vrot.slane %v4044, 4
        %v4046 = vadd.f32 %v4044, %v4045
        %v4047 = vrot.slane %v4046, 2
        %v4048 = vadd.f32 %v4046, %v4047
        %v4049 = vrot.slane %v4048, 1
        %v4050 = vadd.f32 %v4048, %v4049
        %v4051 = vsel %vm437, %v4041, 0.0
        %v4052 = vrot.slane %v4051, 4
        %v4053 = vadd.f32 %v4051, %v4052
        %v4054 = vrot.slane %v4053, 2
        %v4055 = vadd.f32 %v4053, %v4054
        %v4056 = vrot.slane %v4055, 1
        %v4057 = vadd.f32 %v4055, %v4056
        %v4058 = vsel %vm437, %v4036, 0.0
        %v4059 = vrot.slane %v4058, 4
        %v4060 = vadd.f32 %v4058, %v4059
        %v4061 = vrot.slane %v4060, 2
        %v4062 = vadd.f32 %v4060, %v4061
        %v4063 = vrot.slane %v4062, 1
        %v4064 = vadd.f32 %v4062, %v4063
        %v4065 = vsel %vm437, %v4037, 0.0
        %v4066 = vrot.slane %v4065, 4
        %v4067 = vadd.f32 %v4065, %v4066
        %v4068 = vrot.slane %v4067, 2
        %v4069 = vadd.f32 %v4067, %v4068
        %v4070 = vrot.slane %v4069, 1
        %v4071 = vadd.f32 %v4069, %v4070
        %s4072 = sld [smem:[#allocation9 + $0x1c]]
        %v4073 = vstv %s4072
        %v4074 = vmul.f32 %v4073, %v4028
        %v4075 = vmul.f32 %v4073, %v4035
        %v4076 = vadd.f32 %v3948, %v4074
        %v4077 = vadd.f32 %v3949, %v4075
        %v4078 = vmul.f32 %v4050, %v4064
        %v4079 = vmul.f32 %v4057, %v4071
        %v4080 = vadd.f32 %v3952, %v4078
        %v4081 = vadd.f32 %v3953, %v4079
        %s4082 = scalar_lea.vmem %s299, 232 [#allocation6]
        %v4083 = vld [vmem:[%s4082] sm:$0xff]
        %v4085 = vunpack.c.l.b16 %v4083
        %v4086 = vunpack.c.h.b16 %v4083
        %v4087 = vpack.c.b16 %v4085, %v4085
        %v4088 = vpack.c.b16 %v4086, %v4086
        %v4090 = vsel %vm375, %v4087, 0
        %v4093 = vsel %vm375, %v4088, 0
        %4095 = vmatprep.subr.bf16.mxu0 %v4093
        %4096 = vmatpush1.bf16.msra.mxu0 %v4090
        %4097 = vmatprep.subr.bf16.mxu0 0
        %4098 = vmatpush1.bf16.msra.mxu0 0
        %4099 = vmatprep.subr.bf16.mxu0 0
        %4100 = vmatpush1.bf16.msra.mxu0 0
        %4101 = vmatprep.subr.bf16.mxu0 0
        %4102 = vmatpush1.bf16.msra.mxu0 0
        %4103 = vmatprep.subr.bf16.mxu0 0
        %4104 = vmatpush1.bf16.msra.mxu0 0
        %4105 = vmatprep.subr.bf16.mxu0 0
        %4106 = vmatpush1.bf16.msra.mxu0 0
        %4107 = vmatprep.subr.bf16.mxu0 0
        %4108 = vmatpush1.bf16.msra.mxu0 0
        %4109 = vmatprep.subr.bf16.mxu0 0
        %4110 = vmatpush1.bf16.msra.mxu0 0
        %4111 = vmatprep.subr.bf16.mxu0 0
        %4112 = vmatpush1.bf16.msra.mxu0 0
        %4113 = vmatprep.subr.bf16.mxu0 0
        %4114 = vmatpush1.bf16.msra.mxu0 0
        %4115 = vmatprep.subr.bf16.mxu0 0
        %4116 = vmatpush1.bf16.msra.mxu0 0
        %4117 = vmatprep.subr.bf16.mxu0 0
        %4118 = vmatpush1.bf16.msra.mxu0 0
        %4119 = vmatprep.subr.bf16.mxu0 0
        %4120 = vmatpush1.bf16.msra.mxu0 0
        %4121 = vmatprep.subr.bf16.mxu0 0
        %4122 = vmatpush1.bf16.msra.mxu0 0
        %4123 = vmatprep.subr.bf16.mxu0 0
        %4124 = vmatpush1.bf16.msra.mxu0 0
        %4125 = vmatprep.subr.bf16.mxu0 0
        %4126 = vmatpush1.bf16.msra.mxu0 0
        %4127 = vmatprep.mubr.bf16.mxu0 0
        %4128 = vmatmul.mubr.bf16.gmra.mrb[0].mxu0 %v373
        %v4129 = vpop.f32.mrb[0].mxu0
        %v4130 = vadd.f32 0.0, %v4129
        %v4131 = vpop.f32.mrb[0].mxu0
        %v4132 = vadd.f32 0.0, %v4131
        %v4133 = vpop.f32.mrb[0].mxu0
        %v4134 = vpop.f32.mrb[0].mxu0
        %4135 = vdwg.mxu0
        %v4138 = vrot.slane %v4130, 3
        %v4139 = vrot.slane %v4132, 3
        %v4142 = vmul.f32 %v4130, %v4138
        %v4143 = vmul.f32 %v4132, %v4139
        %v4146 = vrot.slane %v4142, 1
        %v4147 = vrot.slane %v4143, 1
        %v4150 = vsel %vm437, %v4146, 0.0
        %v4151 = vrot.slane %v4150, 4
        %v4152 = vadd.f32 %v4150, %v4151
        %v4153 = vrot.slane %v4152, 2
        %v4154 = vadd.f32 %v4152, %v4153
        %v4155 = vrot.slane %v4154, 1
        %v4156 = vadd.f32 %v4154, %v4155
        %v4157 = vsel %vm437, %v4147, 0.0
        %v4158 = vrot.slane %v4157, 4
        %v4159 = vadd.f32 %v4157, %v4158
        %v4160 = vrot.slane %v4159, 2
        %v4161 = vadd.f32 %v4159, %v4160
        %v4162 = vrot.slane %v4161, 1
        %v4163 = vadd.f32 %v4161, %v4162
        %v4164 = vmul.f32 %v4130, %v4130
        %v4165 = vmul.f32 %v4132, %v4132
        %v4168 = vrot.slane %v4164, 1
        %v4169 = vrot.slane %v4165, 1
        %v4172 = vsel %vm437, %v4168, 0.0
        %v4173 = vrot.slane %v4172, 4
        %v4174 = vadd.f32 %v4172, %v4173
        %v4175 = vrot.slane %v4174, 2
        %v4176 = vadd.f32 %v4174, %v4175
        %v4177 = vrot.slane %v4176, 1
        %v4178 = vadd.f32 %v4176, %v4177
        %v4179 = vsel %vm437, %v4169, 0.0
        %v4180 = vrot.slane %v4179, 4
        %v4181 = vadd.f32 %v4179, %v4180
        %v4182 = vrot.slane %v4181, 2
        %v4183 = vadd.f32 %v4181, %v4182
        %v4184 = vrot.slane %v4183, 1
        %v4185 = vadd.f32 %v4183, %v4184
        %v4186 = vsel %vm437, %v4164, 0.0
        %v4187 = vrot.slane %v4186, 4
        %v4188 = vadd.f32 %v4186, %v4187
        %v4189 = vrot.slane %v4188, 2
        %v4190 = vadd.f32 %v4188, %v4189
        %v4191 = vrot.slane %v4190, 1
        %v4192 = vadd.f32 %v4190, %v4191
        %v4193 = vsel %vm437, %v4165, 0.0
        %v4194 = vrot.slane %v4193, 4
        %v4195 = vadd.f32 %v4193, %v4194
        %v4196 = vrot.slane %v4195, 2
        %v4197 = vadd.f32 %v4195, %v4196
        %v4198 = vrot.slane %v4197, 1
        %v4199 = vadd.f32 %v4197, %v4198
        %s4200 = sld [smem:[#allocation9 + $0x1d]]
        %v4201 = vstv %s4200
        %v4202 = vmul.f32 %v4201, %v4156
        %v4203 = vmul.f32 %v4201, %v4163
        %v4204 = vadd.f32 %v4076, %v4202
        %v4205 = vadd.f32 %v4077, %v4203
        %v4206 = vmul.f32 %v4178, %v4192
        %v4207 = vmul.f32 %v4185, %v4199
        %v4208 = vadd.f32 %v4080, %v4206
        %v4209 = vadd.f32 %v4081, %v4207
        %s4210 = scalar_lea.vmem %s299, 240 [#allocation6]
        %v4211 = vld [vmem:[%s4210] sm:$0xff]
        %v4213 = vunpack.c.l.b16 %v4211
        %v4214 = vunpack.c.h.b16 %v4211
        %v4215 = vpack.c.b16 %v4213, %v4213
        %v4216 = vpack.c.b16 %v4214, %v4214
        %v4218 = vsel %vm375, %v4215, 0
        %v4221 = vsel %vm375, %v4216, 0
        %4223 = vmatprep.subr.bf16.mxu0 %v4221
        %4224 = vmatpush1.bf16.msra.mxu0 %v4218
        %4225 = vmatprep.subr.bf16.mxu0 0
        %4226 = vmatpush1.bf16.msra.mxu0 0
        %4227 = vmatprep.subr.bf16.mxu0 0
        %4228 = vmatpush1.bf16.msra.mxu0 0
        %4229 = vmatprep.subr.bf16.mxu0 0
        %4230 = vmatpush1.bf16.msra.mxu0 0
        %4231 = vmatprep.subr.bf16.mxu0 0
        %4232 = vmatpush1.bf16.msra.mxu0 0
        %4233 = vmatprep.subr.bf16.mxu0 0
        %4234 = vmatpush1.bf16.msra.mxu0 0
        %4235 = vmatprep.subr.bf16.mxu0 0
        %4236 = vmatpush1.bf16.msra.mxu0 0
        %4237 = vmatprep.subr.bf16.mxu0 0
        %4238 = vmatpush1.bf16.msra.mxu0 0
        %4239 = vmatprep.subr.bf16.mxu0 0
        %4240 = vmatpush1.bf16.msra.mxu0 0
        %4241 = vmatprep.subr.bf16.mxu0 0
        %4242 = vmatpush1.bf16.msra.mxu0 0
        %4243 = vmatprep.subr.bf16.mxu0 0
        %4244 = vmatpush1.bf16.msra.mxu0 0
        %4245 = vmatprep.subr.bf16.mxu0 0
        %4246 = vmatpush1.bf16.msra.mxu0 0
        %4247 = vmatprep.subr.bf16.mxu0 0
        %4248 = vmatpush1.bf16.msra.mxu0 0
        %4249 = vmatprep.subr.bf16.mxu0 0
        %4250 = vmatpush1.bf16.msra.mxu0 0
        %4251 = vmatprep.subr.bf16.mxu0 0
        %4252 = vmatpush1.bf16.msra.mxu0 0
        %4253 = vmatprep.subr.bf16.mxu0 0
        %4254 = vmatpush1.bf16.msra.mxu0 0
        %4255 = vmatprep.mubr.bf16.mxu0 0
        %4256 = vmatmul.mubr.bf16.gmra.mrb[0].mxu0 %v373
        %v4257 = vpop.f32.mrb[0].mxu0
        %v4258 = vadd.f32 0.0, %v4257
        %v4259 = vpop.f32.mrb[0].mxu0
        %v4260 = vadd.f32 0.0, %v4259
        %v4261 = vpop.f32.mrb[0].mxu0
        %v4262 = vpop.f32.mrb[0].mxu0
        %4263 = vdwg.mxu0
        %v4266 = vrot.slane %v4258, 3
        %v4267 = vrot.slane %v4260, 3
        %v4270 = vmul.f32 %v4258, %v4266
        %v4271 = vmul.f32 %v4260, %v4267
        %v4274 = vrot.slane %v4270, 1
        %v4275 = vrot.slane %v4271, 1
        %v4278 = vsel %vm437, %v4274, 0.0
        %v4279 = vrot.slane %v4278, 4
        %v4280 = vadd.f32 %v4278, %v4279
        %v4281 = vrot.slane %v4280, 2
        %v4282 = vadd.f32 %v4280, %v4281
        %v4283 = vrot.slane %v4282, 1
        %v4284 = vadd.f32 %v4282, %v4283
        %v4285 = vsel %vm437, %v4275, 0.0
        %v4286 = vrot.slane %v4285, 4
        %v4287 = vadd.f32 %v4285, %v4286
        %v4288 = vrot.slane %v4287, 2
        %v4289 = vadd.f32 %v4287, %v4288
        %v4290 = vrot.slane %v4289, 1
        %v4291 = vadd.f32 %v4289, %v4290
        %v4292 = vmul.f32 %v4258, %v4258
        %v4293 = vmul.f32 %v4260, %v4260
        %v4296 = vrot.slane %v4292, 1
        %v4297 = vrot.slane %v4293, 1
        %v4300 = vsel %vm437, %v4296, 0.0
        %v4301 = vrot.slane %v4300, 4
        %v4302 = vadd.f32 %v4300, %v4301
        %v4303 = vrot.slane %v4302, 2
        %v4304 = vadd.f32 %v4302, %v4303
        %v4305 = vrot.slane %v4304, 1
        %v4306 = vadd.f32 %v4304, %v4305
        %v4307 = vsel %vm437, %v4297, 0.0
        %v4308 = vrot.slane %v4307, 4
        %v4309 = vadd.f32 %v4307, %v4308
        %v4310 = vrot.slane %v4309, 2
        %v4311 = vadd.f32 %v4309, %v4310
        %v4312 = vrot.slane %v4311, 1
        %v4313 = vadd.f32 %v4311, %v4312
        %v4314 = vsel %vm437, %v4292, 0.0
        %v4315 = vrot.slane %v4314, 4
        %v4316 = vadd.f32 %v4314, %v4315
        %v4317 = vrot.slane %v4316, 2
        %v4318 = vadd.f32 %v4316, %v4317
        %v4319 = vrot.slane %v4318, 1
        %v4320 = vadd.f32 %v4318, %v4319
        %v4321 = vsel %vm437, %v4293, 0.0
        %v4322 = vrot.slane %v4321, 4
        %v4323 = vadd.f32 %v4321, %v4322
        %v4324 = vrot.slane %v4323, 2
        %v4325 = vadd.f32 %v4323, %v4324
        %v4326 = vrot.slane %v4325, 1
        %v4327 = vadd.f32 %v4325, %v4326
        %s4328 = sld [smem:[#allocation9 + $0x1e]]
        %v4329 = vstv %s4328
        %v4330 = vmul.f32 %v4329, %v4284
        %v4331 = vmul.f32 %v4329, %v4291
        %v4332 = vadd.f32 %v4204, %v4330
        %v4333 = vadd.f32 %v4205, %v4331
        %v4334 = vmul.f32 %v4306, %v4320
        %v4335 = vmul.f32 %v4313, %v4327
        %v4336 = vadd.f32 %v4208, %v4334
        %v4337 = vadd.f32 %v4209, %v4335
        %s4338 = scalar_lea.vmem %s299, 248 [#allocation6]
        %v4339 = vld [vmem:[%s4338] sm:$0xff]
        %v4341 = vunpack.c.l.b16 %v4339
        %v4342 = vunpack.c.h.b16 %v4339
        %v4343 = vpack.c.b16 %v4341, %v4341
        %v4344 = vpack.c.b16 %v4342, %v4342
        %v4346 = vsel %vm375, %v4343, 0
        %v4349 = vsel %vm375, %v4344, 0
        %4351 = vmatprep.subr.bf16.mxu0 %v4349
        %4352 = vmatpush1.bf16.msra.mxu0 %v4346
        %4353 = vmatprep.subr.bf16.mxu0 0
        %4354 = vmatpush1.bf16.msra.mxu0 0
        %4355 = vmatprep.subr.bf16.mxu0 0
        %4356 = vmatpush1.bf16.msra.mxu0 0
        %4357 = vmatprep.subr.bf16.mxu0 0
        %4358 = vmatpush1.bf16.msra.mxu0 0
        %4359 = vmatprep.subr.bf16.mxu0 0
        %4360 = vmatpush1.bf16.msra.mxu0 0
        %4361 = vmatprep.subr.bf16.mxu0 0
        %4362 = vmatpush1.bf16.msra.mxu0 0
        %4363 = vmatprep.subr.bf16.mxu0 0
        %4364 = vmatpush1.bf16.msra.mxu0 0
        %4365 = vmatprep.subr.bf16.mxu0 0
        %4366 = vmatpush1.bf16.msra.mxu0 0
        %4367 = vmatprep.subr.bf16.mxu0 0
        %4368 = vmatpush1.bf16.msra.mxu0 0
        %4369 = vmatprep.subr.bf16.mxu0 0
        %4370 = vmatpush1.bf16.msra.mxu0 0
        %4371 = vmatprep.subr.bf16.mxu0 0
        %4372 = vmatpush1.bf16.msra.mxu0 0
        %4373 = vmatprep.subr.bf16.mxu0 0
        %4374 = vmatpush1.bf16.msra.mxu0 0
        %4375 = vmatprep.subr.bf16.mxu0 0
        %4376 = vmatpush1.bf16.msra.mxu0 0
        %4377 = vmatprep.subr.bf16.mxu0 0
        %4378 = vmatpush1.bf16.msra.mxu0 0
        %4379 = vmatprep.subr.bf16.mxu0 0
        %4380 = vmatpush1.bf16.msra.mxu0 0
        %4381 = vmatprep.subr.bf16.mxu0 0
        %4382 = vmatpush1.bf16.msra.mxu0 0
        %4383 = vmatprep.mubr.bf16.mxu0 0
        %4384 = vmatmul.mubr.bf16.gmra.mrb[0].mxu0 %v373
        %v4385 = vpop.f32.mrb[0].mxu0
        %v4386 = vadd.f32 0.0, %v4385
        %v4387 = vpop.f32.mrb[0].mxu0
        %v4388 = vadd.f32 0.0, %v4387
        %v4389 = vpop.f32.mrb[0].mxu0
        %v4390 = vpop.f32.mrb[0].mxu0
        %4391 = vdwg.mxu0
        %v4394 = vrot.slane %v4386, 3
        %v4395 = vrot.slane %v4388, 3
        %v4398 = vmul.f32 %v4386, %v4394
        %v4399 = vmul.f32 %v4388, %v4395
        %v4402 = vrot.slane %v4398, 1
        %v4403 = vrot.slane %v4399, 1
        %v4406 = vsel %vm437, %v4402, 0.0
        %v4407 = vrot.slane %v4406, 4
        %v4408 = vadd.f32 %v4406, %v4407
        %v4409 = vrot.slane %v4408, 2
        %v4410 = vadd.f32 %v4408, %v4409
        %v4411 = vrot.slane %v4410, 1
        %v4412 = vadd.f32 %v4410, %v4411
        %v4413 = vsel %vm437, %v4403, 0.0
        %v4414 = vrot.slane %v4413, 4
        %v4415 = vadd.f32 %v4413, %v4414
        %v4416 = vrot.slane %v4415, 2
        %v4417 = vadd.f32 %v4415, %v4416
        %v4418 = vrot.slane %v4417, 1
        %v4419 = vadd.f32 %v4417, %v4418
        %v4420 = vmul.f32 %v4386, %v4386
        %v4421 = vmul.f32 %v4388, %v4388
        %v4424 = vrot.slane %v4420, 1
        %v4425 = vrot.slane %v4421, 1
        %v4428 = vsel %vm437, %v4424, 0.0
        %v4429 = vrot.slane %v4428, 4
        %v4430 = vadd.f32 %v4428, %v4429
        %v4431 = vrot.slane %v4430, 2
        %v4432 = vadd.f32 %v4430, %v4431
        %v4433 = vrot.slane %v4432, 1
        %v4434 = vadd.f32 %v4432, %v4433
        %v4435 = vsel %vm437, %v4425, 0.0
        %v4436 = vrot.slane %v4435, 4
        %v4437 = vadd.f32 %v4435, %v4436
        %v4438 = vrot.slane %v4437, 2
        %v4439 = vadd.f32 %v4437, %v4438
        %v4440 = vrot.slane %v4439, 1
        %v4441 = vadd.f32 %v4439, %v4440
        %v4442 = vsel %vm437, %v4420, 0.0
        %v4443 = vrot.slane %v4442, 4
        %v4444 = vadd.f32 %v4442, %v4443
        %v4445 = vrot.slane %v4444, 2
        %v4446 = vadd.f32 %v4444, %v4445
        %v4447 = vrot.slane %v4446, 1
        %v4448 = vadd.f32 %v4446, %v4447
        %v4449 = vsel %vm437, %v4421, 0.0
        %v4450 = vrot.slane %v4449, 4
        %v4451 = vadd.f32 %v4449, %v4450
        %v4452 = vrot.slane %v4451, 2
        %v4453 = vadd.f32 %v4451, %v4452
        %v4454 = vrot.slane %v4453, 1
        %v4455 = vadd.f32 %v4453, %v4454
        %s4456 = sld [smem:[#allocation9 + $0x1f]]
        %v4457 = vstv %s4456
        %v4458 = vmul.f32 %v4457, %v4412
        %v4459 = vmul.f32 %v4457, %v4419
        %v4460 = vadd.f32 %v4332, %v4458
        %v4461 = vadd.f32 %v4333, %v4459
        %v4462 = vmul.f32 %v4434, %v4448
        %v4463 = vmul.f32 %v4441, %v4455
        %v4464 = vadd.f32 %v4336, %v4462
        %v4465 = vadd.f32 %v4337, %v4463
        %v4466 = vld [vmem:[%s308] sm:$0xff]
        %v4467 = vunpack.c.l.bf16 %v4466
        %v4468 = vunpack.c.h.bf16 %v4466
        %v4469 = vrot.slane %v4467, 4
        %v4470 = vadd.f32 %v4467, %v4469
        %v4471 = vrot.slane %v4470, 2
        %v4472 = vadd.f32 %v4470, %v4471
        %v4473 = vrot.slane %v4472, 1
        %v4474 = vadd.f32 %v4472, %v4473
        %v4475 = vrot.slane %v4468, 4
        %v4476 = vadd.f32 %v4468, %v4475
        %v4477 = vrot.slane %v4476, 2
        %v4478 = vadd.f32 %v4476, %v4477
        %v4479 = vrot.slane %v4478, 1
        %v4480 = vadd.f32 %v4478, %v4479
        %v4481 = vmul.f32 %v4467, %v4467
        %v4482 = vmul.f32 %v4468, %v4468
        %v4483 = vrot.slane %v4481, 4
        %v4484 = vadd.f32 %v4481, %v4483
        %v4485 = vrot.slane %v4484, 2
        %v4486 = vadd.f32 %v4484, %v4485
        %v4487 = vrot.slane %v4486, 1
        %v4488 = vadd.f32 %v4486, %v4487
        %v4489 = vrot.slane %v4482, 4
        %v4490 = vadd.f32 %v4482, %v4489
        %v4491 = vrot.slane %v4490, 2
        %v4492 = vadd.f32 %v4490, %v4491
        %v4493 = vrot.slane %v4492, 1
        %v4494 = vadd.f32 %v4492, %v4493
        %v4495 = vstv %s361
        %v4496 = vadd.f32 %v4495, %v4474
        %v4497 = vadd.f32 %v4495, %v4480
        %v4498 = vadd.f32 %v4496, %v4460
        %v4499 = vadd.f32 %v4497, %v4461
        %v4502 = vcombine.low %v4498, %v4499
        %v4504 = vunpack.c.l.s4 1966171168
        %v4505 = vunpack.c.0.s8 %v4504
        %v4506 = vlaneseq
        %v4507 = vshrl.u32 %v4506, 7
        %v4508 = vsub.s32 %v4505, %v4507
        %v4509 = vrot.slane %v4502, %v4508
        %v4511 = vunpack.c.l.s4 1966171168
        %v4512 = vunpack.c.0.s8 %v4511
        %v4513 = vlaneseq
        %v4514 = vshrl.u32 %v4513, 7
        %v4515 = vsub.s32 %v4512, %v4514
        %v4516 = vrot.slane %v4509, %v4515
        %v4518 = vlaneseq
        %vm4519 = vcmp.ge.s32.totalorder %v4518, 0
        %vm4520 = vcmp.lt.s32.totalorder %v4518, 256
        %vm4521 = vmand %vm4519, %vm4520
        %4522 = vst.msk [vmem:[%s348] sm:$0x3] %vm4521, %v4516
        %v4523 = vstv %s362
        %v4524 = vmul.f32 %v4523, %v4488
        %v4525 = vmul.f32 %v4523, %v4494
        %v4526 = vstv %s363
        %v4527 = vmul.f32 %v4526, %v4464
        %v4528 = vmul.f32 %v4526, %v4465
        %v4529 = vadd.f32 %v4524, %v4527
        %v4530 = vadd.f32 %v4525, %v4528
        %v4533 = vcombine.low %v4529, %v4530
        %v4535 = vunpack.c.l.s4 1966171168
        %v4536 = vunpack.c.0.s8 %v4535
        %v4537 = vlaneseq
        %v4538 = vshrl.u32 %v4537, 7
        %v4539 = vsub.s32 %v4536, %v4538
        %v4540 = vrot.slane %v4533, %v4539
        %v4542 = vunpack.c.l.s4 1966171168
        %v4543 = vunpack.c.0.s8 %v4542
        %v4544 = vlaneseq
        %v4545 = vshrl.u32 %v4544, 7
        %v4546 = vsub.s32 %v4543, %v4545
        %v4547 = vrot.slane %v4540, %v4546
        %4549 = vst.msk [vmem:[%s355] sm:$0x3] %vm4521, %v4547
        %s4550 = sand.u32 %s153, 1
        %s4551 = scalar_lea.sflag [#allocation4], %s4550
        %s4552 = sand.u32 %s153, 1
        %s4553 = smul.addr %s4552, 2
        %s4554 = scalar_lea.vmem [#allocation12], %s4553
        %s4555 = sand.u32 %s179, 1
        %s4556 = scalar_lea.sflag [#allocation14], %s4555
        %s4557 = sand.u32 %s179, 1
        %s4558 = smul.addr %s4557, 2
        %s4559 = scalar_lea.vmem [#allocation13], %s4558
        // Predicated region
        $region61: #{tpu_custom_call.1} parent=39 // pred_check
          %p4560 = pneg %p163
        $region62: #{tpu_custom_call.1} parent=39 // pred_check_branch
          %4562 = sbr.rel (%p4560) target = $region64
        $region63: #{tpu_custom_call.1} parent=39 // pred_region
          %s4563 = smul.u32 2, %s30
          %s4565 = ssub.s32 32, 32
          %4566 = vsyncadd %s4551, %s4565
          %s4567 = smul.addr %s4563, 16
          %s4568 = scalar_lea.hbm %s5, %s4567
          %s4570 = sshll.u32 %s4554, 4
          %s4571 = int_to_ptr.vmem [resolvable:$true] %s4570
          %4573 = dma.vmem_to_hbm [thread:$0]  %s4571, 32, %s4568, %s4551
        $region64: #{tpu_custom_call.1} parent=39 // pred_fallthru
          _
        // Predicated region
        $region65: #{tpu_custom_call.1} parent=39 // pred_check
          %p4574 = pneg %p189
        $region66: #{tpu_custom_call.1} parent=39 // pred_check_branch
          %4576 = sbr.rel (%p4574) target = $region68
        $region67: #{tpu_custom_call.1} parent=39 // pred_region
          %s4577 = smul.u32 2, %s30
          %s4579 = ssub.s32 32, 32
          %4580 = vsyncadd %s4556, %s4579
          %s4581 = smul.addr %s4577, 16
          %s4582 = scalar_lea.hbm %s6, %s4581
          %s4584 = sshll.u32 %s4559, 4
          %s4585 = int_to_ptr.vmem [resolvable:$true] %s4584
          %4587 = dma.vmem_to_hbm [thread:$0]  %s4585, 32, %s4582, %s4556
        $region68: #{tpu_custom_call.1} parent=39 // pred_fallthru
          _
      $region40: #{tpu_custom_call.1} parent=5 // pred_fallthru
        _
      %p4588 = scmp.le.s32.totalorder 2, %s25
      // Predicated region
      $region69: #{tpu_custom_call.1} parent=5 // pred_check
        %p4589 = pneg %p4588
      $region70: #{tpu_custom_call.1} parent=5 // pred_check_branch
        %4591 = sbr.rel (%p4589) target = $region72
      $region71: #{tpu_custom_call.1} parent=5 // pred_region
        %s4592 = ssub.s32 %s25, 2
        // Predicated region
        $region73: #{tpu_custom_call.1} parent=71 // pred_check
          %p4593 = pneg %p169
        $region74: #{tpu_custom_call.1} parent=71 // pred_check_branch
          %4595 = sbr.rel (%p4593) target = $region76
        $region75: #{tpu_custom_call.1} parent=71 // pred_region
          %s4596 = sand.u32 %s154, 1
          %s4597 = scalar_lea.sflag [#allocation4], %s4596
          %s4598 = sand.u32 %s154, 1
          %s4599 = smul.addr %s4598, 2
          %s4600 = scalar_lea.vmem [#allocation12], %s4599
          %4601 = dma.done %s4597, 32
        $region76: #{tpu_custom_call.1} parent=71 // pred_fallthru
          _
        // Predicated region
        $region77: #{tpu_custom_call.1} parent=71 // pred_check
          %p4602 = pneg %p195
        $region78: #{tpu_custom_call.1} parent=71 // pred_check_branch
          %4604 = sbr.rel (%p4602) target = $region80
        $region79: #{tpu_custom_call.1} parent=71 // pred_region
          %s4605 = sand.u32 %s180, 1
          %s4606 = scalar_lea.sflag [#allocation14], %s4605
          %s4607 = sand.u32 %s180, 1
          %s4608 = smul.addr %s4607, 2
          %s4609 = scalar_lea.vmem [#allocation13], %s4608
          %4610 = dma.done %s4606, 32
        $region80: #{tpu_custom_call.1} parent=71 // pred_fallthru
          _
      $region72: #{tpu_custom_call.1} parent=5 // pred_fallthru
        _
    $region6: #{tpu_custom_call.1} parent=1 // loop_footer
      %s29 = sadd.s32 1, %s25
    $region7: #{tpu_custom_call.1} parent=1 // loop_footer_branch
      %24 = sbr.rel target = $region3
    $region8: #{tpu_custom_call.1} parent=1 // loop_exit
      _
    %4611 = vsyncpa [#allocation3], 1
    %s4612 = scalar_lea.sflag [#allocation3], 1
    %4613 = vsyncpa %s4612, 1
    %4614 = vsyncpa [#allocation7], 1
    %s4615 = scalar_lea.sflag [#allocation7], 1
    %4616 = vsyncpa %s4615, 1
    %4617 = vsyncpa [#allocation4], 1
    %s4618 = scalar_lea.sflag [#allocation4], 1
    %4619 = vsyncpa %s4618, 1
    %4620 = vsyncpa [#allocation14], 1
    %s4621 = scalar_lea.sflag [#allocation14], 1
    %4622 = vsyncpa %s4621, 1
    %4623 = vsyncpa [#allocation5], 1
    %s4624 = scalar_lea.sflag [#allocation5], 1
    %4625 = vsyncpa %s4624, 1
    %4626 = vsyncpa [#allocation11], 1

</llo_original>
